<compile_context>
chip_gen: v6e
topology: v6e:2x2x1
jax: 0.10.0
libtpu: 0.0.40
codegen_flags: <defaults>
</compile_context>

<pallas_src>
import functools

import jax
import jax.numpy as jnp
from jax import lax
from jax.experimental import pallas as pl
from jax.experimental.pallas import tpu as pltpu

EPS = 1e-5
_PREC = lax.Precision.HIGHEST          # fp32 contract precision on the MXU


def _dot(a, b):
    return jnp.dot(a, b, preferred_element_type=jnp.float32, precision=_PREC)


# ----------------------------- Pallas kernel -------------------------------- #

def _allreduce_over_w(v, w_count, c):
    """v: (rows, W*C). Returns same shape; lane w*C+c ends up holding sum over w."""
    total = w_count * c
    if w_count & (w_count - 1) == 0:          # power-of-two W: log2(W) roll+add steps
        shift = c
        while shift < total:
            v = v + pltpu.roll(v, shift=shift, axis=1)
            shift *= 2
        return v
    acc = v                                   # general fallback: W-1 rotations
    for w in range(1, w_count):
        acc = acc + pltpu.roll(v, shift=w * c, axis=1)
    return acc


def _bn_slab(z, gamma_t, beta_t, w_count, c, inv_cnt):
    """Training-mode BatchNorm on a lane-dense (N*H, W*C) slab.

    gamma_t / beta_t are (1, W*C), pre-tiled per lane in the wrapper.  Conv bias
    is omitted upstream because the batch-mean subtraction cancels it exactly.
    """
    s = jnp.sum(z, axis=0, keepdims=True)                     # (1, W*C)
    ss = jnp.sum(z * z, axis=0, keepdims=True)
    red = _allreduce_over_w(jnp.concatenate([s, ss], axis=0), w_count, c)
    mean = red[0:1, :] * inv_cnt
    var = jnp.maximum(red[1:2, :] * inv_cnt - mean * mean, 0.0)   # clamp >= 0
    scale = gamma_t * lax.rsqrt(var + EPS)
    shift = beta_t - mean * scale
    return z * scale + shift


def _resnext_kernel(dims, use_1x1conv, x_ref, w1_ref, w2_ref, w3_ref, bn_ref,
                    out_ref):
    N, H, W, Cin, Cb, Cout = dims
    NH = N * H
    WCb = W * Cb
    WCo = W * Cout
    inv_cnt = 1.0 / float(N * H * W)

    x = x_ref[...]                                   # (NH, W*Cin) lane-dense slab

    # ---- conv1 (1x1) [conv4 projection fused on the same LHS] -> bn1 -> relu
    z = _dot(x, w1_ref[...])                         # (NH, W*Cb [+ W*Cout])
    y = z[:, :WCb]
    y = jnp.maximum(
        _bn_slab(y, bn_ref[0:1, :WCb], bn_ref[1:2, :WCb], W, Cb, inv_cnt), 0.0)

    # ---- conv2: grouped 3x3, stride 1, pad 1, as 3 banded matmuls over
    #      row-shifted slabs (kx taps + groups folded into the banded weights).
    row_h = lax.broadcasted_iota(jnp.int32, (NH, 1), 0) % H
    y_up = jnp.where(row_h > 0, pltpu.roll(y, shift=1, axis=0), 0.0)          # h-1
    y_dn = jnp.where(row_h < H - 1, pltpu.roll(y, shift=NH - 1, axis=0), 0.0)  # h+1
    y2 = _dot(y_up, w2_ref[0]) + _dot(y, w2_ref[1]) + _dot(y_dn, w2_ref[2])
    y2 = jnp.maximum(
        _bn_slab(y2, bn_ref[2:3, :WCb], bn_ref[3:4, :WCb], W, Cb, inv_cnt), 0.0)

    # ---- conv3 (1x1) -> bn3 (no relu yet)
    y3 = _dot(y2, w3_ref[...])                       # (NH, W*Cout)
    y3 = _bn_slab(y3, bn_ref[4:5, :WCo], bn_ref[5:6, :WCo], W, Cout, inv_cnt)

    # ---- shortcut branch
    if use_1x1conv:
        sc = _bn_slab(z[:, WCb:WCb + WCo], bn_ref[6:7, :WCo], bn_ref[7:8, :WCo],
                      W, Cout, inv_cnt)
    else:
        sc = x                                       # wrapper asserts Cin == Cout

    out_ref[...] = jnp.maximum(y3 + sc, 0.0)         # lane-dense (NH, W*Cout) store


# ----------------------------- wrapper / glue -------------------------------- #

def _grouped_3x3_banded(w2, num_groups, W):
    """torch (Cb, Cb//G, 3, 3) grouped weight -> (3, W*Cb, W*Cb) banded weights,
    one per ky tap; kx taps, the zero padding in w, and the group block-diagonal
    structure are all folded into the band."""
    cb, cpg = w2.shape[0], w2.shape[1]
    opg = cb // num_groups
    dense = jnp.zeros((cb, cb, 3, 3), jnp.float32)            # [ci, co, ky, kx]
    for g in range(num_groups):
        blk = jnp.transpose(w2[g * opg:(g + 1) * opg].astype(jnp.float32),
                            (1, 0, 2, 3))                     # (ci_loc, co_loc, 3, 3)
        dense = dense.at[g * cpg:(g + 1) * cpg, g * opg:(g + 1) * opg].set(blk)
    bands = []
    for ky in range(3):
        band = sum(jnp.kron(jnp.eye(W, k=1 - kx, dtype=jnp.float32),
                            dense[:, :, ky, kx]) for kx in range(3))
        bands.append(band)
    return jnp.stack(bands, axis=0)                           # (3, W*Cb, W*Cb)


def resnext_block_pallas(x_nchw, p):
    use_1x1conv = p['use_1x1conv']
    x = jnp.transpose(x_nchw.astype(jnp.float32), (0, 2, 3, 1))   # NCHW -> NHWC
    N, H, W, Cin = x.shape
    Cb = p['bot_channels']
    Cout = p['conv3_w'].shape[0]
    if not use_1x1conv:
        assert Cin == Cout, "identity shortcut needs in_channels == num_channels"

    WCb, WCo = W * Cb, W * Cout
    WCmax = max(WCb, WCo)
    x_slab = x.reshape(N * H, W * Cin)               # lane-dense input slab

    # W-tiled block-diagonal 1x1 weights (kron with I_W); conv1+conv4 fused.
    eye_w = jnp.eye(W, dtype=jnp.float32)
    w1 = jnp.kron(eye_w, jnp.transpose(p['conv1_w'][:, :, 0, 0]).astype(jnp.float32))
    if use_1x1conv:
        w4 = jnp.kron(eye_w,
                      jnp.transpose(p['conv4_w'][:, :, 0, 0]).astype(jnp.float32))
        w1 = jnp.concatenate([w1, w4], axis=1)       # (W*Cin, W*(Cb+Cout))
    w2 = _grouped_3x3_banded(p['conv2_w'], p['num_groups'], W)
    w3 = jnp.kron(eye_w, jnp.transpose(p['conv3_w'][:, :, 0, 0]).astype(jnp.float32))

    # Pack all BN gamma/beta (pre-tiled per lane) into a single (8, WCmax) input.
    def bn_row(v):
        t = jnp.tile(v.astype(jnp.float32), W)
        return jnp.pad(t, (0, WCmax - t.shape[0]))
    rows = [bn_row(p['bn1_g']), bn_row(p['bn1_b']),
            bn_row(p['bn2_g']), bn_row(p['bn2_b']),
            bn_row(p['bn3_g']), bn_row(p['bn3_b'])]
    if use_1x1conv:
        rows += [bn_row(p['bn4_g']), bn_row(p['bn4_b'])]
    else:
        rows += [jnp.zeros((WCmax,), jnp.float32)] * 2
    bn_pack = jnp.stack(rows, axis=0)

    kernel = functools.partial(_resnext_kernel, (N, H, W, Cin, Cb, Cout),
                               use_1x1conv)
    vmem = pl.BlockSpec(memory_space=pltpu.MemorySpace.VMEM)
    out = pl.pallas_call(
        kernel,
        out_shape=jax.ShapeDtypeStruct((N * H, W * Cout), jnp.float32),
        in_specs=[vmem] * 5,
        out_specs=vmem,
        compiler_params=pltpu.CompilerParams(vmem_limit_bytes=32 * 1024 * 1024),
    )(x_slab, w1, w2, w3, bn_pack)
    return jnp.transpose(out.reshape(N, H, W, Cout), (0, 3, 1, 2))   # NHWC -> NCHW


# ----------------------- deterministic parameter init ------------------------ #

def init_resnext_params(key, in_channels, num_channels, groups, bot_mul,
                        use_1x1conv=False):
    bot_channels = int(round(num_channels * bot_mul))
    num_groups = bot_channels // groups          # torch Conv2d `groups` argument
    keys = jax.random.split(key, 8)

    def conv_init(k, cout, cin_per_group, kh, kw):
        fan_in = cin_per_group * kh * kw
        bound = 1.0 / (fan_in ** 0.5)
        kw_, kb_ = jax.random.split(k)
        w = jax.random.uniform(kw_, (cout, cin_per_group, kh, kw),
                               jnp.float32, -bound, bound)
        b = jax.random.uniform(kb_, (cout,), jnp.float32, -bound, bound)
        return w, b

    def bn_init(k, c):
        kg, kb = jax.random.split(k)
        gamma = jax.random.uniform(kg, (c,), jnp.float32, 0.5, 1.5)
        beta = jax.random.uniform(kb, (c,), jnp.float32, -0.5, 0.5)
        return gamma, beta

    p = {'num_groups': num_groups, 'bot_channels': bot_channels,
         'use_1x1conv': use_1x1conv}
    p['conv1_w'], p['conv1_b'] = conv_init(keys[0], bot_channels, in_channels, 1, 1)
    p['conv2_w'], p['conv2_b'] = conv_init(keys[1], bot_channels,
                                           bot_channels // num_groups, 3, 3)
    p['conv3_w'], p['conv3_b'] = conv_init(keys[2], num_channels, bot_channels, 1, 1)
    p['bn1_g'], p['bn1_b'] = bn_init(keys[3], bot_channels)
    p['bn2_g'], p['bn2_b'] = bn_init(keys[4], bot_channels)
    p['bn3_g'], p['bn3_b'] = bn_init(keys[5], num_channels)
    if use_1x1conv:
        p['conv4_w'], p['conv4_b'] = conv_init(keys[6], num_channels, in_channels, 1, 1)
        p['bn4_g'], p['bn4_b'] = bn_init(keys[7], num_channels)
    return p


# ----------------------------- pure-JAX reference ---------------------------- #

def _conv2d_ref(x, w, b, stride=1, padding=0, groups=1):
    dn = lax.conv_dimension_numbers(x.shape, w.shape, ('NCHW', 'OIHW', 'NCHW'))
    y = lax.conv_general_dilated(x, w, (stride, stride),
                                 [(padding, padding), (padding, padding)],
                                 dimension_numbers=dn,
                                 feature_group_count=groups,
                                 precision=lax.Precision.HIGHEST)
    return y + b[None, :, None, None]


def _bn_ref(x, gamma, beta):
    mean = x.mean(axis=(0, 2, 3), keepdims=True)
    var = ((x - mean) ** 2).mean(axis=(0, 2, 3), keepdims=True)
    return ((x - mean) / jnp.sqrt(var + EPS)) * gamma[None, :, None, None] \
        + beta[None, :, None, None]


def resnext_block_ref(x, p):
    y = jax.nn.relu(_bn_ref(_conv2d_ref(x, p['conv1_w'], p['conv1_b']),
                            p['bn1_g'], p['bn1_b']))
    y = jax.nn.relu(_bn_ref(_conv2d_ref(y, p['conv2_w'], p['conv2_b'],
                                        stride=1, padding=1,
                                        groups=p['num_groups']),
                            p['bn2_g'], p['bn2_b']))
    y = _bn_ref(_conv2d_ref(y, p['conv3_w'], p['conv3_b']),
                p['bn3_g'], p['bn3_b'])
    if p['use_1x1conv']:
        x = _bn_ref(_conv2d_ref(x, p['conv4_w'], p['conv4_b']),
                    p['bn4_g'], p['bn4_b'])
    return jax.nn.relu(y + x)


# ----------------------------------- main ------------------------------------ #

if __name__ == "__main__":
    key = jax.random.PRNGKey(0)
    kx1, kx2, kp1, kp2 = jax.random.split(key, 4)

    # Kernel requests fp32 contract precision on the MXU so it should match the
    # f32 reference to ~1e-4; tolerance is kept loose enough to also cover
    # backends that execute f32 matmuls with reduced-precision MXU passes.
    RTOL = ATOL = 3e-2

    # Config A: identity shortcut (use_1x1conv=False, strides=1), Cin == num_channels.
    # bot_channels = 16*0.5 = 8; conv2 torch-groups = 8//4 = 2.
    x1 = jax.random.normal(kx1, (2, 16, 16, 16), jnp.float32)       # NCHW
    p1 = init_resnext_params(kp1, in_channels=16, num_channels=16,
                             groups=4, bot_mul=0.5, use_1x1conv=False)
    out1 = jax.block_until_ready(resnext_block_pallas(x1, p1))
    ref1 = resnext_block_ref(x1, p1)
    err1 = float(jnp.max(jnp.abs(out1 - ref1)))
    assert bool(jnp.allclose(out1, ref1, rtol=RTOL, atol=ATOL)), err1

    # Config B: projection shortcut (use_1x1conv=True, strides=1).
    # bot_channels = 16; conv2 torch-groups = 16//2 = 8.
    x2 = jax.random.normal(kx2, (2, 8, 16, 16), jnp.float32)        # NCHW
    p2 = init_resnext_params(kp2, in_channels=8, num_channels=16,
                             groups=2, bot_mul=1.0, use_1x1conv=True)
    out2 = jax.block_until_ready(resnext_block_pallas(x2, p2))
    ref2 = resnext_block_ref(x2, p2)
    err2 = float(jnp.max(jnp.abs(out2 - ref2)))
    assert bool(jnp.allclose(out2, ref2, rtol=RTOL, atol=ATOL)), err2

    print("KERNEL_OK")
</pallas_src>

<mosaic_0001>
module attributes {stable_mosaic.version = 11 : i64} {
  func.func @_resnext_kernel(%arg0: memref<32x256xf32, #tpu.memory_space<vmem>>, %arg1: memref<256x128xf32, #tpu.memory_space<vmem>>, %arg2: memref<3x128x128xf32, #tpu.memory_space<vmem>>, %arg3: memref<128x256xf32, #tpu.memory_space<vmem>>, %arg4: memref<8x256xf32, #tpu.memory_space<vmem>>, %arg5: memref<32x256xf32, #tpu.memory_space<vmem>>) attributes {dimension_semantics = [], scalar_prefetch = 0 : i64, scratch_operands = 0 : i64, tpu.core_type = #tpu.core_type<tc>} {
    %c0 = arith.constant 0 : index
    %c0_0 = arith.constant 0 : index
    %0 = vector.load %arg0[%c0, %c0_0] : memref<32x256xf32, #tpu.memory_space<vmem>>, vector<32x256xf32>
    %c0_1 = arith.constant 0 : index
    %c0_2 = arith.constant 0 : index
    %1 = vector.load %arg1[%c0_1, %c0_2] : memref<256x128xf32, #tpu.memory_space<vmem>>, vector<256x128xf32>
    %cst = arith.constant dense<0.000000e+00> : vector<32x128xf32>
    %2 = tpu.matmul %0, %1, %cst {dimension_numbers = #tpu.dot_dimension_numbers<[1], [0], [0], [1], [0, 0, 1, 1], [], []>, precision = #tpu.contract_precision<fp32>} : vector<32x256xf32>, vector<256x128xf32>, vector<32x128xf32> -> vector<32x128xf32>
    %c0_3 = arith.constant 0 : index
    %c0_4 = arith.constant 0 : index
    %3 = vector.load %arg4[%c0_3, %c0_4] : memref<8x256xf32, #tpu.memory_space<vmem>>, vector<1x128xf32>
    %c1 = arith.constant 1 : index
    %c0_5 = arith.constant 0 : index
    %4 = vector.load %arg4[%c1, %c0_5] : memref<8x256xf32, #tpu.memory_space<vmem>>, vector<1x128xf32>
    %cst_6 = arith.constant dense<0.000000e+00> : vector<128xf32>
    %5 = vector.multi_reduction <add>, %2, %cst_6 [0] : vector<32x128xf32> to vector<128xf32>
    %6 = vector.shape_cast %5 : vector<128xf32> to vector<1x128xf32>
    %7 = arith.mulf %2, %2 : vector<32x128xf32>
    %cst_7 = arith.constant dense<0.000000e+00> : vector<128xf32>
    %8 = vector.multi_reduction <add>, %7, %cst_7 [0] : vector<32x128xf32> to vector<128xf32>
    %9 = vector.shape_cast %8 : vector<128xf32> to vector<1x128xf32>
    %10 = tpu.concatenate %6, %9 in 0 : vector<1x128xf32>, vector<1x128xf32> -> vector<2x128xf32>
    %c8_i32 = arith.constant 8 : i32
    %11 = tpu.dynamic_rotate %10 by %c8_i32 dim 1 : vector<2x128xf32>, i32 -> vector<2x128xf32>
    %12 = arith.addf %10, %11 : vector<2x128xf32>
    %c16_i32 = arith.constant 16 : i32
    %13 = tpu.dynamic_rotate %12 by %c16_i32 dim 1 : vector<2x128xf32>, i32 -> vector<2x128xf32>
    %14 = arith.addf %12, %13 : vector<2x128xf32>
    %c32_i32 = arith.constant 32 : i32
    %15 = tpu.dynamic_rotate %14 by %c32_i32 dim 1 : vector<2x128xf32>, i32 -> vector<2x128xf32>
    %16 = arith.addf %14, %15 : vector<2x128xf32>
    %c64_i32 = arith.constant 64 : i32
    %17 = tpu.dynamic_rotate %16 by %c64_i32 dim 1 : vector<2x128xf32>, i32 -> vector<2x128xf32>
    %18 = arith.addf %16, %17 : vector<2x128xf32>
    %19 = vector.extract_strided_slice %18 {offsets = [0, 0], sizes = [1, 128], strides = [1, 1]} : vector<2x128xf32> to vector<1x128xf32>
    %cst_8 = arith.constant 0.001953125 : f32
    %20 = vector.broadcast %cst_8 : f32 to vector<1x128xf32>
    %21 = arith.mulf %19, %20 : vector<1x128xf32>
    %22 = vector.extract_strided_slice %18 {offsets = [1, 0], sizes = [1, 128], strides = [1, 1]} : vector<2x128xf32> to vector<1x128xf32>
    %cst_9 = arith.constant 0.001953125 : f32
    %23 = vector.broadcast %cst_9 : f32 to vector<1x128xf32>
    %24 = arith.mulf %22, %23 : vector<1x128xf32>
    %25 = arith.mulf %21, %21 : vector<1x128xf32>
    %26 = arith.subf %24, %25 : vector<1x128xf32>
    %cst_10 = arith.constant 0.000000e+00 : f32
    %27 = vector.broadcast %cst_10 : f32 to vector<1x128xf32>
    %28 = arith.maximumf %26, %27 : vector<1x128xf32>
    %cst_11 = arith.constant 9.99999974E-6 : f32
    %29 = vector.broadcast %cst_11 : f32 to vector<1x128xf32>
    %30 = arith.addf %28, %29 : vector<1x128xf32>
    %31 = math.rsqrt %30 : vector<1x128xf32>
    %32 = arith.mulf %3, %31 : vector<1x128xf32>
    %33 = arith.mulf %21, %32 : vector<1x128xf32>
    %34 = arith.subf %4, %33 : vector<1x128xf32>
    %35 = vector.broadcast %32 : vector<1x128xf32> to vector<32x128xf32>
    %36 = arith.mulf %2, %35 : vector<32x128xf32>
    %37 = vector.broadcast %34 : vector<1x128xf32> to vector<32x128xf32>
    %38 = arith.addf %36, %37 : vector<32x128xf32>
    %cst_12 = arith.constant 0.000000e+00 : f32
    %39 = vector.broadcast %cst_12 : f32 to vector<32x128xf32>
    %40 = arith.maximumf %38, %39 : vector<32x128xf32>
    %41 = tpu.iota {dimensions = array<i32: 0>} : vector<32x1xi32>
    %c16_i32_13 = arith.constant 16 : i32
    %c0_i32 = arith.constant 0 : i32
    %42 = arith.cmpi eq, %c16_i32_13, %c0_i32 : i32
    %c1_i32 = arith.constant 1 : i32
    %43 = arith.select %42, %c1_i32, %c16_i32_13 : i32
    %44 = vector.broadcast %43 : i32 to vector<32x1xi32>
    %45 = arith.remsi %41, %44 : vector<32x1xi32>
    %c0_i32_14 = arith.constant 0 : i32
    %46 = vector.broadcast %c0_i32_14 : i32 to vector<32x1xi32>
    %47 = arith.cmpi ne, %45, %46 : vector<32x1xi32>
    %c0_i32_15 = arith.constant 0 : i32
    %48 = vector.broadcast %c0_i32_15 : i32 to vector<32x1xi32>
    %49 = arith.cmpi slt, %45, %48 : vector<32x1xi32>
    %c0_i32_16 = arith.constant 0 : i32
    %50 = arith.cmpi slt, %43, %c0_i32_16 : i32
    %51 = vector.broadcast %50 : i1 to vector<32x1xi1>
    %52 = vector.broadcast %51 : vector<32x1xi1> to vector<32x1xi1>
    %53 = arith.xori %49, %52 : vector<32x1xi1>
    %54 = arith.andi %53, %47 : vector<32x1xi1>
    %55 = vector.broadcast %43 : i32 to vector<32x1xi32>
    %56 = arith.addi %45, %55 : vector<32x1xi32>
    %57 = arith.select %54, %56, %45 : vector<32x1xi1>, vector<32x1xi32>
    %c0_i32_17 = arith.constant 0 : i32
    %58 = vector.broadcast %c0_i32_17 : i32 to vector<32x1xi32>
    %59 = arith.cmpi sgt, %57, %58 : vector<32x1xi32>
    %c1_i32_18 = arith.constant 1 : i32
    %60 = tpu.dynamic_rotate %40 by %c1_i32_18 dim 0 : vector<32x128xf32>, i32 -> vector<32x128xf32>
    %cst_19 = arith.constant 0.000000e+00 : f32
    %61 = vector.shape_cast %59 : vector<32x1xi1> to vector<32x1xi1>
    %62 = vector.broadcast %61 : vector<32x1xi1> to vector<32x128xi1>
    %63 = vector.broadcast %cst_19 : f32 to vector<32x128xf32>
    %64 = arith.select %62, %60, %63 : vector<32x128xi1>, vector<32x128xf32>
    %c15_i32 = arith.constant 15 : i32
    %65 = vector.broadcast %c15_i32 : i32 to vector<32x1xi32>
    %66 = arith.cmpi slt, %57, %65 : vector<32x1xi32>
    %c31_i32 = arith.constant 31 : i32
    %67 = tpu.dynamic_rotate %40 by %c31_i32 dim 0 : vector<32x128xf32>, i32 -> vector<32x128xf32>
    %cst_20 = arith.constant 0.000000e+00 : f32
    %68 = vector.shape_cast %66 : vector<32x1xi1> to vector<32x1xi1>
    %69 = vector.broadcast %68 : vector<32x1xi1> to vector<32x128xi1>
    %70 = vector.broadcast %cst_20 : f32 to vector<32x128xf32>
    %71 = arith.select %69, %67, %70 : vector<32x128xi1>, vector<32x128xf32>
    %c0_21 = arith.constant 0 : index
    %c0_22 = arith.constant 0 : index
    %c0_23 = arith.constant 0 : index
    %72 = vector.load %arg2[%c0_21, %c0_22, %c0_23] : memref<3x128x128xf32, #tpu.memory_space<vmem>>, vector<1x128x128xf32>
    %73 = vector.shape_cast %72 : vector<1x128x128xf32> to vector<128x128xf32>
    %cst_24 = arith.constant dense<0.000000e+00> : vector<32x128xf32>
    %74 = tpu.matmul %64, %73, %cst_24 {dimension_numbers = #tpu.dot_dimension_numbers<[1], [0], [0], [1], [0, 0, 1, 1], [], []>, precision = #tpu.contract_precision<fp32>} : vector<32x128xf32>, vector<128x128xf32>, vector<32x128xf32> -> vector<32x128xf32>
    %c1_25 = arith.constant 1 : index
    %c0_26 = arith.constant 0 : index
    %c0_27 = arith.constant 0 : index
    %75 = vector.load %arg2[%c1_25, %c0_26, %c0_27] : memref<3x128x128xf32, #tpu.memory_space<vmem>>, vector<1x128x128xf32>
    %76 = vector.shape_cast %75 : vector<1x128x128xf32> to vector<128x128xf32>
    %cst_28 = arith.constant dense<0.000000e+00> : vector<32x128xf32>
    %77 = tpu.matmul %40, %76, %cst_28 {dimension_numbers = #tpu.dot_dimension_numbers<[1], [0], [0], [1], [0, 0, 1, 1], [], []>, precision = #tpu.contract_precision<fp32>} : vector<32x128xf32>, vector<128x128xf32>, vector<32x128xf32> -> vector<32x128xf32>
    %78 = arith.addf %74, %77 : vector<32x128xf32>
    %c2 = arith.constant 2 : index
    %c0_29 = arith.constant 0 : index
    %c0_30 = arith.constant 0 : index
    %79 = vector.load %arg2[%c2, %c0_29, %c0_30] : memref<3x128x128xf32, #tpu.memory_space<vmem>>, vector<1x128x128xf32>
    %80 = vector.shape_cast %79 : vector<1x128x128xf32> to vector<128x128xf32>
    %cst_31 = arith.constant dense<0.000000e+00> : vector<32x128xf32>
    %81 = tpu.matmul %71, %80, %cst_31 {dimension_numbers = #tpu.dot_dimension_numbers<[1], [0], [0], [1], [0, 0, 1, 1], [], []>, precision = #tpu.contract_precision<fp32>} : vector<32x128xf32>, vector<128x128xf32>, vector<32x128xf32> -> vector<32x128xf32>
    %82 = arith.addf %78, %81 : vector<32x128xf32>
    %c2_32 = arith.constant 2 : index
    %c0_33 = arith.constant 0 : index
    %83 = vector.load %arg4[%c2_32, %c0_33] : memref<8x256xf32, #tpu.memory_space<vmem>>, vector<1x128xf32>
    %c3 = arith.constant 3 : index
    %c0_34 = arith.constant 0 : index
    %84 = vector.load %arg4[%c3, %c0_34] : memref<8x256xf32, #tpu.memory_space<vmem>>, vector<1x128xf32>
    %cst_35 = arith.constant dense<0.000000e+00> : vector<128xf32>
    %85 = vector.multi_reduction <add>, %82, %cst_35 [0] : vector<32x128xf32> to vector<128xf32>
    %86 = vector.shape_cast %85 : vector<128xf32> to vector<1x128xf32>
    %87 = arith.mulf %82, %82 : vector<32x128xf32>
    %cst_36 = arith.constant dense<0.000000e+00> : vector<128xf32>
    %88 = vector.multi_reduction <add>, %87, %cst_36 [0] : vector<32x128xf32> to vector<128xf32>
    %89 = vector.shape_cast %88 : vector<128xf32> to vector<1x128xf32>
    %90 = tpu.concatenate %86, %89 in 0 : vector<1x128xf32>, vector<1x128xf32> -> vector<2x128xf32>
    %c8_i32_37 = arith.constant 8 : i32
    %91 = tpu.dynamic_rotate %90 by %c8_i32_37 dim 1 : vector<2x128xf32>, i32 -> vector<2x128xf32>
    %92 = arith.addf %90, %91 : vector<2x128xf32>
    %c16_i32_38 = arith.constant 16 : i32
    %93 = tpu.dynamic_rotate %92 by %c16_i32_38 dim 1 : vector<2x128xf32>, i32 -> vector<2x128xf32>
    %94 = arith.addf %92, %93 : vector<2x128xf32>
    %c32_i32_39 = arith.constant 32 : i32
    %95 = tpu.dynamic_rotate %94 by %c32_i32_39 dim 1 : vector<2x128xf32>, i32 -> vector<2x128xf32>
    %96 = arith.addf %94, %95 : vector<2x128xf32>
    %c64_i32_40 = arith.constant 64 : i32
    %97 = tpu.dynamic_rotate %96 by %c64_i32_40 dim 1 : vector<2x128xf32>, i32 -> vector<2x128xf32>
    %98 = arith.addf %96, %97 : vector<2x128xf32>
    %99 = vector.extract_strided_slice %98 {offsets = [0, 0], sizes = [1, 128], strides = [1, 1]} : vector<2x128xf32> to vector<1x128xf32>
    %cst_41 = arith.constant 0.001953125 : f32
    %100 = vector.broadcast %cst_41 : f32 to vector<1x128xf32>
    %101 = arith.mulf %99, %100 : vector<1x128xf32>
    %102 = vector.extract_strided_slice %98 {offsets = [1, 0], sizes = [1, 128], strides = [1, 1]} : vector<2x128xf32> to vector<1x128xf32>
    %cst_42 = arith.constant 0.001953125 : f32
    %103 = vector.broadcast %cst_42 : f32 to vector<1x128xf32>
    %104 = arith.mulf %102, %103 : vector<1x128xf32>
    %105 = arith.mulf %101, %101 : vector<1x128xf32>
    %106 = arith.subf %104, %105 : vector<1x128xf32>
    %cst_43 = arith.constant 0.000000e+00 : f32
    %107 = vector.broadcast %cst_43 : f32 to vector<1x128xf32>
    %108 = arith.maximumf %106, %107 : vector<1x128xf32>
    %cst_44 = arith.constant 9.99999974E-6 : f32
    %109 = vector.broadcast %cst_44 : f32 to vector<1x128xf32>
    %110 = arith.addf %108, %109 : vector<1x128xf32>
    %111 = math.rsqrt %110 : vector<1x128xf32>
    %112 = arith.mulf %83, %111 : vector<1x128xf32>
    %113 = arith.mulf %101, %112 : vector<1x128xf32>
    %114 = arith.subf %84, %113 : vector<1x128xf32>
    %115 = vector.broadcast %112 : vector<1x128xf32> to vector<32x128xf32>
    %116 = arith.mulf %82, %115 : vector<32x128xf32>
    %117 = vector.broadcast %114 : vector<1x128xf32> to vector<32x128xf32>
    %118 = arith.addf %116, %117 : vector<32x128xf32>
    %cst_45 = arith.constant 0.000000e+00 : f32
    %119 = vector.broadcast %cst_45 : f32 to vector<32x128xf32>
    %120 = arith.maximumf %118, %119 : vector<32x128xf32>
    %c0_46 = arith.constant 0 : index
    %c0_47 = arith.constant 0 : index
    %121 = vector.load %arg3[%c0_46, %c0_47] : memref<128x256xf32, #tpu.memory_space<vmem>>, vector<128x256xf32>
    %cst_48 = arith.constant dense<0.000000e+00> : vector<32x256xf32>
    %122 = tpu.matmul %120, %121, %cst_48 {dimension_numbers = #tpu.dot_dimension_numbers<[1], [0], [0], [1], [0, 0, 1, 1], [], []>, precision = #tpu.contract_precision<fp32>} : vector<32x128xf32>, vector<128x256xf32>, vector<32x256xf32> -> vector<32x256xf32>
    %c4 = arith.constant 4 : index
    %c0_49 = arith.constant 0 : index
    %123 = vector.load %arg4[%c4, %c0_49] : memref<8x256xf32, #tpu.memory_space<vmem>>, vector<1x256xf32>
    %c5 = arith.constant 5 : index
    %c0_50 = arith.constant 0 : index
    %124 = vector.load %arg4[%c5, %c0_50] : memref<8x256xf32, #tpu.memory_space<vmem>>, vector<1x256xf32>
    %cst_51 = arith.constant dense<0.000000e+00> : vector<256xf32>
    %125 = vector.multi_reduction <add>, %122, %cst_51 [0] : vector<32x256xf32> to vector<256xf32>
    %126 = vector.shape_cast %125 : vector<256xf32> to vector<1x256xf32>
    %127 = arith.mulf %122, %122 : vector<32x256xf32>
    %cst_52 = arith.constant dense<0.000000e+00> : vector<256xf32>
    %128 = vector.multi_reduction <add>, %127, %cst_52 [0] : vector<32x256xf32> to vector<256xf32>
    %129 = vector.shape_cast %128 : vector<256xf32> to vector<1x256xf32>
    %130 = tpu.concatenate %126, %129 in 0 : vector<1x256xf32>, vector<1x256xf32> -> vector<2x256xf32>
    %c16_i32_53 = arith.constant 16 : i32
    %131 = tpu.dynamic_rotate %130 by %c16_i32_53 dim 1 : vector<2x256xf32>, i32 -> vector<2x256xf32>
    %132 = arith.addf %130, %131 : vector<2x256xf32>
    %c32_i32_54 = arith.constant 32 : i32
    %133 = tpu.dynamic_rotate %132 by %c32_i32_54 dim 1 : vector<2x256xf32>, i32 -> vector<2x256xf32>
    %134 = arith.addf %132, %133 : vector<2x256xf32>
    %c64_i32_55 = arith.constant 64 : i32
    %135 = tpu.dynamic_rotate %134 by %c64_i32_55 dim 1 : vector<2x256xf32>, i32 -> vector<2x256xf32>
    %136 = arith.addf %134, %135 : vector<2x256xf32>
    %c128_i32 = arith.constant 128 : i32
    %137 = tpu.dynamic_rotate %136 by %c128_i32 dim 1 : vector<2x256xf32>, i32 -> vector<2x256xf32>
    %138 = arith.addf %136, %137 : vector<2x256xf32>
    %139 = vector.extract_strided_slice %138 {offsets = [0, 0], sizes = [1, 256], strides = [1, 1]} : vector<2x256xf32> to vector<1x256xf32>
    %cst_56 = arith.constant 0.001953125 : f32
    %140 = vector.broadcast %cst_56 : f32 to vector<1x256xf32>
    %141 = arith.mulf %139, %140 : vector<1x256xf32>
    %142 = vector.extract_strided_slice %138 {offsets = [1, 0], sizes = [1, 256], strides = [1, 1]} : vector<2x256xf32> to vector<1x256xf32>
    %cst_57 = arith.constant 0.001953125 : f32
    %143 = vector.broadcast %cst_57 : f32 to vector<1x256xf32>
    %144 = arith.mulf %142, %143 : vector<1x256xf32>
    %145 = arith.mulf %141, %141 : vector<1x256xf32>
    %146 = arith.subf %144, %145 : vector<1x256xf32>
    %cst_58 = arith.constant 0.000000e+00 : f32
    %147 = vector.broadcast %cst_58 : f32 to vector<1x256xf32>
    %148 = arith.maximumf %146, %147 : vector<1x256xf32>
    %cst_59 = arith.constant 9.99999974E-6 : f32
    %149 = vector.broadcast %cst_59 : f32 to vector<1x256xf32>
    %150 = arith.addf %148, %149 : vector<1x256xf32>
    %151 = math.rsqrt %150 : vector<1x256xf32>
    %152 = arith.mulf %123, %151 : vector<1x256xf32>
    %153 = arith.mulf %141, %152 : vector<1x256xf32>
    %154 = arith.subf %124, %153 : vector<1x256xf32>
    %155 = vector.broadcast %152 : vector<1x256xf32> to vector<32x256xf32>
    %156 = arith.mulf %122, %155 : vector<32x256xf32>
    %157 = vector.broadcast %154 : vector<1x256xf32> to vector<32x256xf32>
    %158 = arith.addf %156, %157 : vector<32x256xf32>
    %159 = arith.addf %158, %0 : vector<32x256xf32>
    %cst_60 = arith.constant 0.000000e+00 : f32
    %160 = vector.broadcast %cst_60 : f32 to vector<32x256xf32>
    %161 = arith.maximumf %159, %160 : vector<32x256xf32>
    %c0_61 = arith.constant 0 : index
    %c0_62 = arith.constant 0 : index
    %162 = vector.load %arg5[%c0_61, %c0_62] : memref<32x256xf32, #tpu.memory_space<vmem>>, vector<32x256xf32>
    tpu.vector_store %arg5[%c0_61, %c0_62], %161 {strides = array<i32>} : memref<32x256xf32, #tpu.memory_space<vmem>>, vector<32x256xf32>,
    return
  }
}

</mosaic_0001>

<llo_original>
// kernel: tpu_custom_call.1
$region0: #{tpu_custom_call.1}
  #allocation0 [shape = 'u32[]', space=smem, size = 0x4, offset = 0x4, fixed_abs, tag = 'smem constant byte address 0x4 - core index']
  #allocation1 [shape = 'u32[144,128]{1,0:T(1,128)}', space=vmem, size = 0x12000, scoped, tag = 'internal scratch']
  %s0 = inlined_call_operand.hbm [shape: f32[32,256], index: 0, kind: input, shape index: {}]
  %s1 = inlined_call_operand.hbm [shape: f32[256,128], index: 1, kind: input, shape index: {}]
  %s2 = inlined_call_operand.hbm [shape: f32[3,128,128], index: 2, kind: input, shape index: {}]
  %s3 = inlined_call_operand.hbm [shape: f32[128,256], index: 3, kind: input, shape index: {}]
  %s4 = inlined_call_operand.hbm [shape: f32[8,256], index: 4, kind: input, shape index: {}]
  %s5 = inlined_call_operand.hbm [shape: f32[32,256], index: 5, kind: output, shape index: {}]
  %s6 = sld [smem:[#allocation0]]
  $region50: #{tpu_custom_call.1} parent=0
    _
  %s8 = ssub.s32 1, %s6
  %s9 = scalar_select 0, %s8, %s6
  $region1: #{tpu_custom_call.1} parent=0
    #allocation2 [shape = 'u8[32768]{0}', space=vmem, size = 0x8000, scoped, tag = 'input window, operand 0, single buffered']
    #allocation3 [shape = 's32[1]{0}', space=sflag, size = 0x4, scoped, tag = 'scoped memory for tpu_custom_call.1']
    #allocation4 [shape = 's32[1]{0}', space=sflag, size = 0x4, scoped, tag = 'scoped memory for tpu_custom_call.1']
    #allocation5 [shape = 'u8[131072]{0}', space=vmem, size = 0x20000, scoped, tag = 'input window, operand 1, single buffered']
    #allocation6 [shape = 's32[1]{0}', space=sflag, size = 0x4, scoped, tag = 'scoped memory for tpu_custom_call.1']
    #allocation7 [shape = 'u8[196608]{0}', space=vmem, size = 0x30000, scoped, tag = 'input window, operand 2, single buffered']
    #allocation8 [shape = 'u8[131072]{0}', space=vmem, size = 0x20000, scoped, tag = 'input window, operand 3, single buffered']
    #allocation9 [shape = 's32[1]{0}', space=sflag, size = 0x4, scoped, tag = 'scoped memory for tpu_custom_call.1']
    #allocation10 [shape = 'u8[8192]{0}', space=vmem, size = 0x2000, scoped, tag = 'input window, operand 4, single buffered']
    #allocation11 [shape = 'u8[32768]{0}', space=vmem, size = 0x8000, scoped, tag = 'output window, operand 0, single buffered']
    %10 = vsyncpa [#allocation3], 0
    %11 = vsyncpa [#allocation6], 0
    %12 = vsyncpa [#allocation9], 0
    %13 = vsyncpa [#allocation4], 0
    // Predicated region
    $region2: #{tpu_custom_call.1} parent=1 // pred_check
      _
    $region3: #{tpu_custom_call.1} parent=1 // pred_check_branch
      %15 = sbr.rel (0) target = $region5
    $region4: #{tpu_custom_call.1} parent=1 // pred_region
      %s17 = ssub.s32 1024, 1024
      %18 = vsyncadd [#allocation3], %s17
      %s19 = sshll.u32 [#allocation2], 4
      %s20 = int_to_ptr.vmem [resolvable:$true] %s19
      %25 = dma.hbm_to_vmem [thread:$0]  %s0, 1024, %s20, [#allocation3], 256, 256, 16
    $region5: #{tpu_custom_call.1} parent=1 // pred_fallthru
      _
    // Predicated region
    $region6: #{tpu_custom_call.1} parent=1 // pred_check
      _
    $region7: #{tpu_custom_call.1} parent=1 // pred_check_branch
      %27 = sbr.rel (0) target = $region9
    $region8: #{tpu_custom_call.1} parent=1 // pred_region
      %s29 = ssub.s32 4096, 4096
      %30 = vsyncadd [#allocation6], %s29
      %s31 = sshll.u32 [#allocation5], 4
      %s32 = int_to_ptr.vmem [resolvable:$true] %s31
      %37 = dma.hbm_to_vmem [thread:$0]  %s1, 4096, %s32, [#allocation6], 128, 128, 8
    $region9: #{tpu_custom_call.1} parent=1 // pred_fallthru
      _
    // Predicated region
    $region10: #{tpu_custom_call.1} parent=1 // pred_check
      _
    $region11: #{tpu_custom_call.1} parent=1 // pred_check_branch
      %39 = sbr.rel (0) target = $region13
    $region12: #{tpu_custom_call.1} parent=1 // pred_region
      %s41 = ssub.s32 6144, 6144
      %42 = vsyncadd [#allocation6], %s41
      %s43 = sshll.u32 [#allocation7], 4
      %s44 = int_to_ptr.vmem [resolvable:$true] %s43
      %49 = dma.hbm_to_vmem [thread:$0]  %s2, 6144, %s44, [#allocation6], 128, 128, 8
    $region13: #{tpu_custom_call.1} parent=1 // pred_fallthru
      _
    // Predicated region
    $region14: #{tpu_custom_call.1} parent=1 // pred_check
      _
    $region15: #{tpu_custom_call.1} parent=1 // pred_check_branch
      %51 = sbr.rel (0) target = $region17
    $region16: #{tpu_custom_call.1} parent=1 // pred_region
      %s53 = ssub.s32 4096, 4096
      %54 = vsyncadd [#allocation9], %s53
      %s55 = sshll.u32 [#allocation8], 4
      %s56 = int_to_ptr.vmem [resolvable:$true] %s55
      %61 = dma.hbm_to_vmem [thread:$0]  %s3, 4096, %s56, [#allocation9], 256, 256, 16
    $region17: #{tpu_custom_call.1} parent=1 // pred_fallthru
      _
    // Predicated region
    $region18: #{tpu_custom_call.1} parent=1 // pred_check
      _
    $region19: #{tpu_custom_call.1} parent=1 // pred_check_branch
      %63 = sbr.rel (0) target = $region21
    $region20: #{tpu_custom_call.1} parent=1 // pred_region
      %s65 = ssub.s32 256, 256
      %66 = vsyncadd [#allocation9], %s65
      %s68 = sshll.u32 [#allocation10], 4
      %s69 = int_to_ptr.vmem [resolvable:$true] %s68
      %71 = dma.hbm_to_vmem [thread:$0]  %s4, 256, %s69, [#allocation9]
    $region21: #{tpu_custom_call.1} parent=1 // pred_fallthru
      _
    // Predicated region
    $region22: #{tpu_custom_call.1} parent=1 // pred_check
      _
    $region23: #{tpu_custom_call.1} parent=1 // pred_check_branch
      %73 = sbr.rel (0) target = $region25
    $region24: #{tpu_custom_call.1} parent=1 // pred_region
      %74 = dma.done [#allocation3], 1024
    $region25: #{tpu_custom_call.1} parent=1 // pred_fallthru
      _
    // Predicated region
    $region26: #{tpu_custom_call.1} parent=1 // pred_check
      _
    $region27: #{tpu_custom_call.1} parent=1 // pred_check_branch
      %76 = sbr.rel (0) target = $region29
    $region28: #{tpu_custom_call.1} parent=1 // pred_region
      %77 = dma.done [#allocation6], 4096
    $region29: #{tpu_custom_call.1} parent=1 // pred_fallthru
      _
    // Predicated region
    $region30: #{tpu_custom_call.1} parent=1 // pred_check
      _
    $region31: #{tpu_custom_call.1} parent=1 // pred_check_branch
      %79 = sbr.rel (0) target = $region33
    $region32: #{tpu_custom_call.1} parent=1 // pred_region
      %80 = dma.done [#allocation6], 6144
    $region33: #{tpu_custom_call.1} parent=1 // pred_fallthru
      _
    // Predicated region
    $region34: #{tpu_custom_call.1} parent=1 // pred_check
      _
    $region35: #{tpu_custom_call.1} parent=1 // pred_check_branch
      %82 = sbr.rel (0) target = $region37
    $region36: #{tpu_custom_call.1} parent=1 // pred_region
      %83 = dma.done [#allocation9], 4096
    $region37: #{tpu_custom_call.1} parent=1 // pred_fallthru
      _
    // Predicated region
    $region38: #{tpu_custom_call.1} parent=1 // pred_check
      _
    $region39: #{tpu_custom_call.1} parent=1 // pred_check_branch
      %85 = sbr.rel (0) target = $region41
    $region40: #{tpu_custom_call.1} parent=1 // pred_region
      %86 = dma.done [#allocation9], 256
    $region41: #{tpu_custom_call.1} parent=1 // pred_fallthru
      _
    %v87 = vld [vmem:[#allocation2] sm:$0xff]
    %v88 = vld [vmem:[#allocation2 + $0x8] sm:$0xff]
    %v89 = vld [vmem:[#allocation2 + $0x10] sm:$0xff]
    %v90 = vld [vmem:[#allocation2 + $0x18] sm:$0xff]
    %v91 = vld [vmem:[#allocation2 + $0x20] sm:$0xff]
    %v92 = vld [vmem:[#allocation2 + $0x28] sm:$0xff]
    %v93 = vld [vmem:[#allocation2 + $0x30] sm:$0xff]
    %v94 = vld [vmem:[#allocation2 + $0x38] sm:$0xff]
    %v95 = vld [vmem:[#allocation5] sm:$0xff]
    %v96 = vld [vmem:[#allocation5 + $0x8] sm:$0xff]
    %v97 = vld [vmem:[#allocation5 + $0x10] sm:$0xff]
    %v98 = vld [vmem:[#allocation5 + $0x18] sm:$0xff]
    %v99 = vld [vmem:[#allocation5 + $0x20] sm:$0xff]
    %v100 = vld [vmem:[#allocation5 + $0x28] sm:$0xff]
    %v101 = vld [vmem:[#allocation5 + $0x30] sm:$0xff]
    %v102 = vld [vmem:[#allocation5 + $0x38] sm:$0xff]
    %v103 = vld [vmem:[#allocation5 + $0x40] sm:$0xff]
    %v104 = vld [vmem:[#allocation5 + $0x48] sm:$0xff]
    %v105 = vld [vmem:[#allocation5 + $0x50] sm:$0xff]
    %v106 = vld [vmem:[#allocation5 + $0x58] sm:$0xff]
    %v107 = vld [vmem:[#allocation5 + $0x60] sm:$0xff]
    %v108 = vld [vmem:[#allocation5 + $0x68] sm:$0xff]
    %v109 = vld [vmem:[#allocation5 + $0x70] sm:$0xff]
    %v110 = vld [vmem:[#allocation5 + $0x78] sm:$0xff]
    %v111 = vld [vmem:[#allocation5 + $0x80] sm:$0xff]
    %v112 = vld [vmem:[#allocation5 + $0x88] sm:$0xff]
    %v113 = vld [vmem:[#allocation5 + $0x90] sm:$0xff]
    %v114 = vld [vmem:[#allocation5 + $0x98] sm:$0xff]
    %v115 = vld [vmem:[#allocation5 + $0xa0] sm:$0xff]
    %v116 = vld [vmem:[#allocation5 + $0xa8] sm:$0xff]
    %v117 = vld [vmem:[#allocation5 + $0xb0] sm:$0xff]
    %v118 = vld [vmem:[#allocation5 + $0xb8] sm:$0xff]
    %v119 = vld [vmem:[#allocation5 + $0xc0] sm:$0xff]
    %v120 = vld [vmem:[#allocation5 + $0xc8] sm:$0xff]
    %v121 = vld [vmem:[#allocation5 + $0xd0] sm:$0xff]
    %v122 = vld [vmem:[#allocation5 + $0xd8] sm:$0xff]
    %v123 = vld [vmem:[#allocation5 + $0xe0] sm:$0xff]
    %v124 = vld [vmem:[#allocation5 + $0xe8] sm:$0xff]
    %v125 = vld [vmem:[#allocation5 + $0xf0] sm:$0xff]
    %v126 = vld [vmem:[#allocation5 + $0xf8] sm:$0xff]
    %127 = vmatprep.subr.mxu0 0.0
    %v128 = vand.u32 %v110, 4294901760
    %129 = vmatpush1.msra.mxu0 %v128
    %130 = vmatprep.subr.mxu0 0.0
    %v131 = vand.u32 %v109, 4294901760
    %132 = vmatpush1.msra.mxu0 %v131
    %133 = vmatprep.subr.mxu0 0.0
    %v134 = vand.u32 %v108, 4294901760
    %135 = vmatpush1.msra.mxu0 %v134
    %136 = vmatprep.subr.mxu0 0.0
    %v137 = vand.u32 %v107, 4294901760
    %138 = vmatpush1.msra.mxu0 %v137
    %139 = vmatprep.subr.mxu0 0.0
    %v140 = vand.u32 %v106, 4294901760
    %141 = vmatpush1.msra.mxu0 %v140
    %142 = vmatprep.subr.mxu0 0.0
    %v143 = vand.u32 %v105, 4294901760
    %144 = vmatpush1.msra.mxu0 %v143
    %145 = vmatprep.subr.mxu0 0.0
    %v146 = vand.u32 %v104, 4294901760
    %147 = vmatpush1.msra.mxu0 %v146
    %148 = vmatprep.subr.mxu0 0.0
    %v149 = vand.u32 %v103, 4294901760
    %150 = vmatpush1.msra.mxu0 %v149
    %151 = vmatprep.subr.mxu0 0.0
    %v152 = vand.u32 %v102, 4294901760
    %153 = vmatpush1.msra.mxu0 %v152
    %154 = vmatprep.subr.mxu0 0.0
    %v155 = vand.u32 %v101, 4294901760
    %156 = vmatpush1.msra.mxu0 %v155
    %157 = vmatprep.subr.mxu0 0.0
    %v158 = vand.u32 %v100, 4294901760
    %159 = vmatpush1.msra.mxu0 %v158
    %160 = vmatprep.subr.mxu0 0.0
    %v161 = vand.u32 %v99, 4294901760
    %162 = vmatpush1.msra.mxu0 %v161
    %163 = vmatprep.subr.mxu0 0.0
    %v164 = vand.u32 %v98, 4294901760
    %165 = vmatpush1.msra.mxu0 %v164
    %166 = vmatprep.subr.mxu0 0.0
    %v167 = vand.u32 %v97, 4294901760
    %168 = vmatpush1.msra.mxu0 %v167
    %169 = vmatprep.subr.mxu0 0.0
    %v170 = vand.u32 %v96, 4294901760
    %171 = vmatpush1.msra.mxu0 %v170
    %172 = vmatprep.subr.mxu0 0.0
    %v173 = vand.u32 %v95, 4294901760
    %174 = vmatpush1.msra.mxu0 %v173
    %175 = vmatprep.subr.mxu0 0.0
    %v176 = vand.u32 %v126, 4294901760
    %177 = vmatpush2.msra.mxu0 %v176
    %178 = vmatprep.subr.mxu0 0.0
    %v179 = vand.u32 %v125, 4294901760
    %180 = vmatpush2.msra.mxu0 %v179
    %181 = vmatprep.subr.mxu0 0.0
    %v182 = vand.u32 %v124, 4294901760
    %183 = vmatpush2.msra.mxu0 %v182
    %184 = vmatprep.subr.mxu0 0.0
    %v185 = vand.u32 %v123, 4294901760
    %186 = vmatpush2.msra.mxu0 %v185
    %187 = vmatprep.subr.mxu0 0.0
    %v188 = vand.u32 %v122, 4294901760
    %189 = vmatpush2.msra.mxu0 %v188
    %190 = vmatprep.subr.mxu0 0.0
    %v191 = vand.u32 %v121, 4294901760
    %192 = vmatpush2.msra.mxu0 %v191
    %193 = vmatprep.subr.mxu0 0.0
    %v194 = vand.u32 %v120, 4294901760
    %195 = vmatpush2.msra.mxu0 %v194
    %196 = vmatprep.subr.mxu0 0.0
    %v197 = vand.u32 %v119, 4294901760
    %198 = vmatpush2.msra.mxu0 %v197
    %199 = vmatprep.subr.mxu0 0.0
    %v200 = vand.u32 %v118, 4294901760
    %201 = vmatpush2.msra.mxu0 %v200
    %202 = vmatprep.subr.mxu0 0.0
    %v203 = vand.u32 %v117, 4294901760
    %204 = vmatpush2.msra.mxu0 %v203
    %205 = vmatprep.subr.mxu0 0.0
    %v206 = vand.u32 %v116, 4294901760
    %207 = vmatpush2.msra.mxu0 %v206
    %208 = vmatprep.subr.mxu0 0.0
    %v209 = vand.u32 %v115, 4294901760
    %210 = vmatpush2.msra.mxu0 %v209
    %211 = vmatprep.subr.mxu0 0.0
    %v212 = vand.u32 %v114, 4294901760
    %213 = vmatpush2.msra.mxu0 %v212
    %214 = vmatprep.subr.mxu0 0.0
    %v215 = vand.u32 %v113, 4294901760
    %216 = vmatpush2.msra.mxu0 %v215
    %217 = vmatprep.subr.mxu0 0.0
    %v218 = vand.u32 %v112, 4294901760
    %219 = vmatpush2.msra.mxu0 %v218
    %220 = vmatprep.subr.mxu0 0.0
    %v221 = vand.u32 %v111, 4294901760
    %222 = vmatpush2.msra.mxu0 %v221
    %v223 = vand.u32 %v88, 4294901760
    %v224 = vsub.f32 %v88, %v223
    %v225 = vand.u32 %v224, 4294901760
    %v226 = vsub.f32 %v224, %v225
    %v227 = vand.u32 %v226, 4294901760
    %228 = vmatprep.mubr.f32.mxu0 %v227
    %v229 = vand.u32 %v87, 4294901760
    %v230 = vsub.f32 %v87, %v229
    %v231 = vand.u32 %v230, 4294901760
    %v232 = vsub.f32 %v230, %v231
    %v233 = vand.u32 %v232, 4294901760
    %234 = vmatmul.mubr.f32.gmra.mxu0 %v233
    %v235 = vpop.f32.mrf.mxu0
    %v236 = vadd.f32 0.0, %v235
    %v237 = vpop.f32.mrf.mxu0
    %v238 = vand.u32 %v90, 4294901760
    %v239 = vsub.f32 %v90, %v238
    %v240 = vand.u32 %v239, 4294901760
    %v241 = vsub.f32 %v239, %v240
    %v242 = vand.u32 %v241, 4294901760
    %243 = vmatprep.mubr.f32.mxu0 %v242
    %v244 = vand.u32 %v89, 4294901760
    %v245 = vsub.f32 %v89, %v244
    %v246 = vand.u32 %v245, 4294901760
    %v247 = vsub.f32 %v245, %v246
    %v248 = vand.u32 %v247, 4294901760
    %249 = vmatmul.mubr.f32.gmra.mxu0 %v248
    %v250 = vpop.f32.mrf.mxu0
    %v251 = vadd.f32 0.0, %v250
    %v252 = vpop.f32.mrf.mxu0
    %v253 = vand.u32 %v92, 4294901760
    %v254 = vsub.f32 %v92, %v253
    %v255 = vand.u32 %v254, 4294901760
    %v256 = vsub.f32 %v254, %v255
    %v257 = vand.u32 %v256, 4294901760
    %258 = vmatprep.mubr.f32.mxu0 %v257
    %v259 = vand.u32 %v91, 4294901760
    %v260 = vsub.f32 %v91, %v259
    %v261 = vand.u32 %v260, 4294901760
    %v262 = vsub.f32 %v260, %v261
    %v263 = vand.u32 %v262, 4294901760
    %264 = vmatmul.mubr.f32.gmra.mxu0 %v263
    %v265 = vpop.f32.mrf.mxu0
    %v266 = vadd.f32 0.0, %v265
    %v267 = vpop.f32.mrf.mxu0
    %v268 = vand.u32 %v94, 4294901760
    %v269 = vsub.f32 %v94, %v268
    %v270 = vand.u32 %v269, 4294901760
    %v271 = vsub.f32 %v269, %v270
    %v272 = vand.u32 %v271, 4294901760
    %273 = vmatprep.mubr.f32.mxu0 %v272
    %v274 = vand.u32 %v93, 4294901760
    %v275 = vsub.f32 %v93, %v274
    %v276 = vand.u32 %v275, 4294901760
    %v277 = vsub.f32 %v275, %v276
    %v278 = vand.u32 %v277, 4294901760
    %279 = vmatmul.mubr.f32.gmra.mxu0 %v278
    %v280 = vpop.f32.mrf.mxu0
    %v281 = vadd.f32 0.0, %v280
    %v282 = vpop.f32.mrf.mxu0
    %283 = vdwg.mxu0
    %284 = vmatprep.subr.mxu0 0.0
    %v285 = vand.u32 %v110, 4294901760
    %v286 = vsub.f32 %v110, %v285
    %v287 = vand.u32 %v286, 4294901760
    %v288 = vsub.f32 %v286, %v287
    %v289 = vand.u32 %v288, 4294901760
    %290 = vmatpush1.msra.mxu0 %v289
    %291 = vmatprep.subr.mxu0 0.0
    %v292 = vand.u32 %v109, 4294901760
    %v293 = vsub.f32 %v109, %v292
    %v294 = vand.u32 %v293, 4294901760
    %v295 = vsub.f32 %v293, %v294
    %v296 = vand.u32 %v295, 4294901760
    %297 = vmatpush1.msra.mxu0 %v296
    %298 = vmatprep.subr.mxu0 0.0
    %v299 = vand.u32 %v108, 4294901760
    %v300 = vsub.f32 %v108, %v299
    %v301 = vand.u32 %v300, 4294901760
    %v302 = vsub.f32 %v300, %v301
    %v303 = vand.u32 %v302, 4294901760
    %304 = vmatpush1.msra.mxu0 %v303
    %305 = vmatprep.subr.mxu0 0.0
    %v306 = vand.u32 %v107, 4294901760
    %v307 = vsub.f32 %v107, %v306
    %v308 = vand.u32 %v307, 4294901760
    %v309 = vsub.f32 %v307, %v308
    %v310 = vand.u32 %v309, 4294901760
    %311 = vmatpush1.msra.mxu0 %v310
    %312 = vmatprep.subr.mxu0 0.0
    %v313 = vand.u32 %v106, 4294901760
    %v314 = vsub.f32 %v106, %v313
    %v315 = vand.u32 %v314, 4294901760
    %v316 = vsub.f32 %v314, %v315
    %v317 = vand.u32 %v316, 4294901760
    %318 = vmatpush1.msra.mxu0 %v317
    %319 = vmatprep.subr.mxu0 0.0
    %v320 = vand.u32 %v105, 4294901760
    %v321 = vsub.f32 %v105, %v320
    %v322 = vand.u32 %v321, 4294901760
    %v323 = vsub.f32 %v321, %v322
    %v324 = vand.u32 %v323, 4294901760
    %325 = vmatpush1.msra.mxu0 %v324
    %326 = vmatprep.subr.mxu0 0.0
    %v327 = vand.u32 %v104, 4294901760
    %v328 = vsub.f32 %v104, %v327
    %v329 = vand.u32 %v328, 4294901760
    %v330 = vsub.f32 %v328, %v329
    %v331 = vand.u32 %v330, 4294901760
    %332 = vmatpush1.msra.mxu0 %v331
    %333 = vmatprep.subr.mxu0 0.0
    %v334 = vand.u32 %v103, 4294901760
    %v335 = vsub.f32 %v103, %v334
    %v336 = vand.u32 %v335, 4294901760
    %v337 = vsub.f32 %v335, %v336
    %v338 = vand.u32 %v337, 4294901760
    %339 = vmatpush1.msra.mxu0 %v338
    %340 = vmatprep.subr.mxu0 0.0
    %v341 = vand.u32 %v102, 4294901760
    %v342 = vsub.f32 %v102, %v341
    %v343 = vand.u32 %v342, 4294901760
    %v344 = vsub.f32 %v342, %v343
    %v345 = vand.u32 %v344, 4294901760
    %346 = vmatpush1.msra.mxu0 %v345
    %347 = vmatprep.subr.mxu0 0.0
    %v348 = vand.u32 %v101, 4294901760
    %v349 = vsub.f32 %v101, %v348
    %v350 = vand.u32 %v349, 4294901760
    %v351 = vsub.f32 %v349, %v350
    %v352 = vand.u32 %v351, 4294901760
    %353 = vmatpush1.msra.mxu0 %v352
    %354 = vmatprep.subr.mxu0 0.0
    %v355 = vand.u32 %v100, 4294901760
    %v356 = vsub.f32 %v100, %v355
    %v357 = vand.u32 %v356, 4294901760
    %v358 = vsub.f32 %v356, %v357
    %v359 = vand.u32 %v358, 4294901760
    %360 = vmatpush1.msra.mxu0 %v359
    %361 = vmatprep.subr.mxu0 0.0
    %v362 = vand.u32 %v99, 4294901760
    %v363 = vsub.f32 %v99, %v362
    %v364 = vand.u32 %v363, 4294901760
    %v365 = vsub.f32 %v363, %v364
    %v366 = vand.u32 %v365, 4294901760
    %367 = vmatpush1.msra.mxu0 %v366
    %368 = vmatprep.subr.mxu0 0.0
    %v369 = vand.u32 %v98, 4294901760
    %v370 = vsub.f32 %v98, %v369
    %v371 = vand.u32 %v370, 4294901760
    %v372 = vsub.f32 %v370, %v371
    %v373 = vand.u32 %v372, 4294901760
    %374 = vmatpush1.msra.mxu0 %v373
    %375 = vmatprep.subr.mxu0 0.0
    %v376 = vand.u32 %v97, 4294901760
    %v377 = vsub.f32 %v97, %v376
    %v378 = vand.u32 %v377, 4294901760
    %v379 = vsub.f32 %v377, %v378
    %v380 = vand.u32 %v379, 4294901760
    %381 = vmatpush1.msra.mxu0 %v380
    %382 = vmatprep.subr.mxu0 0.0
    %v383 = vand.u32 %v96, 4294901760
    %v384 = vsub.f32 %v96, %v383
    %v385 = vand.u32 %v384, 4294901760
    %v386 = vsub.f32 %v384, %v385
    %v387 = vand.u32 %v386, 4294901760
    %388 = vmatpush1.msra.mxu0 %v387
    %389 = vmatprep.subr.mxu0 0.0
    %v390 = vand.u32 %v95, 4294901760
    %v391 = vsub.f32 %v95, %v390
    %v392 = vand.u32 %v391, 4294901760
    %v393 = vsub.f32 %v391, %v392
    %v394 = vand.u32 %v393, 4294901760
    %395 = vmatpush1.msra.mxu0 %v394
    %396 = vmatprep.subr.mxu0 0.0
    %v397 = vand.u32 %v126, 4294901760
    %v398 = vsub.f32 %v126, %v397
    %v399 = vand.u32 %v398, 4294901760
    %v400 = vsub.f32 %v398, %v399
    %v401 = vand.u32 %v400, 4294901760
    %402 = vmatpush2.msra.mxu0 %v401
    %403 = vmatprep.subr.mxu0 0.0
    %v404 = vand.u32 %v125, 4294901760
    %v405 = vsub.f32 %v125, %v404
    %v406 = vand.u32 %v405, 4294901760
    %v407 = vsub.f32 %v405, %v406
    %v408 = vand.u32 %v407, 4294901760
    %409 = vmatpush2.msra.mxu0 %v408
    %410 = vmatprep.subr.mxu0 0.0
    %v411 = vand.u32 %v124, 4294901760
    %v412 = vsub.f32 %v124, %v411
    %v413 = vand.u32 %v412, 4294901760
    %v414 = vsub.f32 %v412, %v413
    %v415 = vand.u32 %v414, 4294901760
    %416 = vmatpush2.msra.mxu0 %v415
    %417 = vmatprep.subr.mxu0 0.0
    %v418 = vand.u32 %v123, 4294901760
    %v419 = vsub.f32 %v123, %v418
    %v420 = vand.u32 %v419, 4294901760
    %v421 = vsub.f32 %v419, %v420
    %v422 = vand.u32 %v421, 4294901760
    %423 = vmatpush2.msra.mxu0 %v422
    %424 = vmatprep.subr.mxu0 0.0
    %v425 = vand.u32 %v122, 4294901760
    %v426 = vsub.f32 %v122, %v425
    %v427 = vand.u32 %v426, 4294901760
    %v428 = vsub.f32 %v426, %v427
    %v429 = vand.u32 %v428, 4294901760
    %430 = vmatpush2.msra.mxu0 %v429
    %431 = vmatprep.subr.mxu0 0.0
    %v432 = vand.u32 %v121, 4294901760
    %v433 = vsub.f32 %v121, %v432
    %v434 = vand.u32 %v433, 4294901760
    %v435 = vsub.f32 %v433, %v434
    %v436 = vand.u32 %v435, 4294901760
    %437 = vmatpush2.msra.mxu0 %v436
    %438 = vmatprep.subr.mxu0 0.0
    %v439 = vand.u32 %v120, 4294901760
    %v440 = vsub.f32 %v120, %v439
    %v441 = vand.u32 %v440, 4294901760
    %v442 = vsub.f32 %v440, %v441
    %v443 = vand.u32 %v442, 4294901760
    %444 = vmatpush2.msra.mxu0 %v443
    %445 = vmatprep.subr.mxu0 0.0
    %v446 = vand.u32 %v119, 4294901760
    %v447 = vsub.f32 %v119, %v446
    %v448 = vand.u32 %v447, 4294901760
    %v449 = vsub.f32 %v447, %v448
    %v450 = vand.u32 %v449, 4294901760
    %451 = vmatpush2.msra.mxu0 %v450
    %452 = vmatprep.subr.mxu0 0.0
    %v453 = vand.u32 %v118, 4294901760
    %v454 = vsub.f32 %v118, %v453
    %v455 = vand.u32 %v454, 4294901760
    %v456 = vsub.f32 %v454, %v455
    %v457 = vand.u32 %v456, 4294901760
    %458 = vmatpush2.msra.mxu0 %v457
    %459 = vmatprep.subr.mxu0 0.0
    %v460 = vand.u32 %v117, 4294901760
    %v461 = vsub.f32 %v117, %v460
    %v462 = vand.u32 %v461, 4294901760
    %v463 = vsub.f32 %v461, %v462
    %v464 = vand.u32 %v463, 4294901760
    %465 = vmatpush2.msra.mxu0 %v464
    %466 = vmatprep.subr.mxu0 0.0
    %v467 = vand.u32 %v116, 4294901760
    %v468 = vsub.f32 %v116, %v467
    %v469 = vand.u32 %v468, 4294901760
    %v470 = vsub.f32 %v468, %v469
    %v471 = vand.u32 %v470, 4294901760
    %472 = vmatpush2.msra.mxu0 %v471
    %473 = vmatprep.subr.mxu0 0.0
    %v474 = vand.u32 %v115, 4294901760
    %v475 = vsub.f32 %v115, %v474
    %v476 = vand.u32 %v475, 4294901760
    %v477 = vsub.f32 %v475, %v476
    %v478 = vand.u32 %v477, 4294901760
    %479 = vmatpush2.msra.mxu0 %v478
    %480 = vmatprep.subr.mxu0 0.0
    %v481 = vand.u32 %v114, 4294901760
    %v482 = vsub.f32 %v114, %v481
    %v483 = vand.u32 %v482, 4294901760
    %v484 = vsub.f32 %v482, %v483
    %v485 = vand.u32 %v484, 4294901760
    %486 = vmatpush2.msra.mxu0 %v485
    %487 = vmatprep.subr.mxu0 0.0
    %v488 = vand.u32 %v113, 4294901760
    %v489 = vsub.f32 %v113, %v488
    %v490 = vand.u32 %v489, 4294901760
    %v491 = vsub.f32 %v489, %v490
    %v492 = vand.u32 %v491, 4294901760
    %493 = vmatpush2.msra.mxu0 %v492
    %494 = vmatprep.subr.mxu0 0.0
    %v495 = vand.u32 %v112, 4294901760
    %v496 = vsub.f32 %v112, %v495
    %v497 = vand.u32 %v496, 4294901760
    %v498 = vsub.f32 %v496, %v497
    %v499 = vand.u32 %v498, 4294901760
    %500 = vmatpush2.msra.mxu0 %v499
    %501 = vmatprep.subr.mxu0 0.0
    %v502 = vand.u32 %v111, 4294901760
    %v503 = vsub.f32 %v111, %v502
    %v504 = vand.u32 %v503, 4294901760
    %v505 = vsub.f32 %v503, %v504
    %v506 = vand.u32 %v505, 4294901760
    %507 = vmatpush2.msra.mxu0 %v506
    %v508 = vand.u32 %v88, 4294901760
    %509 = vmatprep.mubr.f32.mxu0 %v508
    %v510 = vand.u32 %v87, 4294901760
    %511 = vmatmul.mubr.f32.gmra.mxu0 %v510
    %v512 = vpop.f32.mrf.mxu0
    %v513 = vadd.f32 %v236, %v512
    %v514 = vpop.f32.mrf.mxu0
    %v515 = vand.u32 %v90, 4294901760
    %516 = vmatprep.mubr.f32.mxu0 %v515
    %v517 = vand.u32 %v89, 4294901760
    %518 = vmatmul.mubr.f32.gmra.mxu0 %v517
    %v519 = vpop.f32.mrf.mxu0
    %v520 = vadd.f32 %v251, %v519
    %v521 = vpop.f32.mrf.mxu0
    %v522 = vand.u32 %v92, 4294901760
    %523 = vmatprep.mubr.f32.mxu0 %v522
    %v524 = vand.u32 %v91, 4294901760
    %525 = vmatmul.mubr.f32.gmra.mxu0 %v524
    %v526 = vpop.f32.mrf.mxu0
    %v527 = vadd.f32 %v266, %v526
    %v528 = vpop.f32.mrf.mxu0
    %v529 = vand.u32 %v94, 4294901760
    %530 = vmatprep.mubr.f32.mxu0 %v529
    %v531 = vand.u32 %v93, 4294901760
    %532 = vmatmul.mubr.f32.gmra.mxu0 %v531
    %v533 = vpop.f32.mrf.mxu0
    %v534 = vadd.f32 %v281, %v533
    %v535 = vpop.f32.mrf.mxu0
    %536 = vdwg.mxu0
    %537 = vmatprep.subr.mxu0 0.0
    %v538 = vand.u32 %v110, 4294901760
    %v539 = vsub.f32 %v110, %v538
    %540 = vmatpush1.msra.mxu0 %v539
    %541 = vmatprep.subr.mxu0 0.0
    %v542 = vand.u32 %v109, 4294901760
    %v543 = vsub.f32 %v109, %v542
    %544 = vmatpush1.msra.mxu0 %v543
    %545 = vmatprep.subr.mxu0 0.0
    %v546 = vand.u32 %v108, 4294901760
    %v547 = vsub.f32 %v108, %v546
    %548 = vmatpush1.msra.mxu0 %v547
    %549 = vmatprep.subr.mxu0 0.0
    %v550 = vand.u32 %v107, 4294901760
    %v551 = vsub.f32 %v107, %v550
    %552 = vmatpush1.msra.mxu0 %v551
    %553 = vmatprep.subr.mxu0 0.0
    %v554 = vand.u32 %v106, 4294901760
    %v555 = vsub.f32 %v106, %v554
    %556 = vmatpush1.msra.mxu0 %v555
    %557 = vmatprep.subr.mxu0 0.0
    %v558 = vand.u32 %v105, 4294901760
    %v559 = vsub.f32 %v105, %v558
    %560 = vmatpush1.msra.mxu0 %v559
    %561 = vmatprep.subr.mxu0 0.0
    %v562 = vand.u32 %v104, 4294901760
    %v563 = vsub.f32 %v104, %v562
    %564 = vmatpush1.msra.mxu0 %v563
    %565 = vmatprep.subr.mxu0 0.0
    %v566 = vand.u32 %v103, 4294901760
    %v567 = vsub.f32 %v103, %v566
    %568 = vmatpush1.msra.mxu0 %v567
    %569 = vmatprep.subr.mxu0 0.0
    %v570 = vand.u32 %v102, 4294901760
    %v571 = vsub.f32 %v102, %v570
    %572 = vmatpush1.msra.mxu0 %v571
    %573 = vmatprep.subr.mxu0 0.0
    %v574 = vand.u32 %v101, 4294901760
    %v575 = vsub.f32 %v101, %v574
    %576 = vmatpush1.msra.mxu0 %v575
    %577 = vmatprep.subr.mxu0 0.0
    %v578 = vand.u32 %v100, 4294901760
    %v579 = vsub.f32 %v100, %v578
    %580 = vmatpush1.msra.mxu0 %v579
    %581 = vmatprep.subr.mxu0 0.0
    %v582 = vand.u32 %v99, 4294901760
    %v583 = vsub.f32 %v99, %v582
    %584 = vmatpush1.msra.mxu0 %v583
    %585 = vmatprep.subr.mxu0 0.0
    %v586 = vand.u32 %v98, 4294901760
    %v587 = vsub.f32 %v98, %v586
    %588 = vmatpush1.msra.mxu0 %v587
    %589 = vmatprep.subr.mxu0 0.0
    %v590 = vand.u32 %v97, 4294901760
    %v591 = vsub.f32 %v97, %v590
    %592 = vmatpush1.msra.mxu0 %v591
    %593 = vmatprep.subr.mxu0 0.0
    %v594 = vand.u32 %v96, 4294901760
    %v595 = vsub.f32 %v96, %v594
    %596 = vmatpush1.msra.mxu0 %v595
    %597 = vmatprep.subr.mxu0 0.0
    %v598 = vand.u32 %v95, 4294901760
    %v599 = vsub.f32 %v95, %v598
    %600 = vmatpush1.msra.mxu0 %v599
    %601 = vmatprep.subr.mxu0 0.0
    %v602 = vand.u32 %v126, 4294901760
    %v603 = vsub.f32 %v126, %v602
    %604 = vmatpush2.msra.mxu0 %v603
    %605 = vmatprep.subr.mxu0 0.0
    %v606 = vand.u32 %v125, 4294901760
    %v607 = vsub.f32 %v125, %v606
    %608 = vmatpush2.msra.mxu0 %v607
    %609 = vmatprep.subr.mxu0 0.0
    %v610 = vand.u32 %v124, 4294901760
    %v611 = vsub.f32 %v124, %v610
    %612 = vmatpush2.msra.mxu0 %v611
    %613 = vmatprep.subr.mxu0 0.0
    %v614 = vand.u32 %v123, 4294901760
    %v615 = vsub.f32 %v123, %v614
    %616 = vmatpush2.msra.mxu0 %v615
    %617 = vmatprep.subr.mxu0 0.0
    %v618 = vand.u32 %v122, 4294901760
    %v619 = vsub.f32 %v122, %v618
    %620 = vmatpush2.msra.mxu0 %v619
    %621 = vmatprep.subr.mxu0 0.0
    %v622 = vand.u32 %v121, 4294901760
    %v623 = vsub.f32 %v121, %v622
    %624 = vmatpush2.msra.mxu0 %v623
    %625 = vmatprep.subr.mxu0 0.0
    %v626 = vand.u32 %v120, 4294901760
    %v627 = vsub.f32 %v120, %v626
    %628 = vmatpush2.msra.mxu0 %v627
    %629 = vmatprep.subr.mxu0 0.0
    %v630 = vand.u32 %v119, 4294901760
    %v631 = vsub.f32 %v119, %v630
    %632 = vmatpush2.msra.mxu0 %v631
    %633 = vmatprep.subr.mxu0 0.0
    %v634 = vand.u32 %v118, 4294901760
    %v635 = vsub.f32 %v118, %v634
    %636 = vmatpush2.msra.mxu0 %v635
    %637 = vmatprep.subr.mxu0 0.0
    %v638 = vand.u32 %v117, 4294901760
    %v639 = vsub.f32 %v117, %v638
    %640 = vmatpush2.msra.mxu0 %v639
    %641 = vmatprep.subr.mxu0 0.0
    %v642 = vand.u32 %v116, 4294901760
    %v643 = vsub.f32 %v116, %v642
    %644 = vmatpush2.msra.mxu0 %v643
    %645 = vmatprep.subr.mxu0 0.0
    %v646 = vand.u32 %v115, 4294901760
    %v647 = vsub.f32 %v115, %v646
    %648 = vmatpush2.msra.mxu0 %v647
    %649 = vmatprep.subr.mxu0 0.0
    %v650 = vand.u32 %v114, 4294901760
    %v651 = vsub.f32 %v114, %v650
    %652 = vmatpush2.msra.mxu0 %v651
    %653 = vmatprep.subr.mxu0 0.0
    %v654 = vand.u32 %v113, 4294901760
    %v655 = vsub.f32 %v113, %v654
    %656 = vmatpush2.msra.mxu0 %v655
    %657 = vmatprep.subr.mxu0 0.0
    %v658 = vand.u32 %v112, 4294901760
    %v659 = vsub.f32 %v112, %v658
    %660 = vmatpush2.msra.mxu0 %v659
    %661 = vmatprep.subr.mxu0 0.0
    %v662 = vand.u32 %v111, 4294901760
    %v663 = vsub.f32 %v111, %v662
    %664 = vmatpush2.msra.mxu0 %v663
    %v665 = vand.u32 %v88, 4294901760
    %v666 = vsub.f32 %v88, %v665
    %667 = vmatprep.mubr.f32.mxu0 %v666
    %v668 = vand.u32 %v87, 4294901760
    %v669 = vsub.f32 %v87, %v668
    %670 = vmatmul.mubr.f32.gmra.mxu0 %v669
    %v671 = vpop.f32.mrf.mxu0
    %v672 = vadd.f32 %v513, %v671
    %v673 = vpop.f32.mrf.mxu0
    %v674 = vand.u32 %v90, 4294901760
    %v675 = vsub.f32 %v90, %v674
    %676 = vmatprep.mubr.f32.mxu0 %v675
    %v677 = vand.u32 %v89, 4294901760
    %v678 = vsub.f32 %v89, %v677
    %679 = vmatmul.mubr.f32.gmra.mxu0 %v678
    %v680 = vpop.f32.mrf.mxu0
    %v681 = vadd.f32 %v520, %v680
    %v682 = vpop.f32.mrf.mxu0
    %v683 = vand.u32 %v92, 4294901760
    %v684 = vsub.f32 %v92, %v683
    %685 = vmatprep.mubr.f32.mxu0 %v684
    %v686 = vand.u32 %v91, 4294901760
    %v687 = vsub.f32 %v91, %v686
    %688 = vmatmul.mubr.f32.gmra.mxu0 %v687
    %v689 = vpop.f32.mrf.mxu0
    %v690 = vadd.f32 %v527, %v689
    %v691 = vpop.f32.mrf.mxu0
    %v692 = vand.u32 %v94, 4294901760
    %v693 = vsub.f32 %v94, %v692
    %694 = vmatprep.mubr.f32.mxu0 %v693
    %v695 = vand.u32 %v93, 4294901760
    %v696 = vsub.f32 %v93, %v695
    %697 = vmatmul.mubr.f32.gmra.mxu0 %v696
    %v698 = vpop.f32.mrf.mxu0
    %v699 = vadd.f32 %v534, %v698
    %v700 = vpop.f32.mrf.mxu0
    %701 = vdwg.mxu0
    %702 = vmatprep.subr.mxu0 0.0
    %v703 = vand.u32 %v110, 4294901760
    %704 = vmatpush1.msra.mxu0 %v703
    %705 = vmatprep.subr.mxu0 0.0
    %v706 = vand.u32 %v109, 4294901760
    %707 = vmatpush1.msra.mxu0 %v706
    %708 = vmatprep.subr.mxu0 0.0
    %v709 = vand.u32 %v108, 4294901760
    %710 = vmatpush1.msra.mxu0 %v709
    %711 = vmatprep.subr.mxu0 0.0
    %v712 = vand.u32 %v107, 4294901760
    %713 = vmatpush1.msra.mxu0 %v712
    %714 = vmatprep.subr.mxu0 0.0
    %v715 = vand.u32 %v106, 4294901760
    %716 = vmatpush1.msra.mxu0 %v715
    %717 = vmatprep.subr.mxu0 0.0
    %v718 = vand.u32 %v105, 4294901760
    %719 = vmatpush1.msra.mxu0 %v718
    %720 = vmatprep.subr.mxu0 0.0
    %v721 = vand.u32 %v104, 4294901760
    %722 = vmatpush1.msra.mxu0 %v721
    %723 = vmatprep.subr.mxu0 0.0
    %v724 = vand.u32 %v103, 4294901760
    %725 = vmatpush1.msra.mxu0 %v724
    %726 = vmatprep.subr.mxu0 0.0
    %v727 = vand.u32 %v102, 4294901760
    %728 = vmatpush1.msra.mxu0 %v727
    %729 = vmatprep.subr.mxu0 0.0
    %v730 = vand.u32 %v101, 4294901760
    %731 = vmatpush1.msra.mxu0 %v730
    %732 = vmatprep.subr.mxu0 0.0
    %v733 = vand.u32 %v100, 4294901760
    %734 = vmatpush1.msra.mxu0 %v733
    %735 = vmatprep.subr.mxu0 0.0
    %v736 = vand.u32 %v99, 4294901760
    %737 = vmatpush1.msra.mxu0 %v736
    %738 = vmatprep.subr.mxu0 0.0
    %v739 = vand.u32 %v98, 4294901760
    %740 = vmatpush1.msra.mxu0 %v739
    %741 = vmatprep.subr.mxu0 0.0
    %v742 = vand.u32 %v97, 4294901760
    %743 = vmatpush1.msra.mxu0 %v742
    %744 = vmatprep.subr.mxu0 0.0
    %v745 = vand.u32 %v96, 4294901760
    %746 = vmatpush1.msra.mxu0 %v745
    %747 = vmatprep.subr.mxu0 0.0
    %v748 = vand.u32 %v95, 4294901760
    %749 = vmatpush1.msra.mxu0 %v748
    %750 = vmatprep.subr.mxu0 0.0
    %v751 = vand.u32 %v126, 4294901760
    %752 = vmatpush2.msra.mxu0 %v751
    %753 = vmatprep.subr.mxu0 0.0
    %v754 = vand.u32 %v125, 4294901760
    %755 = vmatpush2.msra.mxu0 %v754
    %756 = vmatprep.subr.mxu0 0.0
    %v757 = vand.u32 %v124, 4294901760
    %758 = vmatpush2.msra.mxu0 %v757
    %759 = vmatprep.subr.mxu0 0.0
    %v760 = vand.u32 %v123, 4294901760
    %761 = vmatpush2.msra.mxu0 %v760
    %762 = vmatprep.subr.mxu0 0.0
    %v763 = vand.u32 %v122, 4294901760
    %764 = vmatpush2.msra.mxu0 %v763
    %765 = vmatprep.subr.mxu0 0.0
    %v766 = vand.u32 %v121, 4294901760
    %767 = vmatpush2.msra.mxu0 %v766
    %768 = vmatprep.subr.mxu0 0.0
    %v769 = vand.u32 %v120, 4294901760
    %770 = vmatpush2.msra.mxu0 %v769
    %771 = vmatprep.subr.mxu0 0.0
    %v772 = vand.u32 %v119, 4294901760
    %773 = vmatpush2.msra.mxu0 %v772
    %774 = vmatprep.subr.mxu0 0.0
    %v775 = vand.u32 %v118, 4294901760
    %776 = vmatpush2.msra.mxu0 %v775
    %777 = vmatprep.subr.mxu0 0.0
    %v778 = vand.u32 %v117, 4294901760
    %779 = vmatpush2.msra.mxu0 %v778
    %780 = vmatprep.subr.mxu0 0.0
    %v781 = vand.u32 %v116, 4294901760
    %782 = vmatpush2.msra.mxu0 %v781
    %783 = vmatprep.subr.mxu0 0.0
    %v784 = vand.u32 %v115, 4294901760
    %785 = vmatpush2.msra.mxu0 %v784
    %786 = vmatprep.subr.mxu0 0.0
    %v787 = vand.u32 %v114, 4294901760
    %788 = vmatpush2.msra.mxu0 %v787
    %789 = vmatprep.subr.mxu0 0.0
    %v790 = vand.u32 %v113, 4294901760
    %791 = vmatpush2.msra.mxu0 %v790
    %792 = vmatprep.subr.mxu0 0.0
    %v793 = vand.u32 %v112, 4294901760
    %794 = vmatpush2.msra.mxu0 %v793
    %795 = vmatprep.subr.mxu0 0.0
    %v796 = vand.u32 %v111, 4294901760
    %797 = vmatpush2.msra.mxu0 %v796
    %v798 = vand.u32 %v88, 4294901760
    %v799 = vsub.f32 %v88, %v798
    %v800 = vand.u32 %v799, 4294901760
    %801 = vmatprep.mubr.f32.mxu0 %v800
    %v802 = vand.u32 %v87, 4294901760
    %v803 = vsub.f32 %v87, %v802
    %v804 = vand.u32 %v803, 4294901760
    %805 = vmatmul.mubr.f32.gmra.mxu0 %v804
    %v806 = vpop.f32.mrf.mxu0
    %v807 = vadd.f32 %v672, %v806
    %v808 = vpop.f32.mrf.mxu0
    %v809 = vand.u32 %v90, 4294901760
    %v810 = vsub.f32 %v90, %v809
    %v811 = vand.u32 %v810, 4294901760
    %812 = vmatprep.mubr.f32.mxu0 %v811
    %v813 = vand.u32 %v89, 4294901760
    %v814 = vsub.f32 %v89, %v813
    %v815 = vand.u32 %v814, 4294901760
    %816 = vmatmul.mubr.f32.gmra.mxu0 %v815
    %v817 = vpop.f32.mrf.mxu0
    %v818 = vadd.f32 %v681, %v817
    %v819 = vpop.f32.mrf.mxu0
    %v820 = vand.u32 %v92, 4294901760
    %v821 = vsub.f32 %v92, %v820
    %v822 = vand.u32 %v821, 4294901760
    %823 = vmatprep.mubr.f32.mxu0 %v822
    %v824 = vand.u32 %v91, 4294901760
    %v825 = vsub.f32 %v91, %v824
    %v826 = vand.u32 %v825, 4294901760
    %827 = vmatmul.mubr.f32.gmra.mxu0 %v826
    %v828 = vpop.f32.mrf.mxu0
    %v829 = vadd.f32 %v690, %v828
    %v830 = vpop.f32.mrf.mxu0
    %v831 = vand.u32 %v94, 4294901760
    %v832 = vsub.f32 %v94, %v831
    %v833 = vand.u32 %v832, 4294901760
    %834 = vmatprep.mubr.f32.mxu0 %v833
    %v835 = vand.u32 %v93, 4294901760
    %v836 = vsub.f32 %v93, %v835
    %v837 = vand.u32 %v836, 4294901760
    %838 = vmatmul.mubr.f32.gmra.mxu0 %v837
    %v839 = vpop.f32.mrf.mxu0
    %v840 = vadd.f32 %v699, %v839
    %v841 = vpop.f32.mrf.mxu0
    %842 = vdwg.mxu0
    %843 = vmatprep.subr.mxu0 0.0
    %v844 = vand.u32 %v110, 4294901760
    %v845 = vsub.f32 %v110, %v844
    %v846 = vand.u32 %v845, 4294901760
    %847 = vmatpush1.msra.mxu0 %v846
    %848 = vmatprep.subr.mxu0 0.0
    %v849 = vand.u32 %v109, 4294901760
    %v850 = vsub.f32 %v109, %v849
    %v851 = vand.u32 %v850, 4294901760
    %852 = vmatpush1.msra.mxu0 %v851
    %853 = vmatprep.subr.mxu0 0.0
    %v854 = vand.u32 %v108, 4294901760
    %v855 = vsub.f32 %v108, %v854
    %v856 = vand.u32 %v855, 4294901760
    %857 = vmatpush1.msra.mxu0 %v856
    %858 = vmatprep.subr.mxu0 0.0
    %v859 = vand.u32 %v107, 4294901760
    %v860 = vsub.f32 %v107, %v859
    %v861 = vand.u32 %v860, 4294901760
    %862 = vmatpush1.msra.mxu0 %v861
    %863 = vmatprep.subr.mxu0 0.0
    %v864 = vand.u32 %v106, 4294901760
    %v865 = vsub.f32 %v106, %v864
    %v866 = vand.u32 %v865, 4294901760
    %867 = vmatpush1.msra.mxu0 %v866
    %868 = vmatprep.subr.mxu0 0.0
    %v869 = vand.u32 %v105, 4294901760
    %v870 = vsub.f32 %v105, %v869
    %v871 = vand.u32 %v870, 4294901760
    %872 = vmatpush1.msra.mxu0 %v871
    %873 = vmatprep.subr.mxu0 0.0
    %v874 = vand.u32 %v104, 4294901760
    %v875 = vsub.f32 %v104, %v874
    %v876 = vand.u32 %v875, 4294901760
    %877 = vmatpush1.msra.mxu0 %v876
    %878 = vmatprep.subr.mxu0 0.0
    %v879 = vand.u32 %v103, 4294901760
    %v880 = vsub.f32 %v103, %v879
    %v881 = vand.u32 %v880, 4294901760
    %882 = vmatpush1.msra.mxu0 %v881
    %883 = vmatprep.subr.mxu0 0.0
    %v884 = vand.u32 %v102, 4294901760
    %v885 = vsub.f32 %v102, %v884
    %v886 = vand.u32 %v885, 4294901760
    %887 = vmatpush1.msra.mxu0 %v886
    %888 = vmatprep.subr.mxu0 0.0
    %v889 = vand.u32 %v101, 4294901760
    %v890 = vsub.f32 %v101, %v889
    %v891 = vand.u32 %v890, 4294901760
    %892 = vmatpush1.msra.mxu0 %v891
    %893 = vmatprep.subr.mxu0 0.0
    %v894 = vand.u32 %v100, 4294901760
    %v895 = vsub.f32 %v100, %v894
    %v896 = vand.u32 %v895, 4294901760
    %897 = vmatpush1.msra.mxu0 %v896
    %898 = vmatprep.subr.mxu0 0.0
    %v899 = vand.u32 %v99, 4294901760
    %v900 = vsub.f32 %v99, %v899
    %v901 = vand.u32 %v900, 4294901760
    %902 = vmatpush1.msra.mxu0 %v901
    %903 = vmatprep.subr.mxu0 0.0
    %v904 = vand.u32 %v98, 4294901760
    %v905 = vsub.f32 %v98, %v904
    %v906 = vand.u32 %v905, 4294901760
    %907 = vmatpush1.msra.mxu0 %v906
    %908 = vmatprep.subr.mxu0 0.0
    %v909 = vand.u32 %v97, 4294901760
    %v910 = vsub.f32 %v97, %v909
    %v911 = vand.u32 %v910, 4294901760
    %912 = vmatpush1.msra.mxu0 %v911
    %913 = vmatprep.subr.mxu0 0.0
    %v914 = vand.u32 %v96, 4294901760
    %v915 = vsub.f32 %v96, %v914
    %v916 = vand.u32 %v915, 4294901760
    %917 = vmatpush1.msra.mxu0 %v916
    %918 = vmatprep.subr.mxu0 0.0
    %v919 = vand.u32 %v95, 4294901760
    %v920 = vsub.f32 %v95, %v919
    %v921 = vand.u32 %v920, 4294901760
    %922 = vmatpush1.msra.mxu0 %v921
    %923 = vmatprep.subr.mxu0 0.0
    %v924 = vand.u32 %v126, 4294901760
    %v925 = vsub.f32 %v126, %v924
    %v926 = vand.u32 %v925, 4294901760
    %927 = vmatpush2.msra.mxu0 %v926
    %928 = vmatprep.subr.mxu0 0.0
    %v929 = vand.u32 %v125, 4294901760
    %v930 = vsub.f32 %v125, %v929
    %v931 = vand.u32 %v930, 4294901760
    %932 = vmatpush2.msra.mxu0 %v931
    %933 = vmatprep.subr.mxu0 0.0
    %v934 = vand.u32 %v124, 4294901760
    %v935 = vsub.f32 %v124, %v934
    %v936 = vand.u32 %v935, 4294901760
    %937 = vmatpush2.msra.mxu0 %v936
    %938 = vmatprep.subr.mxu0 0.0
    %v939 = vand.u32 %v123, 4294901760
    %v940 = vsub.f32 %v123, %v939
    %v941 = vand.u32 %v940, 4294901760
    %942 = vmatpush2.msra.mxu0 %v941
    %943 = vmatprep.subr.mxu0 0.0
    %v944 = vand.u32 %v122, 4294901760
    %v945 = vsub.f32 %v122, %v944
    %v946 = vand.u32 %v945, 4294901760
    %947 = vmatpush2.msra.mxu0 %v946
    %948 = vmatprep.subr.mxu0 0.0
    %v949 = vand.u32 %v121, 4294901760
    %v950 = vsub.f32 %v121, %v949
    %v951 = vand.u32 %v950, 4294901760
    %952 = vmatpush2.msra.mxu0 %v951
    %953 = vmatprep.subr.mxu0 0.0
    %v954 = vand.u32 %v120, 4294901760
    %v955 = vsub.f32 %v120, %v954
    %v956 = vand.u32 %v955, 4294901760
    %957 = vmatpush2.msra.mxu0 %v956
    %958 = vmatprep.subr.mxu0 0.0
    %v959 = vand.u32 %v119, 4294901760
    %v960 = vsub.f32 %v119, %v959
    %v961 = vand.u32 %v960, 4294901760
    %962 = vmatpush2.msra.mxu0 %v961
    %963 = vmatprep.subr.mxu0 0.0
    %v964 = vand.u32 %v118, 4294901760
    %v965 = vsub.f32 %v118, %v964
    %v966 = vand.u32 %v965, 4294901760
    %967 = vmatpush2.msra.mxu0 %v966
    %968 = vmatprep.subr.mxu0 0.0
    %v969 = vand.u32 %v117, 4294901760
    %v970 = vsub.f32 %v117, %v969
    %v971 = vand.u32 %v970, 4294901760
    %972 = vmatpush2.msra.mxu0 %v971
    %973 = vmatprep.subr.mxu0 0.0
    %v974 = vand.u32 %v116, 4294901760
    %v975 = vsub.f32 %v116, %v974
    %v976 = vand.u32 %v975, 4294901760
    %977 = vmatpush2.msra.mxu0 %v976
    %978 = vmatprep.subr.mxu0 0.0
    %v979 = vand.u32 %v115, 4294901760
    %v980 = vsub.f32 %v115, %v979
    %v981 = vand.u32 %v980, 4294901760
    %982 = vmatpush2.msra.mxu0 %v981
    %983 = vmatprep.subr.mxu0 0.0
    %v984 = vand.u32 %v114, 4294901760
    %v985 = vsub.f32 %v114, %v984
    %v986 = vand.u32 %v985, 4294901760
    %987 = vmatpush2.msra.mxu0 %v986
    %988 = vmatprep.subr.mxu0 0.0
    %v989 = vand.u32 %v113, 4294901760
    %v990 = vsub.f32 %v113, %v989
    %v991 = vand.u32 %v990, 4294901760
    %992 = vmatpush2.msra.mxu0 %v991
    %993 = vmatprep.subr.mxu0 0.0
    %v994 = vand.u32 %v112, 4294901760
    %v995 = vsub.f32 %v112, %v994
    %v996 = vand.u32 %v995, 4294901760
    %997 = vmatpush2.msra.mxu0 %v996
    %998 = vmatprep.subr.mxu0 0.0
    %v999 = vand.u32 %v111, 4294901760
    %v1000 = vsub.f32 %v111, %v999
    %v1001 = vand.u32 %v1000, 4294901760
    %1002 = vmatpush2.msra.mxu0 %v1001
    %v1003 = vand.u32 %v88, 4294901760
    %1004 = vmatprep.mubr.f32.mxu0 %v1003
    %v1005 = vand.u32 %v87, 4294901760
    %1006 = vmatmul.mubr.f32.gmra.mxu0 %v1005
    %v1007 = vpop.f32.mrf.mxu0
    %v1008 = vadd.f32 %v807, %v1007
    %v1009 = vpop.f32.mrf.mxu0
    %v1010 = vand.u32 %v90, 4294901760
    %1011 = vmatprep.mubr.f32.mxu0 %v1010
    %v1012 = vand.u32 %v89, 4294901760
    %1013 = vmatmul.mubr.f32.gmra.mxu0 %v1012
    %v1014 = vpop.f32.mrf.mxu0
    %v1015 = vadd.f32 %v818, %v1014
    %v1016 = vpop.f32.mrf.mxu0
    %v1017 = vand.u32 %v92, 4294901760
    %1018 = vmatprep.mubr.f32.mxu0 %v1017
    %v1019 = vand.u32 %v91, 4294901760
    %1020 = vmatmul.mubr.f32.gmra.mxu0 %v1019
    %v1021 = vpop.f32.mrf.mxu0
    %v1022 = vadd.f32 %v829, %v1021
    %v1023 = vpop.f32.mrf.mxu0
    %v1024 = vand.u32 %v94, 4294901760
    %1025 = vmatprep.mubr.f32.mxu0 %v1024
    %v1026 = vand.u32 %v93, 4294901760
    %1027 = vmatmul.mubr.f32.gmra.mxu0 %v1026
    %v1028 = vpop.f32.mrf.mxu0
    %v1029 = vadd.f32 %v840, %v1028
    %v1030 = vpop.f32.mrf.mxu0
    %1031 = vdwg.mxu0
    %1032 = vmatprep.subr.mxu0 0.0
    %v1033 = vand.u32 %v110, 4294901760
    %1034 = vmatpush1.msra.mxu0 %v1033
    %1035 = vmatprep.subr.mxu0 0.0
    %v1036 = vand.u32 %v109, 4294901760
    %1037 = vmatpush1.msra.mxu0 %v1036
    %1038 = vmatprep.subr.mxu0 0.0
    %v1039 = vand.u32 %v108, 4294901760
    %1040 = vmatpush1.msra.mxu0 %v1039
    %1041 = vmatprep.subr.mxu0 0.0
    %v1042 = vand.u32 %v107, 4294901760
    %1043 = vmatpush1.msra.mxu0 %v1042
    %1044 = vmatprep.subr.mxu0 0.0
    %v1045 = vand.u32 %v106, 4294901760
    %1046 = vmatpush1.msra.mxu0 %v1045
    %1047 = vmatprep.subr.mxu0 0.0
    %v1048 = vand.u32 %v105, 4294901760
    %1049 = vmatpush1.msra.mxu0 %v1048
    %1050 = vmatprep.subr.mxu0 0.0
    %v1051 = vand.u32 %v104, 4294901760
    %1052 = vmatpush1.msra.mxu0 %v1051
    %1053 = vmatprep.subr.mxu0 0.0
    %v1054 = vand.u32 %v103, 4294901760
    %1055 = vmatpush1.msra.mxu0 %v1054
    %1056 = vmatprep.subr.mxu0 0.0
    %v1057 = vand.u32 %v102, 4294901760
    %1058 = vmatpush1.msra.mxu0 %v1057
    %1059 = vmatprep.subr.mxu0 0.0
    %v1060 = vand.u32 %v101, 4294901760
    %1061 = vmatpush1.msra.mxu0 %v1060
    %1062 = vmatprep.subr.mxu0 0.0
    %v1063 = vand.u32 %v100, 4294901760
    %1064 = vmatpush1.msra.mxu0 %v1063
    %1065 = vmatprep.subr.mxu0 0.0
    %v1066 = vand.u32 %v99, 4294901760
    %1067 = vmatpush1.msra.mxu0 %v1066
    %1068 = vmatprep.subr.mxu0 0.0
    %v1069 = vand.u32 %v98, 4294901760
    %1070 = vmatpush1.msra.mxu0 %v1069
    %1071 = vmatprep.subr.mxu0 0.0
    %v1072 = vand.u32 %v97, 4294901760
    %1073 = vmatpush1.msra.mxu0 %v1072
    %1074 = vmatprep.subr.mxu0 0.0
    %v1075 = vand.u32 %v96, 4294901760
    %1076 = vmatpush1.msra.mxu0 %v1075
    %1077 = vmatprep.subr.mxu0 0.0
    %v1078 = vand.u32 %v95, 4294901760
    %1079 = vmatpush1.msra.mxu0 %v1078
    %1080 = vmatprep.subr.mxu0 0.0
    %v1081 = vand.u32 %v126, 4294901760
    %1082 = vmatpush2.msra.mxu0 %v1081
    %1083 = vmatprep.subr.mxu0 0.0
    %v1084 = vand.u32 %v125, 4294901760
    %1085 = vmatpush2.msra.mxu0 %v1084
    %1086 = vmatprep.subr.mxu0 0.0
    %v1087 = vand.u32 %v124, 4294901760
    %1088 = vmatpush2.msra.mxu0 %v1087
    %1089 = vmatprep.subr.mxu0 0.0
    %v1090 = vand.u32 %v123, 4294901760
    %1091 = vmatpush2.msra.mxu0 %v1090
    %1092 = vmatprep.subr.mxu0 0.0
    %v1093 = vand.u32 %v122, 4294901760
    %1094 = vmatpush2.msra.mxu0 %v1093
    %1095 = vmatprep.subr.mxu0 0.0
    %v1096 = vand.u32 %v121, 4294901760
    %1097 = vmatpush2.msra.mxu0 %v1096
    %1098 = vmatprep.subr.mxu0 0.0
    %v1099 = vand.u32 %v120, 4294901760
    %1100 = vmatpush2.msra.mxu0 %v1099
    %1101 = vmatprep.subr.mxu0 0.0
    %v1102 = vand.u32 %v119, 4294901760
    %1103 = vmatpush2.msra.mxu0 %v1102
    %1104 = vmatprep.subr.mxu0 0.0
    %v1105 = vand.u32 %v118, 4294901760
    %1106 = vmatpush2.msra.mxu0 %v1105
    %1107 = vmatprep.subr.mxu0 0.0
    %v1108 = vand.u32 %v117, 4294901760
    %1109 = vmatpush2.msra.mxu0 %v1108
    %1110 = vmatprep.subr.mxu0 0.0
    %v1111 = vand.u32 %v116, 4294901760
    %1112 = vmatpush2.msra.mxu0 %v1111
    %1113 = vmatprep.subr.mxu0 0.0
    %v1114 = vand.u32 %v115, 4294901760
    %1115 = vmatpush2.msra.mxu0 %v1114
    %1116 = vmatprep.subr.mxu0 0.0
    %v1117 = vand.u32 %v114, 4294901760
    %1118 = vmatpush2.msra.mxu0 %v1117
    %1119 = vmatprep.subr.mxu0 0.0
    %v1120 = vand.u32 %v113, 4294901760
    %1121 = vmatpush2.msra.mxu0 %v1120
    %1122 = vmatprep.subr.mxu0 0.0
    %v1123 = vand.u32 %v112, 4294901760
    %1124 = vmatpush2.msra.mxu0 %v1123
    %1125 = vmatprep.subr.mxu0 0.0
    %v1126 = vand.u32 %v111, 4294901760
    %1127 = vmatpush2.msra.mxu0 %v1126
    %v1128 = vand.u32 %v88, 4294901760
    %1129 = vmatprep.mubr.f32.mxu0 %v1128
    %v1130 = vand.u32 %v87, 4294901760
    %1131 = vmatmul.mubr.f32.gmra.mxu0 %v1130
    %v1132 = vpop.f32.mrf.mxu0
    %v1133 = vadd.f32 %v1008, %v1132
    %v1134 = vpop.f32.mrf.mxu0
    %v1135 = vand.u32 %v90, 4294901760
    %1136 = vmatprep.mubr.f32.mxu0 %v1135
    %v1137 = vand.u32 %v89, 4294901760
    %1138 = vmatmul.mubr.f32.gmra.mxu0 %v1137
    %v1139 = vpop.f32.mrf.mxu0
    %v1140 = vadd.f32 %v1015, %v1139
    %v1141 = vpop.f32.mrf.mxu0
    %v1142 = vand.u32 %v92, 4294901760
    %1143 = vmatprep.mubr.f32.mxu0 %v1142
    %v1144 = vand.u32 %v91, 4294901760
    %1145 = vmatmul.mubr.f32.gmra.mxu0 %v1144
    %v1146 = vpop.f32.mrf.mxu0
    %v1147 = vadd.f32 %v1022, %v1146
    %v1148 = vpop.f32.mrf.mxu0
    %v1149 = vand.u32 %v94, 4294901760
    %1150 = vmatprep.mubr.f32.mxu0 %v1149
    %v1151 = vand.u32 %v93, 4294901760
    %1152 = vmatmul.mubr.f32.gmra.mxu0 %v1151
    %v1153 = vpop.f32.mrf.mxu0
    %v1154 = vadd.f32 %v1029, %v1153
    %v1155 = vpop.f32.mrf.mxu0
    %1156 = vdwg.mxu0
    %v1157 = vld [vmem:[#allocation10] ss:$0 sm:$0xff]
    %v1158 = vld [vmem:[#allocation10 + $0x1] ss:$0 sm:$0xff]
    %v1159 = vadd.f32 %v1133, %v1140
    %v1160 = vadd.f32 %v1159, %v1147
    %v1161 = vadd.f32 %v1160, %v1154
    %v1162 = vrot.slane %v1161, 4
    %v1163 = vadd.f32 %v1161, %v1162
    %v1164 = vrot.slane %v1163, 2
    %v1165 = vadd.f32 %v1163, %v1164
    %v1166 = vrot.slane %v1165, 1
    %v1167 = vadd.f32 %v1165, %v1166
    %v1168 = vmul.f32 %v1133, %v1133
    %v1169 = vmul.f32 %v1140, %v1140
    %v1170 = vmul.f32 %v1147, %v1147
    %v1171 = vmul.f32 %v1154, %v1154
    %v1172 = vadd.f32 %v1168, %v1169
    %v1173 = vadd.f32 %v1172, %v1170
    %v1174 = vadd.f32 %v1173, %v1171
    %v1175 = vrot.slane %v1174, 4
    %v1176 = vadd.f32 %v1174, %v1175
    %v1177 = vrot.slane %v1176, 2
    %v1178 = vadd.f32 %v1176, %v1177
    %v1179 = vrot.slane %v1178, 1
    %v1180 = vadd.f32 %v1178, %v1179
    %vm1181 = vcmask 1040384
    %v1182 = vsel %vm1181, %v1167, %v1180
    %1183 = vrot.lane.b32.xlu0 %v1182, 8
    %v1184 = vpop.permute.xlu0 %1183
    %v1185 = vadd.f32 %v1182, %v1184
    %1186 = vrot.lane.b32.xlu0 %v1185, 16
    %v1187 = vpop.permute.xlu0 %1186
    %v1188 = vadd.f32 %v1185, %v1187
    %1189 = vrot.lane.b32.xlu0 %v1188, 32
    %v1190 = vpop.permute.xlu0 %1189
    %v1191 = vadd.f32 %v1188, %v1190
    %1192 = vrot.lane.b32.xlu0 %v1191, 64
    %v1193 = vpop.permute.xlu0 %1192
    %v1194 = vadd.f32 %v1191, %v1193
    %v1195 = vmul.f32 %v1194, 0.001953125
    %v1196 = vmul.f32 %v1195, %v1195
    %v1198 = vrot.slane %v1196, 7
    %v1200 = vsub.f32 %v1195, %v1198
    %v1201 = vmax.f32 %v1200, 0.0
    %v1202 = vadd.f32 %v1201, 1e-05
    %v1203 = vrsqrt.pop %v1202
    %v1204 = vmul.f32 %v1157, %v1203
    %v1206 = vrot.slane %v1204, 1
    %v1208 = vmul.f32 %v1195, %v1206
    %v1209 = vsub.f32 %v1158, %v1208
    %v1210 = vlaneseq
    %v1211 = vshrl.u32 %v1210, 7
    %v1212 = vsub.s32 1, %v1211
    %v1213 = vrot.slane %v1204, %v1212
    %v1214 = vmul.f32 %v1133, %v1213
    %v1215 = vmul.f32 %v1140, %v1213
    %v1216 = vmul.f32 %v1147, %v1213
    %v1217 = vmul.f32 %v1154, %v1213
    %v1218 = vlaneseq
    %v1219 = vshrl.u32 %v1218, 7
    %v1220 = vsub.s32 0, %v1219
    %v1221 = vrot.slane %v1209, %v1220
    %v1222 = vadd.f32 %v1214, %v1221
    %v1223 = vadd.f32 %v1215, %v1221
    %v1224 = vadd.f32 %v1216, %v1221
    %v1225 = vadd.f32 %v1217, %v1221
    %v1226 = vmax.f32 %v1222, 0.0
    %v1227 = vmax.f32 %v1223, 0.0
    %v1228 = vmax.f32 %v1224, 0.0
    %v1229 = vmax.f32 %v1225, 0.0
    %v1230 = vlaneseq
    %v1231 = vshrl.u32 %v1230, 7
    %v1232 = vadd.s32 %v1231, 8
    %v1233 = vadd.s32 %v1231, 16
    %v1234 = vadd.s32 %v1231, 24
    %vm1235 = vcmp.lt.s32.totalorder %v1231, 0
    %v1236 = vsub.s32 0, %v1231
    %v1237 = vsel %vm1235, %v1236, %v1231
    %v1238 = vshrl.u32 %v1237, 4
    %v1239 = vand.u32 %v1237, 15
    %v1240 = vsub.s32 0, %v1239
    %v1241 = vsel %vm1235, %v1240, %v1239
    %vm1242 = vcmp.lt.s32.totalorder %v1232, 0
    %v1243 = vsub.s32 0, %v1232
    %v1244 = vsel %vm1242, %v1243, %v1232
    %v1245 = vshrl.u32 %v1244, 4
    %v1246 = vand.u32 %v1244, 15
    %v1247 = vsub.s32 0, %v1246
    %v1248 = vsel %vm1242, %v1247, %v1246
    %vm1249 = vcmp.lt.s32.totalorder %v1233, 0
    %v1250 = vsub.s32 0, %v1233
    %v1251 = vsel %vm1249, %v1250, %v1233
    %v1252 = vshrl.u32 %v1251, 4
    %v1253 = vand.u32 %v1251, 15
    %v1254 = vsub.s32 0, %v1253
    %v1255 = vsel %vm1249, %v1254, %v1253
    %vm1256 = vcmp.lt.s32.totalorder %v1234, 0
    %v1257 = vsub.s32 0, %v1234
    %v1258 = vsel %vm1256, %v1257, %v1234
    %v1259 = vshrl.u32 %v1258, 4
    %v1260 = vand.u32 %v1258, 15
    %v1261 = vsub.s32 0, %v1260
    %v1262 = vsel %vm1256, %v1261, %v1260
    %vm1263 = vcmp.ne.s32.totalorder %v1241, 0
    %vm1264 = vcmp.ne.s32.totalorder %v1248, 0
    %vm1265 = vcmp.ne.s32.totalorder %v1255, 0
    %vm1266 = vcmp.ne.s32.totalorder %v1262, 0
    %vm1267 = vcmp.lt.s32.totalorder %v1241, 0
    %vm1268 = vcmp.lt.s32.totalorder %v1248, 0
    %vm1269 = vcmp.lt.s32.totalorder %v1255, 0
    %vm1270 = vcmp.lt.s32.totalorder %v1262, 0
    %vm1271 = vmand %vm1267, %vm1263
    %vm1272 = vmand %vm1268, %vm1264
    %vm1273 = vmand %vm1269, %vm1265
    %vm1274 = vmand %vm1270, %vm1266
    %v1275 = vadd.s32 %v1241, 16
    %v1276 = vadd.s32 %v1248, 16
    %v1277 = vadd.s32 %v1255, 16
    %v1278 = vadd.s32 %v1262, 16
    %v1279 = vsel %vm1271, %v1275, %v1241
    %v1280 = vsel %vm1272, %v1276, %v1248
    %v1281 = vsel %vm1273, %v1277, %v1255
    %v1282 = vsel %vm1274, %v1278, %v1262
    %vm1283 = vcmp.gt.s32.totalorder %v1279, 0
    %vm1284 = vcmp.gt.s32.totalorder %v1280, 0
    %vm1285 = vcmp.gt.s32.totalorder %v1281, 0
    %vm1286 = vcmp.gt.s32.totalorder %v1282, 0
    %v1287 = vrot.slane %v1226, 7
    %v1288 = vrot.slane %v1227, 7
    %v1289 = vrot.slane %v1228, 7
    %v1290 = vrot.slane %v1229, 7
    %vm1291 = vcmp.lt.s32.totalorder %v1231, 1
    %v1292 = vsel %vm1291, %v1289, %v1290
    %v1293 = vsel %vm1291, %v1288, %v1289
    %v1294 = vsel %vm1291, %v1287, %v1288
    %v1295 = vsel %vm1291, %v1290, %v1287
    %v1296 = vsel %vm1283, 1, 0
    %v1297 = vsel %vm1284, 1, 0
    %v1298 = vsel %vm1285, 1, 0
    %v1299 = vsel %vm1286, 1, 0
    %vm1300 = vcmp.eq.s32.totalorder %v1296, 1
    %vm1301 = vcmp.eq.s32.totalorder %v1297, 1
    %vm1302 = vcmp.eq.s32.totalorder %v1298, 1
    %vm1303 = vcmp.eq.s32.totalorder %v1299, 1
    %v1304 = vsel %vm1300, %v1295, 0.0
    %v1305 = vsel %vm1301, %v1294, 0.0
    %v1306 = vsel %vm1302, %v1293, 0.0
    %v1307 = vsel %vm1303, %v1292, 0.0
    %vm1308 = vcmp.lt.s32.totalorder %v1279, 15
    %vm1309 = vcmp.lt.s32.totalorder %v1280, 15
    %vm1310 = vcmp.lt.s32.totalorder %v1281, 15
    %vm1311 = vcmp.lt.s32.totalorder %v1282, 15
    %v1312 = vrot.slane %v1226, 1
    %v1313 = vrot.slane %v1227, 1
    %v1314 = vrot.slane %v1228, 1
    %v1315 = vrot.slane %v1229, 1
    %vm1316 = vcmp.lt.s32.totalorder %v1231, 7
    %v1317 = vsel %vm1316, %v1314, %v1315
    %v1318 = vsel %vm1316, %v1313, %v1314
    %v1319 = vsel %vm1316, %v1312, %v1313
    %v1320 = vsel %vm1316, %v1315, %v1312
    %v1321 = vsel %vm1308, 1, 0
    %v1322 = vsel %vm1309, 1, 0
    %v1323 = vsel %vm1310, 1, 0
    %v1324 = vsel %vm1311, 1, 0
    %vm1325 = vcmp.eq.s32.totalorder %v1321, 1
    %vm1326 = vcmp.eq.s32.totalorder %v1322, 1
    %vm1327 = vcmp.eq.s32.totalorder %v1323, 1
    %vm1328 = vcmp.eq.s32.totalorder %v1324, 1
    %v1329 = vsel %vm1325, %v1319, 0.0
    %v1330 = vsel %vm1326, %v1318, 0.0
    %v1331 = vsel %vm1327, %v1317, 0.0
    %v1332 = vsel %vm1328, %v1320, 0.0
    %v1333 = vld [vmem:[#allocation7] sm:$0xff]
    %v1334 = vld [vmem:[#allocation7 + $0x8] sm:$0xff]
    %v1335 = vld [vmem:[#allocation7 + $0x10] sm:$0xff]
    %v1336 = vld [vmem:[#allocation7 + $0x18] sm:$0xff]
    %v1337 = vld [vmem:[#allocation7 + $0x20] sm:$0xff]
    %v1338 = vld [vmem:[#allocation7 + $0x28] sm:$0xff]
    %v1339 = vld [vmem:[#allocation7 + $0x30] sm:$0xff]
    %v1340 = vld [vmem:[#allocation7 + $0x38] sm:$0xff]
    %v1341 = vld [vmem:[#allocation7 + $0x40] sm:$0xff]
    %v1342 = vld [vmem:[#allocation7 + $0x48] sm:$0xff]
    %v1343 = vld [vmem:[#allocation7 + $0x50] sm:$0xff]
    %v1344 = vld [vmem:[#allocation7 + $0x58] sm:$0xff]
    %v1345 = vld [vmem:[#allocation7 + $0x60] sm:$0xff]
    %v1346 = vld [vmem:[#allocation7 + $0x68] sm:$0xff]
    %v1347 = vld [vmem:[#allocation7 + $0x70] sm:$0xff]
    %v1348 = vld [vmem:[#allocation7 + $0x78] sm:$0xff]
    %s1349 = scalar_lea.vmem [#allocation7], 128
    %v1350 = vld [vmem:[%s1349] sm:$0xff]
    %v1351 = vld [vmem:[%s1349 + $0x8] sm:$0xff]
    %v1352 = vld [vmem:[%s1349 + $0x10] sm:$0xff]
    %v1353 = vld [vmem:[%s1349 + $0x18] sm:$0xff]
    %v1354 = vld [vmem:[%s1349 + $0x20] sm:$0xff]
    %v1355 = vld [vmem:[%s1349 + $0x28] sm:$0xff]
    %v1356 = vld [vmem:[%s1349 + $0x30] sm:$0xff]
    %v1357 = vld [vmem:[%s1349 + $0x38] sm:$0xff]
    %v1358 = vld [vmem:[%s1349 + $0x40] sm:$0xff]
    %v1359 = vld [vmem:[%s1349 + $0x48] sm:$0xff]
    %v1360 = vld [vmem:[%s1349 + $0x50] sm:$0xff]
    %v1361 = vld [vmem:[%s1349 + $0x58] sm:$0xff]
    %v1362 = vld [vmem:[%s1349 + $0x60] sm:$0xff]
    %v1363 = vld [vmem:[%s1349 + $0x68] sm:$0xff]
    %v1364 = vld [vmem:[%s1349 + $0x70] sm:$0xff]
    %v1365 = vld [vmem:[%s1349 + $0x78] sm:$0xff]
    %1366 = vmatprep.subr.mxu0 0.0
    %v1367 = vand.u32 %v1365, 4294901760
    %1368 = vmatpush1.msra.mxu0 %v1367
    %1369 = vmatprep.subr.mxu0 0.0
    %v1370 = vand.u32 %v1364, 4294901760
    %1371 = vmatpush1.msra.mxu0 %v1370
    %1372 = vmatprep.subr.mxu0 0.0
    %v1373 = vand.u32 %v1363, 4294901760
    %1374 = vmatpush1.msra.mxu0 %v1373
    %1375 = vmatprep.subr.mxu0 0.0
    %v1376 = vand.u32 %v1362, 4294901760
    %1377 = vmatpush1.msra.mxu0 %v1376
    %1378 = vmatprep.subr.mxu0 0.0
    %v1379 = vand.u32 %v1361, 4294901760
    %1380 = vmatpush1.msra.mxu0 %v1379
    %1381 = vmatprep.subr.mxu0 0.0
    %v1382 = vand.u32 %v1360, 4294901760
    %1383 = vmatpush1.msra.mxu0 %v1382
    %1384 = vmatprep.subr.mxu0 0.0
    %v1385 = vand.u32 %v1359, 4294901760
    %1386 = vmatpush1.msra.mxu0 %v1385
    %1387 = vmatprep.subr.mxu0 0.0
    %v1388 = vand.u32 %v1358, 4294901760
    %1389 = vmatpush1.msra.mxu0 %v1388
    %1390 = vmatprep.subr.mxu0 0.0
    %v1391 = vand.u32 %v1357, 4294901760
    %1392 = vmatpush1.msra.mxu0 %v1391
    %1393 = vmatprep.subr.mxu0 0.0
    %v1394 = vand.u32 %v1356, 4294901760
    %1395 = vmatpush1.msra.mxu0 %v1394
    %1396 = vmatprep.subr.mxu0 0.0
    %v1397 = vand.u32 %v1355, 4294901760
    %1398 = vmatpush1.msra.mxu0 %v1397
    %1399 = vmatprep.subr.mxu0 0.0
    %v1400 = vand.u32 %v1354, 4294901760
    %1401 = vmatpush1.msra.mxu0 %v1400
    %1402 = vmatprep.subr.mxu0 0.0
    %v1403 = vand.u32 %v1353, 4294901760
    %1404 = vmatpush1.msra.mxu0 %v1403
    %1405 = vmatprep.subr.mxu0 0.0
    %v1406 = vand.u32 %v1352, 4294901760
    %1407 = vmatpush1.msra.mxu0 %v1406
    %1408 = vmatprep.subr.mxu0 0.0
    %v1409 = vand.u32 %v1351, 4294901760
    %1410 = vmatpush1.msra.mxu0 %v1409
    %1411 = vmatprep.subr.mxu0 0.0
    %v1412 = vand.u32 %v1350, 4294901760
    %1413 = vmatpush1.msra.mxu0 %v1412
    %1414 = vmatprep.subr.mxu0 0.0
    %1415 = vmatpush2.msra.mxu0 0.0
    %1416 = vmatprep.subr.mxu0 0.0
    %1417 = vmatpush2.msra.mxu0 0.0
    %1418 = vmatprep.subr.mxu0 0.0
    %1419 = vmatpush2.msra.mxu0 0.0
    %1420 = vmatprep.subr.mxu0 0.0
    %1421 = vmatpush2.msra.mxu0 0.0
    %1422 = vmatprep.subr.mxu0 0.0
    %1423 = vmatpush2.msra.mxu0 0.0
    %1424 = vmatprep.subr.mxu0 0.0
    %1425 = vmatpush2.msra.mxu0 0.0
    %1426 = vmatprep.subr.mxu0 0.0
    %1427 = vmatpush2.msra.mxu0 0.0
    %1428 = vmatprep.subr.mxu0 0.0
    %1429 = vmatpush2.msra.mxu0 0.0
    %1430 = vmatprep.subr.mxu0 0.0
    %1431 = vmatpush2.msra.mxu0 0.0
    %1432 = vmatprep.subr.mxu0 0.0
    %1433 = vmatpush2.msra.mxu0 0.0
    %1434 = vmatprep.subr.mxu0 0.0
    %1435 = vmatpush2.msra.mxu0 0.0
    %1436 = vmatprep.subr.mxu0 0.0
    %1437 = vmatpush2.msra.mxu0 0.0
    %1438 = vmatprep.subr.mxu0 0.0
    %1439 = vmatpush2.msra.mxu0 0.0
    %1440 = vmatprep.subr.mxu0 0.0
    %1441 = vmatpush2.msra.mxu0 0.0
    %1442 = vmatprep.subr.mxu0 0.0
    %1443 = vmatpush2.msra.mxu0 0.0
    %1444 = vmatprep.subr.mxu0 0.0
    %1445 = vmatpush2.msra.mxu0 0.0
    %1446 = vmatprep.mubr.f32.mxu0 0.0
    %v1447 = vand.u32 %v1226, 4294901760
    %v1448 = vsub.f32 %v1226, %v1447
    %v1449 = vand.u32 %v1448, 4294901760
    %v1450 = vsub.f32 %v1448, %v1449
    %v1451 = vand.u32 %v1450, 4294901760
    %1452 = vmatmul.mubr.f32.gmra.mxu0 %v1451
    %v1453 = vpop.f32.mrf.mxu0
    %v1454 = vadd.f32 0.0, %v1453
    %v1455 = vpop.f32.mrf.mxu0
    %1456 = vmatprep.mubr.f32.mxu0 0.0
    %v1457 = vand.u32 %v1227, 4294901760
    %v1458 = vsub.f32 %v1227, %v1457
    %v1459 = vand.u32 %v1458, 4294901760
    %v1460 = vsub.f32 %v1458, %v1459
    %v1461 = vand.u32 %v1460, 4294901760
    %1462 = vmatmul.mubr.f32.gmra.mxu0 %v1461
    %v1463 = vpop.f32.mrf.mxu0
    %v1464 = vadd.f32 0.0, %v1463
    %v1465 = vpop.f32.mrf.mxu0
    %1466 = vmatprep.mubr.f32.mxu0 0.0
    %v1467 = vand.u32 %v1228, 4294901760
    %v1468 = vsub.f32 %v1228, %v1467
    %v1469 = vand.u32 %v1468, 4294901760
    %v1470 = vsub.f32 %v1468, %v1469
    %v1471 = vand.u32 %v1470, 4294901760
    %1472 = vmatmul.mubr.f32.gmra.mxu0 %v1471
    %v1473 = vpop.f32.mrf.mxu0
    %v1474 = vadd.f32 0.0, %v1473
    %v1475 = vpop.f32.mrf.mxu0
    %1476 = vmatprep.mubr.f32.mxu0 0.0
    %v1477 = vand.u32 %v1229, 4294901760
    %v1478 = vsub.f32 %v1229, %v1477
    %v1479 = vand.u32 %v1478, 4294901760
    %v1480 = vsub.f32 %v1478, %v1479
    %v1481 = vand.u32 %v1480, 4294901760
    %1482 = vmatmul.mubr.f32.gmra.mxu0 %v1481
    %v1483 = vpop.f32.mrf.mxu0
    %v1484 = vadd.f32 0.0, %v1483
    %v1485 = vpop.f32.mrf.mxu0
    %1486 = vdwg.mxu0
    %1487 = vmatprep.subr.mxu0 0.0
    %v1488 = vand.u32 %v1365, 4294901760
    %v1489 = vsub.f32 %v1365, %v1488
    %v1490 = vand.u32 %v1489, 4294901760
    %v1491 = vsub.f32 %v1489, %v1490
    %v1492 = vand.u32 %v1491, 4294901760
    %1493 = vmatpush1.msra.mxu0 %v1492
    %1494 = vmatprep.subr.mxu0 0.0
    %v1495 = vand.u32 %v1364, 4294901760
    %v1496 = vsub.f32 %v1364, %v1495
    %v1497 = vand.u32 %v1496, 4294901760
    %v1498 = vsub.f32 %v1496, %v1497
    %v1499 = vand.u32 %v1498, 4294901760
    %1500 = vmatpush1.msra.mxu0 %v1499
    %1501 = vmatprep.subr.mxu0 0.0
    %v1502 = vand.u32 %v1363, 4294901760
    %v1503 = vsub.f32 %v1363, %v1502
    %v1504 = vand.u32 %v1503, 4294901760
    %v1505 = vsub.f32 %v1503, %v1504
    %v1506 = vand.u32 %v1505, 4294901760
    %1507 = vmatpush1.msra.mxu0 %v1506
    %1508 = vmatprep.subr.mxu0 0.0
    %v1509 = vand.u32 %v1362, 4294901760
    %v1510 = vsub.f32 %v1362, %v1509
    %v1511 = vand.u32 %v1510, 4294901760
    %v1512 = vsub.f32 %v1510, %v1511
    %v1513 = vand.u32 %v1512, 4294901760
    %1514 = vmatpush1.msra.mxu0 %v1513
    %1515 = vmatprep.subr.mxu0 0.0
    %v1516 = vand.u32 %v1361, 4294901760
    %v1517 = vsub.f32 %v1361, %v1516
    %v1518 = vand.u32 %v1517, 4294901760
    %v1519 = vsub.f32 %v1517, %v1518
    %v1520 = vand.u32 %v1519, 4294901760
    %1521 = vmatpush1.msra.mxu0 %v1520
    %1522 = vmatprep.subr.mxu0 0.0
    %v1523 = vand.u32 %v1360, 4294901760
    %v1524 = vsub.f32 %v1360, %v1523
    %v1525 = vand.u32 %v1524, 4294901760
    %v1526 = vsub.f32 %v1524, %v1525
    %v1527 = vand.u32 %v1526, 4294901760
    %1528 = vmatpush1.msra.mxu0 %v1527
    %1529 = vmatprep.subr.mxu0 0.0
    %v1530 = vand.u32 %v1359, 4294901760
    %v1531 = vsub.f32 %v1359, %v1530
    %v1532 = vand.u32 %v1531, 4294901760
    %v1533 = vsub.f32 %v1531, %v1532
    %v1534 = vand.u32 %v1533, 4294901760
    %1535 = vmatpush1.msra.mxu0 %v1534
    %1536 = vmatprep.subr.mxu0 0.0
    %v1537 = vand.u32 %v1358, 4294901760
    %v1538 = vsub.f32 %v1358, %v1537
    %v1539 = vand.u32 %v1538, 4294901760
    %v1540 = vsub.f32 %v1538, %v1539
    %v1541 = vand.u32 %v1540, 4294901760
    %1542 = vmatpush1.msra.mxu0 %v1541
    %1543 = vmatprep.subr.mxu0 0.0
    %v1544 = vand.u32 %v1357, 4294901760
    %v1545 = vsub.f32 %v1357, %v1544
    %v1546 = vand.u32 %v1545, 4294901760
    %v1547 = vsub.f32 %v1545, %v1546
    %v1548 = vand.u32 %v1547, 4294901760
    %1549 = vmatpush1.msra.mxu0 %v1548
    %1550 = vmatprep.subr.mxu0 0.0
    %v1551 = vand.u32 %v1356, 4294901760
    %v1552 = vsub.f32 %v1356, %v1551
    %v1553 = vand.u32 %v1552, 4294901760
    %v1554 = vsub.f32 %v1552, %v1553
    %v1555 = vand.u32 %v1554, 4294901760
    %1556 = vmatpush1.msra.mxu0 %v1555
    %1557 = vmatprep.subr.mxu0 0.0
    %v1558 = vand.u32 %v1355, 4294901760
    %v1559 = vsub.f32 %v1355, %v1558
    %v1560 = vand.u32 %v1559, 4294901760
    %v1561 = vsub.f32 %v1559, %v1560
    %v1562 = vand.u32 %v1561, 4294901760
    %1563 = vmatpush1.msra.mxu0 %v1562
    %1564 = vmatprep.subr.mxu0 0.0
    %v1565 = vand.u32 %v1354, 4294901760
    %v1566 = vsub.f32 %v1354, %v1565
    %v1567 = vand.u32 %v1566, 4294901760
    %v1568 = vsub.f32 %v1566, %v1567
    %v1569 = vand.u32 %v1568, 4294901760
    %1570 = vmatpush1.msra.mxu0 %v1569
    %1571 = vmatprep.subr.mxu0 0.0
    %v1572 = vand.u32 %v1353, 4294901760
    %v1573 = vsub.f32 %v1353, %v1572
    %v1574 = vand.u32 %v1573, 4294901760
    %v1575 = vsub.f32 %v1573, %v1574
    %v1576 = vand.u32 %v1575, 4294901760
    %1577 = vmatpush1.msra.mxu0 %v1576
    %1578 = vmatprep.subr.mxu0 0.0
    %v1579 = vand.u32 %v1352, 4294901760
    %v1580 = vsub.f32 %v1352, %v1579
    %v1581 = vand.u32 %v1580, 4294901760
    %v1582 = vsub.f32 %v1580, %v1581
    %v1583 = vand.u32 %v1582, 4294901760
    %1584 = vmatpush1.msra.mxu0 %v1583
    %1585 = vmatprep.subr.mxu0 0.0
    %v1586 = vand.u32 %v1351, 4294901760
    %v1587 = vsub.f32 %v1351, %v1586
    %v1588 = vand.u32 %v1587, 4294901760
    %v1589 = vsub.f32 %v1587, %v1588
    %v1590 = vand.u32 %v1589, 4294901760
    %1591 = vmatpush1.msra.mxu0 %v1590
    %1592 = vmatprep.subr.mxu0 0.0
    %v1593 = vand.u32 %v1350, 4294901760
    %v1594 = vsub.f32 %v1350, %v1593
    %v1595 = vand.u32 %v1594, 4294901760
    %v1596 = vsub.f32 %v1594, %v1595
    %v1597 = vand.u32 %v1596, 4294901760
    %1598 = vmatpush1.msra.mxu0 %v1597
    %1599 = vmatprep.subr.mxu0 0.0
    %1600 = vmatpush2.msra.mxu0 0.0
    %1601 = vmatprep.subr.mxu0 0.0
    %1602 = vmatpush2.msra.mxu0 0.0
    %1603 = vmatprep.subr.mxu0 0.0
    %1604 = vmatpush2.msra.mxu0 0.0
    %1605 = vmatprep.subr.mxu0 0.0
    %1606 = vmatpush2.msra.mxu0 0.0
    %1607 = vmatprep.subr.mxu0 0.0
    %1608 = vmatpush2.msra.mxu0 0.0
    %1609 = vmatprep.subr.mxu0 0.0
    %1610 = vmatpush2.msra.mxu0 0.0
    %1611 = vmatprep.subr.mxu0 0.0
    %1612 = vmatpush2.msra.mxu0 0.0
    %1613 = vmatprep.subr.mxu0 0.0
    %1614 = vmatpush2.msra.mxu0 0.0
    %1615 = vmatprep.subr.mxu0 0.0
    %1616 = vmatpush2.msra.mxu0 0.0
    %1617 = vmatprep.subr.mxu0 0.0
    %1618 = vmatpush2.msra.mxu0 0.0
    %1619 = vmatprep.subr.mxu0 0.0
    %1620 = vmatpush2.msra.mxu0 0.0
    %1621 = vmatprep.subr.mxu0 0.0
    %1622 = vmatpush2.msra.mxu0 0.0
    %1623 = vmatprep.subr.mxu0 0.0
    %1624 = vmatpush2.msra.mxu0 0.0
    %1625 = vmatprep.subr.mxu0 0.0
    %1626 = vmatpush2.msra.mxu0 0.0
    %1627 = vmatprep.subr.mxu0 0.0
    %1628 = vmatpush2.msra.mxu0 0.0
    %1629 = vmatprep.subr.mxu0 0.0
    %1630 = vmatpush2.msra.mxu0 0.0
    %1631 = vmatprep.mubr.f32.mxu0 0.0
    %v1632 = vand.u32 %v1226, 4294901760
    %1633 = vmatmul.mubr.f32.gmra.mxu0 %v1632
    %v1634 = vpop.f32.mrf.mxu0
    %v1635 = vadd.f32 %v1454, %v1634
    %v1636 = vpop.f32.mrf.mxu0
    %1637 = vmatprep.mubr.f32.mxu0 0.0
    %v1638 = vand.u32 %v1227, 4294901760
    %1639 = vmatmul.mubr.f32.gmra.mxu0 %v1638
    %v1640 = vpop.f32.mrf.mxu0
    %v1641 = vadd.f32 %v1464, %v1640
    %v1642 = vpop.f32.mrf.mxu0
    %1643 = vmatprep.mubr.f32.mxu0 0.0
    %v1644 = vand.u32 %v1228, 4294901760
    %1645 = vmatmul.mubr.f32.gmra.mxu0 %v1644
    %v1646 = vpop.f32.mrf.mxu0
    %v1647 = vadd.f32 %v1474, %v1646
    %v1648 = vpop.f32.mrf.mxu0
    %1649 = vmatprep.mubr.f32.mxu0 0.0
    %v1650 = vand.u32 %v1229, 4294901760
    %1651 = vmatmul.mubr.f32.gmra.mxu0 %v1650
    %v1652 = vpop.f32.mrf.mxu0
    %v1653 = vadd.f32 %v1484, %v1652
    %v1654 = vpop.f32.mrf.mxu0
    %1655 = vdwg.mxu0
    %1656 = vmatprep.subr.mxu0 0.0
    %v1657 = vand.u32 %v1365, 4294901760
    %v1658 = vsub.f32 %v1365, %v1657
    %1659 = vmatpush1.msra.mxu0 %v1658
    %1660 = vmatprep.subr.mxu0 0.0
    %v1661 = vand.u32 %v1364, 4294901760
    %v1662 = vsub.f32 %v1364, %v1661
    %1663 = vmatpush1.msra.mxu0 %v1662
    %1664 = vmatprep.subr.mxu0 0.0
    %v1665 = vand.u32 %v1363, 4294901760
    %v1666 = vsub.f32 %v1363, %v1665
    %1667 = vmatpush1.msra.mxu0 %v1666
    %1668 = vmatprep.subr.mxu0 0.0
    %v1669 = vand.u32 %v1362, 4294901760
    %v1670 = vsub.f32 %v1362, %v1669
    %1671 = vmatpush1.msra.mxu0 %v1670
    %1672 = vmatprep.subr.mxu0 0.0
    %v1673 = vand.u32 %v1361, 4294901760
    %v1674 = vsub.f32 %v1361, %v1673
    %1675 = vmatpush1.msra.mxu0 %v1674
    %1676 = vmatprep.subr.mxu0 0.0
    %v1677 = vand.u32 %v1360, 4294901760
    %v1678 = vsub.f32 %v1360, %v1677
    %1679 = vmatpush1.msra.mxu0 %v1678
    %1680 = vmatprep.subr.mxu0 0.0
    %v1681 = vand.u32 %v1359, 4294901760
    %v1682 = vsub.f32 %v1359, %v1681
    %1683 = vmatpush1.msra.mxu0 %v1682
    %1684 = vmatprep.subr.mxu0 0.0
    %v1685 = vand.u32 %v1358, 4294901760
    %v1686 = vsub.f32 %v1358, %v1685
    %1687 = vmatpush1.msra.mxu0 %v1686
    %1688 = vmatprep.subr.mxu0 0.0
    %v1689 = vand.u32 %v1357, 4294901760
    %v1690 = vsub.f32 %v1357, %v1689
    %1691 = vmatpush1.msra.mxu0 %v1690
    %1692 = vmatprep.subr.mxu0 0.0
    %v1693 = vand.u32 %v1356, 4294901760
    %v1694 = vsub.f32 %v1356, %v1693
    %1695 = vmatpush1.msra.mxu0 %v1694
    %1696 = vmatprep.subr.mxu0 0.0
    %v1697 = vand.u32 %v1355, 4294901760
    %v1698 = vsub.f32 %v1355, %v1697
    %1699 = vmatpush1.msra.mxu0 %v1698
    %1700 = vmatprep.subr.mxu0 0.0
    %v1701 = vand.u32 %v1354, 4294901760
    %v1702 = vsub.f32 %v1354, %v1701
    %1703 = vmatpush1.msra.mxu0 %v1702
    %1704 = vmatprep.subr.mxu0 0.0
    %v1705 = vand.u32 %v1353, 4294901760
    %v1706 = vsub.f32 %v1353, %v1705
    %1707 = vmatpush1.msra.mxu0 %v1706
    %1708 = vmatprep.subr.mxu0 0.0
    %v1709 = vand.u32 %v1352, 4294901760
    %v1710 = vsub.f32 %v1352, %v1709
    %1711 = vmatpush1.msra.mxu0 %v1710
    %1712 = vmatprep.subr.mxu0 0.0
    %v1713 = vand.u32 %v1351, 4294901760
    %v1714 = vsub.f32 %v1351, %v1713
    %1715 = vmatpush1.msra.mxu0 %v1714
    %1716 = vmatprep.subr.mxu0 0.0
    %v1717 = vand.u32 %v1350, 4294901760
    %v1718 = vsub.f32 %v1350, %v1717
    %1719 = vmatpush1.msra.mxu0 %v1718
    %1720 = vmatprep.subr.mxu0 0.0
    %1721 = vmatpush2.msra.mxu0 0.0
    %1722 = vmatprep.subr.mxu0 0.0
    %1723 = vmatpush2.msra.mxu0 0.0
    %1724 = vmatprep.subr.mxu0 0.0
    %1725 = vmatpush2.msra.mxu0 0.0
    %1726 = vmatprep.subr.mxu0 0.0
    %1727 = vmatpush2.msra.mxu0 0.0
    %1728 = vmatprep.subr.mxu0 0.0
    %1729 = vmatpush2.msra.mxu0 0.0
    %1730 = vmatprep.subr.mxu0 0.0
    %1731 = vmatpush2.msra.mxu0 0.0
    %1732 = vmatprep.subr.mxu0 0.0
    %1733 = vmatpush2.msra.mxu0 0.0
    %1734 = vmatprep.subr.mxu0 0.0
    %1735 = vmatpush2.msra.mxu0 0.0
    %1736 = vmatprep.subr.mxu0 0.0
    %1737 = vmatpush2.msra.mxu0 0.0
    %1738 = vmatprep.subr.mxu0 0.0
    %1739 = vmatpush2.msra.mxu0 0.0
    %1740 = vmatprep.subr.mxu0 0.0
    %1741 = vmatpush2.msra.mxu0 0.0
    %1742 = vmatprep.subr.mxu0 0.0
    %1743 = vmatpush2.msra.mxu0 0.0
    %1744 = vmatprep.subr.mxu0 0.0
    %1745 = vmatpush2.msra.mxu0 0.0
    %1746 = vmatprep.subr.mxu0 0.0
    %1747 = vmatpush2.msra.mxu0 0.0
    %1748 = vmatprep.subr.mxu0 0.0
    %1749 = vmatpush2.msra.mxu0 0.0
    %1750 = vmatprep.subr.mxu0 0.0
    %1751 = vmatpush2.msra.mxu0 0.0
    %1752 = vmatprep.mubr.f32.mxu0 0.0
    %v1753 = vand.u32 %v1226, 4294901760
    %v1754 = vsub.f32 %v1226, %v1753
    %1755 = vmatmul.mubr.f32.gmra.mxu0 %v1754
    %v1756 = vpop.f32.mrf.mxu0
    %v1757 = vadd.f32 %v1635, %v1756
    %v1758 = vpop.f32.mrf.mxu0
    %1759 = vmatprep.mubr.f32.mxu0 0.0
    %v1760 = vand.u32 %v1227, 4294901760
    %v1761 = vsub.f32 %v1227, %v1760
    %1762 = vmatmul.mubr.f32.gmra.mxu0 %v1761
    %v1763 = vpop.f32.mrf.mxu0
    %v1764 = vadd.f32 %v1641, %v1763
    %v1765 = vpop.f32.mrf.mxu0
    %1766 = vmatprep.mubr.f32.mxu0 0.0
    %v1767 = vand.u32 %v1228, 4294901760
    %v1768 = vsub.f32 %v1228, %v1767
    %1769 = vmatmul.mubr.f32.gmra.mxu0 %v1768
    %v1770 = vpop.f32.mrf.mxu0
    %v1771 = vadd.f32 %v1647, %v1770
    %v1772 = vpop.f32.mrf.mxu0
    %1773 = vmatprep.mubr.f32.mxu0 0.0
    %v1774 = vand.u32 %v1229, 4294901760
    %v1775 = vsub.f32 %v1229, %v1774
    %1776 = vmatmul.mubr.f32.gmra.mxu0 %v1775
    %v1777 = vpop.f32.mrf.mxu0
    %v1778 = vadd.f32 %v1653, %v1777
    %v1779 = vpop.f32.mrf.mxu0
    %1780 = vdwg.mxu0
    %1781 = vmatprep.subr.mxu0 0.0
    %v1782 = vand.u32 %v1365, 4294901760
    %1783 = vmatpush1.msra.mxu0 %v1782
    %1784 = vmatprep.subr.mxu0 0.0
    %v1785 = vand.u32 %v1364, 4294901760
    %1786 = vmatpush1.msra.mxu0 %v1785
    %1787 = vmatprep.subr.mxu0 0.0
    %v1788 = vand.u32 %v1363, 4294901760
    %1789 = vmatpush1.msra.mxu0 %v1788
    %1790 = vmatprep.subr.mxu0 0.0
    %v1791 = vand.u32 %v1362, 4294901760
    %1792 = vmatpush1.msra.mxu0 %v1791
    %1793 = vmatprep.subr.mxu0 0.0
    %v1794 = vand.u32 %v1361, 4294901760
    %1795 = vmatpush1.msra.mxu0 %v1794
    %1796 = vmatprep.subr.mxu0 0.0
    %v1797 = vand.u32 %v1360, 4294901760
    %1798 = vmatpush1.msra.mxu0 %v1797
    %1799 = vmatprep.subr.mxu0 0.0
    %v1800 = vand.u32 %v1359, 4294901760
    %1801 = vmatpush1.msra.mxu0 %v1800
    %1802 = vmatprep.subr.mxu0 0.0
    %v1803 = vand.u32 %v1358, 4294901760
    %1804 = vmatpush1.msra.mxu0 %v1803
    %1805 = vmatprep.subr.mxu0 0.0
    %v1806 = vand.u32 %v1357, 4294901760
    %1807 = vmatpush1.msra.mxu0 %v1806
    %1808 = vmatprep.subr.mxu0 0.0
    %v1809 = vand.u32 %v1356, 4294901760
    %1810 = vmatpush1.msra.mxu0 %v1809
    %1811 = vmatprep.subr.mxu0 0.0
    %v1812 = vand.u32 %v1355, 4294901760
    %1813 = vmatpush1.msra.mxu0 %v1812
    %1814 = vmatprep.subr.mxu0 0.0
    %v1815 = vand.u32 %v1354, 4294901760
    %1816 = vmatpush1.msra.mxu0 %v1815
    %1817 = vmatprep.subr.mxu0 0.0
    %v1818 = vand.u32 %v1353, 4294901760
    %1819 = vmatpush1.msra.mxu0 %v1818
    %1820 = vmatprep.subr.mxu0 0.0
    %v1821 = vand.u32 %v1352, 4294901760
    %1822 = vmatpush1.msra.mxu0 %v1821
    %1823 = vmatprep.subr.mxu0 0.0
    %v1824 = vand.u32 %v1351, 4294901760
    %1825 = vmatpush1.msra.mxu0 %v1824
    %1826 = vmatprep.subr.mxu0 0.0
    %v1827 = vand.u32 %v1350, 4294901760
    %1828 = vmatpush1.msra.mxu0 %v1827
    %1829 = vmatprep.subr.mxu0 0.0
    %1830 = vmatpush2.msra.mxu0 0.0
    %1831 = vmatprep.subr.mxu0 0.0
    %1832 = vmatpush2.msra.mxu0 0.0
    %1833 = vmatprep.subr.mxu0 0.0
    %1834 = vmatpush2.msra.mxu0 0.0
    %1835 = vmatprep.subr.mxu0 0.0
    %1836 = vmatpush2.msra.mxu0 0.0
    %1837 = vmatprep.subr.mxu0 0.0
    %1838 = vmatpush2.msra.mxu0 0.0
    %1839 = vmatprep.subr.mxu0 0.0
    %1840 = vmatpush2.msra.mxu0 0.0
    %1841 = vmatprep.subr.mxu0 0.0
    %1842 = vmatpush2.msra.mxu0 0.0
    %1843 = vmatprep.subr.mxu0 0.0
    %1844 = vmatpush2.msra.mxu0 0.0
    %1845 = vmatprep.subr.mxu0 0.0
    %1846 = vmatpush2.msra.mxu0 0.0
    %1847 = vmatprep.subr.mxu0 0.0
    %1848 = vmatpush2.msra.mxu0 0.0
    %1849 = vmatprep.subr.mxu0 0.0
    %1850 = vmatpush2.msra.mxu0 0.0
    %1851 = vmatprep.subr.mxu0 0.0
    %1852 = vmatpush2.msra.mxu0 0.0
    %1853 = vmatprep.subr.mxu0 0.0
    %1854 = vmatpush2.msra.mxu0 0.0
    %1855 = vmatprep.subr.mxu0 0.0
    %1856 = vmatpush2.msra.mxu0 0.0
    %1857 = vmatprep.subr.mxu0 0.0
    %1858 = vmatpush2.msra.mxu0 0.0
    %1859 = vmatprep.subr.mxu0 0.0
    %1860 = vmatpush2.msra.mxu0 0.0
    %1861 = vmatprep.mubr.f32.mxu0 0.0
    %v1862 = vand.u32 %v1226, 4294901760
    %v1863 = vsub.f32 %v1226, %v1862
    %v1864 = vand.u32 %v1863, 4294901760
    %1865 = vmatmul.mubr.f32.gmra.mxu0 %v1864
    %v1866 = vpop.f32.mrf.mxu0
    %v1867 = vadd.f32 %v1757, %v1866
    %v1868 = vpop.f32.mrf.mxu0
    %1869 = vmatprep.mubr.f32.mxu0 0.0
    %v1870 = vand.u32 %v1227, 4294901760
    %v1871 = vsub.f32 %v1227, %v1870
    %v1872 = vand.u32 %v1871, 4294901760
    %1873 = vmatmul.mubr.f32.gmra.mxu0 %v1872
    %v1874 = vpop.f32.mrf.mxu0
    %v1875 = vadd.f32 %v1764, %v1874
    %v1876 = vpop.f32.mrf.mxu0
    %1877 = vmatprep.mubr.f32.mxu0 0.0
    %v1878 = vand.u32 %v1228, 4294901760
    %v1879 = vsub.f32 %v1228, %v1878
    %v1880 = vand.u32 %v1879, 4294901760
    %1881 = vmatmul.mubr.f32.gmra.mxu0 %v1880
    %v1882 = vpop.f32.mrf.mxu0
    %v1883 = vadd.f32 %v1771, %v1882
    %v1884 = vpop.f32.mrf.mxu0
    %1885 = vmatprep.mubr.f32.mxu0 0.0
    %v1886 = vand.u32 %v1229, 4294901760
    %v1887 = vsub.f32 %v1229, %v1886
    %v1888 = vand.u32 %v1887, 4294901760
    %1889 = vmatmul.mubr.f32.gmra.mxu0 %v1888
    %v1890 = vpop.f32.mrf.mxu0
    %v1891 = vadd.f32 %v1778, %v1890
    %v1892 = vpop.f32.mrf.mxu0
    %1893 = vdwg.mxu0
    %1894 = vmatprep.subr.mxu0 0.0
    %v1895 = vand.u32 %v1365, 4294901760
    %v1896 = vsub.f32 %v1365, %v1895
    %v1897 = vand.u32 %v1896, 4294901760
    %1898 = vmatpush1.msra.mxu0 %v1897
    %1899 = vmatprep.subr.mxu0 0.0
    %v1900 = vand.u32 %v1364, 4294901760
    %v1901 = vsub.f32 %v1364, %v1900
    %v1902 = vand.u32 %v1901, 4294901760
    %1903 = vmatpush1.msra.mxu0 %v1902
    %1904 = vmatprep.subr.mxu0 0.0
    %v1905 = vand.u32 %v1363, 4294901760
    %v1906 = vsub.f32 %v1363, %v1905
    %v1907 = vand.u32 %v1906, 4294901760
    %1908 = vmatpush1.msra.mxu0 %v1907
    %1909 = vmatprep.subr.mxu0 0.0
    %v1910 = vand.u32 %v1362, 4294901760
    %v1911 = vsub.f32 %v1362, %v1910
    %v1912 = vand.u32 %v1911, 4294901760
    %1913 = vmatpush1.msra.mxu0 %v1912
    %1914 = vmatprep.subr.mxu0 0.0
    %v1915 = vand.u32 %v1361, 4294901760
    %v1916 = vsub.f32 %v1361, %v1915
    %v1917 = vand.u32 %v1916, 4294901760
    %1918 = vmatpush1.msra.mxu0 %v1917
    %1919 = vmatprep.subr.mxu0 0.0
    %v1920 = vand.u32 %v1360, 4294901760
    %v1921 = vsub.f32 %v1360, %v1920
    %v1922 = vand.u32 %v1921, 4294901760
    %1923 = vmatpush1.msra.mxu0 %v1922
    %1924 = vmatprep.subr.mxu0 0.0
    %v1925 = vand.u32 %v1359, 4294901760
    %v1926 = vsub.f32 %v1359, %v1925
    %v1927 = vand.u32 %v1926, 4294901760
    %1928 = vmatpush1.msra.mxu0 %v1927
    %1929 = vmatprep.subr.mxu0 0.0
    %v1930 = vand.u32 %v1358, 4294901760
    %v1931 = vsub.f32 %v1358, %v1930
    %v1932 = vand.u32 %v1931, 4294901760
    %1933 = vmatpush1.msra.mxu0 %v1932
    %1934 = vmatprep.subr.mxu0 0.0
    %v1935 = vand.u32 %v1357, 4294901760
    %v1936 = vsub.f32 %v1357, %v1935
    %v1937 = vand.u32 %v1936, 4294901760
    %1938 = vmatpush1.msra.mxu0 %v1937
    %1939 = vmatprep.subr.mxu0 0.0
    %v1940 = vand.u32 %v1356, 4294901760
    %v1941 = vsub.f32 %v1356, %v1940
    %v1942 = vand.u32 %v1941, 4294901760
    %1943 = vmatpush1.msra.mxu0 %v1942
    %1944 = vmatprep.subr.mxu0 0.0
    %v1945 = vand.u32 %v1355, 4294901760
    %v1946 = vsub.f32 %v1355, %v1945
    %v1947 = vand.u32 %v1946, 4294901760
    %1948 = vmatpush1.msra.mxu0 %v1947
    %1949 = vmatprep.subr.mxu0 0.0
    %v1950 = vand.u32 %v1354, 4294901760
    %v1951 = vsub.f32 %v1354, %v1950
    %v1952 = vand.u32 %v1951, 4294901760
    %1953 = vmatpush1.msra.mxu0 %v1952
    %1954 = vmatprep.subr.mxu0 0.0
    %v1955 = vand.u32 %v1353, 4294901760
    %v1956 = vsub.f32 %v1353, %v1955
    %v1957 = vand.u32 %v1956, 4294901760
    %1958 = vmatpush1.msra.mxu0 %v1957
    %1959 = vmatprep.subr.mxu0 0.0
    %v1960 = vand.u32 %v1352, 4294901760
    %v1961 = vsub.f32 %v1352, %v1960
    %v1962 = vand.u32 %v1961, 4294901760
    %1963 = vmatpush1.msra.mxu0 %v1962
    %1964 = vmatprep.subr.mxu0 0.0
    %v1965 = vand.u32 %v1351, 4294901760
    %v1966 = vsub.f32 %v1351, %v1965
    %v1967 = vand.u32 %v1966, 4294901760
    %1968 = vmatpush1.msra.mxu0 %v1967
    %1969 = vmatprep.subr.mxu0 0.0
    %v1970 = vand.u32 %v1350, 4294901760
    %v1971 = vsub.f32 %v1350, %v1970
    %v1972 = vand.u32 %v1971, 4294901760
    %1973 = vmatpush1.msra.mxu0 %v1972
    %1974 = vmatprep.subr.mxu0 0.0
    %1975 = vmatpush2.msra.mxu0 0.0
    %1976 = vmatprep.subr.mxu0 0.0
    %1977 = vmatpush2.msra.mxu0 0.0
    %1978 = vmatprep.subr.mxu0 0.0
    %1979 = vmatpush2.msra.mxu0 0.0
    %1980 = vmatprep.subr.mxu0 0.0
    %1981 = vmatpush2.msra.mxu0 0.0
    %1982 = vmatprep.subr.mxu0 0.0
    %1983 = vmatpush2.msra.mxu0 0.0
    %1984 = vmatprep.subr.mxu0 0.0
    %1985 = vmatpush2.msra.mxu0 0.0
    %1986 = vmatprep.subr.mxu0 0.0
    %1987 = vmatpush2.msra.mxu0 0.0
    %1988 = vmatprep.subr.mxu0 0.0
    %1989 = vmatpush2.msra.mxu0 0.0
    %1990 = vmatprep.subr.mxu0 0.0
    %1991 = vmatpush2.msra.mxu0 0.0
    %1992 = vmatprep.subr.mxu0 0.0
    %1993 = vmatpush2.msra.mxu0 0.0
    %1994 = vmatprep.subr.mxu0 0.0
    %1995 = vmatpush2.msra.mxu0 0.0
    %1996 = vmatprep.subr.mxu0 0.0
    %1997 = vmatpush2.msra.mxu0 0.0
    %1998 = vmatprep.subr.mxu0 0.0
    %1999 = vmatpush2.msra.mxu0 0.0
    %2000 = vmatprep.subr.mxu0 0.0
    %2001 = vmatpush2.msra.mxu0 0.0
    %2002 = vmatprep.subr.mxu0 0.0
    %2003 = vmatpush2.msra.mxu0 0.0
    %2004 = vmatprep.subr.mxu0 0.0
    %2005 = vmatpush2.msra.mxu0 0.0
    %2006 = vmatprep.mubr.f32.mxu0 0.0
    %v2007 = vand.u32 %v1226, 4294901760
    %2008 = vmatmul.mubr.f32.gmra.mxu0 %v2007
    %v2009 = vpop.f32.mrf.mxu0
    %v2010 = vadd.f32 %v1867, %v2009
    %v2011 = vpop.f32.mrf.mxu0
    %2012 = vmatprep.mubr.f32.mxu0 0.0
    %v2013 = vand.u32 %v1227, 4294901760
    %2014 = vmatmul.mubr.f32.gmra.mxu0 %v2013
    %v2015 = vpop.f32.mrf.mxu0
    %v2016 = vadd.f32 %v1875, %v2015
    %v2017 = vpop.f32.mrf.mxu0
    %2018 = vmatprep.mubr.f32.mxu0 0.0
    %v2019 = vand.u32 %v1228, 4294901760
    %2020 = vmatmul.mubr.f32.gmra.mxu0 %v2019
    %v2021 = vpop.f32.mrf.mxu0
    %v2022 = vadd.f32 %v1883, %v2021
    %v2023 = vpop.f32.mrf.mxu0
    %2024 = vmatprep.mubr.f32.mxu0 0.0
    %v2025 = vand.u32 %v1229, 4294901760
    %2026 = vmatmul.mubr.f32.gmra.mxu0 %v2025
    %v2027 = vpop.f32.mrf.mxu0
    %v2028 = vadd.f32 %v1891, %v2027
    %v2029 = vpop.f32.mrf.mxu0
    %2030 = vdwg.mxu0
    %2031 = vmatprep.subr.mxu0 0.0
    %v2032 = vand.u32 %v1365, 4294901760
    %2033 = vmatpush1.msra.mxu0 %v2032
    %2034 = vmatprep.subr.mxu0 0.0
    %v2035 = vand.u32 %v1364, 4294901760
    %2036 = vmatpush1.msra.mxu0 %v2035
    %2037 = vmatprep.subr.mxu0 0.0
    %v2038 = vand.u32 %v1363, 4294901760
    %2039 = vmatpush1.msra.mxu0 %v2038
    %2040 = vmatprep.subr.mxu0 0.0
    %v2041 = vand.u32 %v1362, 4294901760
    %2042 = vmatpush1.msra.mxu0 %v2041
    %2043 = vmatprep.subr.mxu0 0.0
    %v2044 = vand.u32 %v1361, 4294901760
    %2045 = vmatpush1.msra.mxu0 %v2044
    %2046 = vmatprep.subr.mxu0 0.0
    %v2047 = vand.u32 %v1360, 4294901760
    %2048 = vmatpush1.msra.mxu0 %v2047
    %2049 = vmatprep.subr.mxu0 0.0
    %v2050 = vand.u32 %v1359, 4294901760
    %2051 = vmatpush1.msra.mxu0 %v2050
    %2052 = vmatprep.subr.mxu0 0.0
    %v2053 = vand.u32 %v1358, 4294901760
    %2054 = vmatpush1.msra.mxu0 %v2053
    %2055 = vmatprep.subr.mxu0 0.0
    %v2056 = vand.u32 %v1357, 4294901760
    %2057 = vmatpush1.msra.mxu0 %v2056
    %2058 = vmatprep.subr.mxu0 0.0
    %v2059 = vand.u32 %v1356, 4294901760
    %2060 = vmatpush1.msra.mxu0 %v2059
    %2061 = vmatprep.subr.mxu0 0.0
    %v2062 = vand.u32 %v1355, 4294901760
    %2063 = vmatpush1.msra.mxu0 %v2062
    %2064 = vmatprep.subr.mxu0 0.0
    %v2065 = vand.u32 %v1354, 4294901760
    %2066 = vmatpush1.msra.mxu0 %v2065
    %2067 = vmatprep.subr.mxu0 0.0
    %v2068 = vand.u32 %v1353, 4294901760
    %2069 = vmatpush1.msra.mxu0 %v2068
    %2070 = vmatprep.subr.mxu0 0.0
    %v2071 = vand.u32 %v1352, 4294901760
    %2072 = vmatpush1.msra.mxu0 %v2071
    %2073 = vmatprep.subr.mxu0 0.0
    %v2074 = vand.u32 %v1351, 4294901760
    %2075 = vmatpush1.msra.mxu0 %v2074
    %2076 = vmatprep.subr.mxu0 0.0
    %v2077 = vand.u32 %v1350, 4294901760
    %2078 = vmatpush1.msra.mxu0 %v2077
    %2079 = vmatprep.subr.mxu0 0.0
    %2080 = vmatpush2.msra.mxu0 0.0
    %2081 = vmatprep.subr.mxu0 0.0
    %2082 = vmatpush2.msra.mxu0 0.0
    %2083 = vmatprep.subr.mxu0 0.0
    %2084 = vmatpush2.msra.mxu0 0.0
    %2085 = vmatprep.subr.mxu0 0.0
    %2086 = vmatpush2.msra.mxu0 0.0
    %2087 = vmatprep.subr.mxu0 0.0
    %2088 = vmatpush2.msra.mxu0 0.0
    %2089 = vmatprep.subr.mxu0 0.0
    %2090 = vmatpush2.msra.mxu0 0.0
    %2091 = vmatprep.subr.mxu0 0.0
    %2092 = vmatpush2.msra.mxu0 0.0
    %2093 = vmatprep.subr.mxu0 0.0
    %2094 = vmatpush2.msra.mxu0 0.0
    %2095 = vmatprep.subr.mxu0 0.0
    %2096 = vmatpush2.msra.mxu0 0.0
    %2097 = vmatprep.subr.mxu0 0.0
    %2098 = vmatpush2.msra.mxu0 0.0
    %2099 = vmatprep.subr.mxu0 0.0
    %2100 = vmatpush2.msra.mxu0 0.0
    %2101 = vmatprep.subr.mxu0 0.0
    %2102 = vmatpush2.msra.mxu0 0.0
    %2103 = vmatprep.subr.mxu0 0.0
    %2104 = vmatpush2.msra.mxu0 0.0
    %2105 = vmatprep.subr.mxu0 0.0
    %2106 = vmatpush2.msra.mxu0 0.0
    %2107 = vmatprep.subr.mxu0 0.0
    %2108 = vmatpush2.msra.mxu0 0.0
    %2109 = vmatprep.subr.mxu0 0.0
    %2110 = vmatpush2.msra.mxu0 0.0
    %2111 = vmatprep.mubr.f32.mxu0 0.0
    %v2112 = vand.u32 %v1226, 4294901760
    %2113 = vmatmul.mubr.f32.gmra.mxu0 %v2112
    %v2114 = vpop.f32.mrf.mxu0
    %v2115 = vadd.f32 %v2010, %v2114
    %v2116 = vpop.f32.mrf.mxu0
    %2117 = vmatprep.mubr.f32.mxu0 0.0
    %v2118 = vand.u32 %v1227, 4294901760
    %2119 = vmatmul.mubr.f32.gmra.mxu0 %v2118
    %v2120 = vpop.f32.mrf.mxu0
    %v2121 = vadd.f32 %v2016, %v2120
    %v2122 = vpop.f32.mrf.mxu0
    %2123 = vmatprep.mubr.f32.mxu0 0.0
    %v2124 = vand.u32 %v1228, 4294901760
    %2125 = vmatmul.mubr.f32.gmra.mxu0 %v2124
    %v2126 = vpop.f32.mrf.mxu0
    %v2127 = vadd.f32 %v2022, %v2126
    %v2128 = vpop.f32.mrf.mxu0
    %2129 = vmatprep.mubr.f32.mxu0 0.0
    %v2130 = vand.u32 %v1229, 4294901760
    %2131 = vmatmul.mubr.f32.gmra.mxu0 %v2130
    %v2132 = vpop.f32.mrf.mxu0
    %v2133 = vadd.f32 %v2028, %v2132
    %v2134 = vpop.f32.mrf.mxu0
    %2135 = vdwg.mxu0
    %2136 = vmatprep.subr.mxu0 0.0
    %v2137 = vand.u32 %v1348, 4294901760
    %2138 = vmatpush1.msra.mxu0 %v2137
    %2139 = vmatprep.subr.mxu0 0.0
    %v2140 = vand.u32 %v1347, 4294901760
    %2141 = vmatpush1.msra.mxu0 %v2140
    %2142 = vmatprep.subr.mxu0 0.0
    %v2143 = vand.u32 %v1346, 4294901760
    %2144 = vmatpush1.msra.mxu0 %v2143
    %2145 = vmatprep.subr.mxu0 0.0
    %v2146 = vand.u32 %v1345, 4294901760
    %2147 = vmatpush1.msra.mxu0 %v2146
    %2148 = vmatprep.subr.mxu0 0.0
    %v2149 = vand.u32 %v1344, 4294901760
    %2150 = vmatpush1.msra.mxu0 %v2149
    %2151 = vmatprep.subr.mxu0 0.0
    %v2152 = vand.u32 %v1343, 4294901760
    %2153 = vmatpush1.msra.mxu0 %v2152
    %2154 = vmatprep.subr.mxu0 0.0
    %v2155 = vand.u32 %v1342, 4294901760
    %2156 = vmatpush1.msra.mxu0 %v2155
    %2157 = vmatprep.subr.mxu0 0.0
    %v2158 = vand.u32 %v1341, 4294901760
    %2159 = vmatpush1.msra.mxu0 %v2158
    %2160 = vmatprep.subr.mxu0 0.0
    %v2161 = vand.u32 %v1340, 4294901760
    %2162 = vmatpush1.msra.mxu0 %v2161
    %2163 = vmatprep.subr.mxu0 0.0
    %v2164 = vand.u32 %v1339, 4294901760
    %2165 = vmatpush1.msra.mxu0 %v2164
    %2166 = vmatprep.subr.mxu0 0.0
    %v2167 = vand.u32 %v1338, 4294901760
    %2168 = vmatpush1.msra.mxu0 %v2167
    %2169 = vmatprep.subr.mxu0 0.0
    %v2170 = vand.u32 %v1337, 4294901760
    %2171 = vmatpush1.msra.mxu0 %v2170
    %2172 = vmatprep.subr.mxu0 0.0
    %v2173 = vand.u32 %v1336, 4294901760
    %2174 = vmatpush1.msra.mxu0 %v2173
    %2175 = vmatprep.subr.mxu0 0.0
    %v2176 = vand.u32 %v1335, 4294901760
    %2177 = vmatpush1.msra.mxu0 %v2176
    %2178 = vmatprep.subr.mxu0 0.0
    %v2179 = vand.u32 %v1334, 4294901760
    %2180 = vmatpush1.msra.mxu0 %v2179
    %2181 = vmatprep.subr.mxu0 0.0
    %v2182 = vand.u32 %v1333, 4294901760
    %2183 = vmatpush1.msra.mxu0 %v2182
    %2184 = vmatprep.subr.mxu0 0.0
    %2185 = vmatpush2.msra.mxu0 0.0
    %2186 = vmatprep.subr.mxu0 0.0
    %2187 = vmatpush2.msra.mxu0 0.0
    %2188 = vmatprep.subr.mxu0 0.0
    %2189 = vmatpush2.msra.mxu0 0.0
    %2190 = vmatprep.subr.mxu0 0.0
    %2191 = vmatpush2.msra.mxu0 0.0
    %2192 = vmatprep.subr.mxu0 0.0
    %2193 = vmatpush2.msra.mxu0 0.0
    %2194 = vmatprep.subr.mxu0 0.0
    %2195 = vmatpush2.msra.mxu0 0.0
    %2196 = vmatprep.subr.mxu0 0.0
    %2197 = vmatpush2.msra.mxu0 0.0
    %2198 = vmatprep.subr.mxu0 0.0
    %2199 = vmatpush2.msra.mxu0 0.0
    %2200 = vmatprep.subr.mxu0 0.0
    %2201 = vmatpush2.msra.mxu0 0.0
    %2202 = vmatprep.subr.mxu0 0.0
    %2203 = vmatpush2.msra.mxu0 0.0
    %2204 = vmatprep.subr.mxu0 0.0
    %2205 = vmatpush2.msra.mxu0 0.0
    %2206 = vmatprep.subr.mxu0 0.0
    %2207 = vmatpush2.msra.mxu0 0.0
    %2208 = vmatprep.subr.mxu0 0.0
    %2209 = vmatpush2.msra.mxu0 0.0
    %2210 = vmatprep.subr.mxu0 0.0
    %2211 = vmatpush2.msra.mxu0 0.0
    %2212 = vmatprep.subr.mxu0 0.0
    %2213 = vmatpush2.msra.mxu0 0.0
    %2214 = vmatprep.subr.mxu0 0.0
    %2215 = vmatpush2.msra.mxu0 0.0
    %2216 = vmatprep.mubr.f32.mxu0 0.0
    %v2217 = vand.u32 %v1304, 4294901760
    %v2218 = vsub.f32 %v1304, %v2217
    %v2219 = vand.u32 %v2218, 4294901760
    %v2220 = vsub.f32 %v2218, %v2219
    %v2221 = vand.u32 %v2220, 4294901760
    %2222 = vmatmul.mubr.f32.gmra.mxu0 %v2221
    %v2223 = vpop.f32.mrf.mxu0
    %v2224 = vadd.f32 %v2115, %v2223
    %v2225 = vpop.f32.mrf.mxu0
    %2226 = vmatprep.mubr.f32.mxu0 0.0
    %v2227 = vand.u32 %v1305, 4294901760
    %v2228 = vsub.f32 %v1305, %v2227
    %v2229 = vand.u32 %v2228, 4294901760
    %v2230 = vsub.f32 %v2228, %v2229
    %v2231 = vand.u32 %v2230, 4294901760
    %2232 = vmatmul.mubr.f32.gmra.mxu0 %v2231
    %v2233 = vpop.f32.mrf.mxu0
    %v2234 = vadd.f32 %v2121, %v2233
    %v2235 = vpop.f32.mrf.mxu0
    %2236 = vmatprep.mubr.f32.mxu0 0.0
    %v2237 = vand.u32 %v1306, 4294901760
    %v2238 = vsub.f32 %v1306, %v2237
    %v2239 = vand.u32 %v2238, 4294901760
    %v2240 = vsub.f32 %v2238, %v2239
    %v2241 = vand.u32 %v2240, 4294901760
    %2242 = vmatmul.mubr.f32.gmra.mxu0 %v2241
    %v2243 = vpop.f32.mrf.mxu0
    %v2244 = vadd.f32 %v2127, %v2243
    %v2245 = vpop.f32.mrf.mxu0
    %2246 = vmatprep.mubr.f32.mxu0 0.0
    %v2247 = vand.u32 %v1307, 4294901760
    %v2248 = vsub.f32 %v1307, %v2247
    %v2249 = vand.u32 %v2248, 4294901760
    %v2250 = vsub.f32 %v2248, %v2249
    %v2251 = vand.u32 %v2250, 4294901760
    %2252 = vmatmul.mubr.f32.gmra.mxu0 %v2251
    %v2253 = vpop.f32.mrf.mxu0
    %v2254 = vadd.f32 %v2133, %v2253
    %v2255 = vpop.f32.mrf.mxu0
    %2256 = vdwg.mxu0
    %2257 = vmatprep.subr.mxu0 0.0
    %v2258 = vand.u32 %v1348, 4294901760
    %v2259 = vsub.f32 %v1348, %v2258
    %v2260 = vand.u32 %v2259, 4294901760
    %v2261 = vsub.f32 %v2259, %v2260
    %v2262 = vand.u32 %v2261, 4294901760
    %2263 = vmatpush1.msra.mxu0 %v2262
    %2264 = vmatprep.subr.mxu0 0.0
    %v2265 = vand.u32 %v1347, 4294901760
    %v2266 = vsub.f32 %v1347, %v2265
    %v2267 = vand.u32 %v2266, 4294901760
    %v2268 = vsub.f32 %v2266, %v2267
    %v2269 = vand.u32 %v2268, 4294901760
    %2270 = vmatpush1.msra.mxu0 %v2269
    %2271 = vmatprep.subr.mxu0 0.0
    %v2272 = vand.u32 %v1346, 4294901760
    %v2273 = vsub.f32 %v1346, %v2272
    %v2274 = vand.u32 %v2273, 4294901760
    %v2275 = vsub.f32 %v2273, %v2274
    %v2276 = vand.u32 %v2275, 4294901760
    %2277 = vmatpush1.msra.mxu0 %v2276
    %2278 = vmatprep.subr.mxu0 0.0
    %v2279 = vand.u32 %v1345, 4294901760
    %v2280 = vsub.f32 %v1345, %v2279
    %v2281 = vand.u32 %v2280, 4294901760
    %v2282 = vsub.f32 %v2280, %v2281
    %v2283 = vand.u32 %v2282, 4294901760
    %2284 = vmatpush1.msra.mxu0 %v2283
    %2285 = vmatprep.subr.mxu0 0.0
    %v2286 = vand.u32 %v1344, 4294901760
    %v2287 = vsub.f32 %v1344, %v2286
    %v2288 = vand.u32 %v2287, 4294901760
    %v2289 = vsub.f32 %v2287, %v2288
    %v2290 = vand.u32 %v2289, 4294901760
    %2291 = vmatpush1.msra.mxu0 %v2290
    %2292 = vmatprep.subr.mxu0 0.0
    %v2293 = vand.u32 %v1343, 4294901760
    %v2294 = vsub.f32 %v1343, %v2293
    %v2295 = vand.u32 %v2294, 4294901760
    %v2296 = vsub.f32 %v2294, %v2295
    %v2297 = vand.u32 %v2296, 4294901760
    %2298 = vmatpush1.msra.mxu0 %v2297
    %2299 = vmatprep.subr.mxu0 0.0
    %v2300 = vand.u32 %v1342, 4294901760
    %v2301 = vsub.f32 %v1342, %v2300
    %v2302 = vand.u32 %v2301, 4294901760
    %v2303 = vsub.f32 %v2301, %v2302
    %v2304 = vand.u32 %v2303, 4294901760
    %2305 = vmatpush1.msra.mxu0 %v2304
    %2306 = vmatprep.subr.mxu0 0.0
    %v2307 = vand.u32 %v1341, 4294901760
    %v2308 = vsub.f32 %v1341, %v2307
    %v2309 = vand.u32 %v2308, 4294901760
    %v2310 = vsub.f32 %v2308, %v2309
    %v2311 = vand.u32 %v2310, 4294901760
    %2312 = vmatpush1.msra.mxu0 %v2311
    %2313 = vmatprep.subr.mxu0 0.0
    %v2314 = vand.u32 %v1340, 4294901760
    %v2315 = vsub.f32 %v1340, %v2314
    %v2316 = vand.u32 %v2315, 4294901760
    %v2317 = vsub.f32 %v2315, %v2316
    %v2318 = vand.u32 %v2317, 4294901760
    %2319 = vmatpush1.msra.mxu0 %v2318
    %2320 = vmatprep.subr.mxu0 0.0
    %v2321 = vand.u32 %v1339, 4294901760
    %v2322 = vsub.f32 %v1339, %v2321
    %v2323 = vand.u32 %v2322, 4294901760
    %v2324 = vsub.f32 %v2322, %v2323
    %v2325 = vand.u32 %v2324, 4294901760
    %2326 = vmatpush1.msra.mxu0 %v2325
    %2327 = vmatprep.subr.mxu0 0.0
    %v2328 = vand.u32 %v1338, 4294901760
    %v2329 = vsub.f32 %v1338, %v2328
    %v2330 = vand.u32 %v2329, 4294901760
    %v2331 = vsub.f32 %v2329, %v2330
    %v2332 = vand.u32 %v2331, 4294901760
    %2333 = vmatpush1.msra.mxu0 %v2332
    %2334 = vmatprep.subr.mxu0 0.0
    %v2335 = vand.u32 %v1337, 4294901760
    %v2336 = vsub.f32 %v1337, %v2335
    %v2337 = vand.u32 %v2336, 4294901760
    %v2338 = vsub.f32 %v2336, %v2337
    %v2339 = vand.u32 %v2338, 4294901760
    %2340 = vmatpush1.msra.mxu0 %v2339
    %2341 = vmatprep.subr.mxu0 0.0
    %v2342 = vand.u32 %v1336, 4294901760
    %v2343 = vsub.f32 %v1336, %v2342
    %v2344 = vand.u32 %v2343, 4294901760
    %v2345 = vsub.f32 %v2343, %v2344
    %v2346 = vand.u32 %v2345, 4294901760
    %2347 = vmatpush1.msra.mxu0 %v2346
    %2348 = vmatprep.subr.mxu0 0.0
    %v2349 = vand.u32 %v1335, 4294901760
    %v2350 = vsub.f32 %v1335, %v2349
    %v2351 = vand.u32 %v2350, 4294901760
    %v2352 = vsub.f32 %v2350, %v2351
    %v2353 = vand.u32 %v2352, 4294901760
    %2354 = vmatpush1.msra.mxu0 %v2353
    %2355 = vmatprep.subr.mxu0 0.0
    %v2356 = vand.u32 %v1334, 4294901760
    %v2357 = vsub.f32 %v1334, %v2356
    %v2358 = vand.u32 %v2357, 4294901760
    %v2359 = vsub.f32 %v2357, %v2358
    %v2360 = vand.u32 %v2359, 4294901760
    %2361 = vmatpush1.msra.mxu0 %v2360
    %2362 = vmatprep.subr.mxu0 0.0
    %v2363 = vand.u32 %v1333, 4294901760
    %v2364 = vsub.f32 %v1333, %v2363
    %v2365 = vand.u32 %v2364, 4294901760
    %v2366 = vsub.f32 %v2364, %v2365
    %v2367 = vand.u32 %v2366, 4294901760
    %2368 = vmatpush1.msra.mxu0 %v2367
    %2369 = vmatprep.subr.mxu0 0.0
    %2370 = vmatpush2.msra.mxu0 0.0
    %2371 = vmatprep.subr.mxu0 0.0
    %2372 = vmatpush2.msra.mxu0 0.0
    %2373 = vmatprep.subr.mxu0 0.0
    %2374 = vmatpush2.msra.mxu0 0.0
    %2375 = vmatprep.subr.mxu0 0.0
    %2376 = vmatpush2.msra.mxu0 0.0
    %2377 = vmatprep.subr.mxu0 0.0
    %2378 = vmatpush2.msra.mxu0 0.0
    %2379 = vmatprep.subr.mxu0 0.0
    %2380 = vmatpush2.msra.mxu0 0.0
    %2381 = vmatprep.subr.mxu0 0.0
    %2382 = vmatpush2.msra.mxu0 0.0
    %2383 = vmatprep.subr.mxu0 0.0
    %2384 = vmatpush2.msra.mxu0 0.0
    %2385 = vmatprep.subr.mxu0 0.0
    %2386 = vmatpush2.msra.mxu0 0.0
    %2387 = vmatprep.subr.mxu0 0.0
    %2388 = vmatpush2.msra.mxu0 0.0
    %2389 = vmatprep.subr.mxu0 0.0
    %2390 = vmatpush2.msra.mxu0 0.0
    %2391 = vmatprep.subr.mxu0 0.0
    %2392 = vmatpush2.msra.mxu0 0.0
    %2393 = vmatprep.subr.mxu0 0.0
    %2394 = vmatpush2.msra.mxu0 0.0
    %2395 = vmatprep.subr.mxu0 0.0
    %2396 = vmatpush2.msra.mxu0 0.0
    %2397 = vmatprep.subr.mxu0 0.0
    %2398 = vmatpush2.msra.mxu0 0.0
    %2399 = vmatprep.subr.mxu0 0.0
    %2400 = vmatpush2.msra.mxu0 0.0
    %2401 = vmatprep.mubr.f32.mxu0 0.0
    %v2402 = vand.u32 %v1304, 4294901760
    %2403 = vmatmul.mubr.f32.gmra.mxu0 %v2402
    %v2404 = vpop.f32.mrf.mxu0
    %v2405 = vadd.f32 %v2224, %v2404
    %v2406 = vpop.f32.mrf.mxu0
    %2407 = vmatprep.mubr.f32.mxu0 0.0
    %v2408 = vand.u32 %v1305, 4294901760
    %2409 = vmatmul.mubr.f32.gmra.mxu0 %v2408
    %v2410 = vpop.f32.mrf.mxu0
    %v2411 = vadd.f32 %v2234, %v2410
    %v2412 = vpop.f32.mrf.mxu0
    %2413 = vmatprep.mubr.f32.mxu0 0.0
    %v2414 = vand.u32 %v1306, 4294901760
    %2415 = vmatmul.mubr.f32.gmra.mxu0 %v2414
    %v2416 = vpop.f32.mrf.mxu0
    %v2417 = vadd.f32 %v2244, %v2416
    %v2418 = vpop.f32.mrf.mxu0
    %2419 = vmatprep.mubr.f32.mxu0 0.0
    %v2420 = vand.u32 %v1307, 4294901760
    %2421 = vmatmul.mubr.f32.gmra.mxu0 %v2420
    %v2422 = vpop.f32.mrf.mxu0
    %v2423 = vadd.f32 %v2254, %v2422
    %v2424 = vpop.f32.mrf.mxu0
    %2425 = vdwg.mxu0
    %2426 = vmatprep.subr.mxu0 0.0
    %v2427 = vand.u32 %v1348, 4294901760
    %v2428 = vsub.f32 %v1348, %v2427
    %2429 = vmatpush1.msra.mxu0 %v2428
    %2430 = vmatprep.subr.mxu0 0.0
    %v2431 = vand.u32 %v1347, 4294901760
    %v2432 = vsub.f32 %v1347, %v2431
    %2433 = vmatpush1.msra.mxu0 %v2432
    %2434 = vmatprep.subr.mxu0 0.0
    %v2435 = vand.u32 %v1346, 4294901760
    %v2436 = vsub.f32 %v1346, %v2435
    %2437 = vmatpush1.msra.mxu0 %v2436
    %2438 = vmatprep.subr.mxu0 0.0
    %v2439 = vand.u32 %v1345, 4294901760
    %v2440 = vsub.f32 %v1345, %v2439
    %2441 = vmatpush1.msra.mxu0 %v2440
    %2442 = vmatprep.subr.mxu0 0.0
    %v2443 = vand.u32 %v1344, 4294901760
    %v2444 = vsub.f32 %v1344, %v2443
    %2445 = vmatpush1.msra.mxu0 %v2444
    %2446 = vmatprep.subr.mxu0 0.0
    %v2447 = vand.u32 %v1343, 4294901760
    %v2448 = vsub.f32 %v1343, %v2447
    %2449 = vmatpush1.msra.mxu0 %v2448
    %2450 = vmatprep.subr.mxu0 0.0
    %v2451 = vand.u32 %v1342, 4294901760
    %v2452 = vsub.f32 %v1342, %v2451
    %2453 = vmatpush1.msra.mxu0 %v2452
    %2454 = vmatprep.subr.mxu0 0.0
    %v2455 = vand.u32 %v1341, 4294901760
    %v2456 = vsub.f32 %v1341, %v2455
    %2457 = vmatpush1.msra.mxu0 %v2456
    %2458 = vmatprep.subr.mxu0 0.0
    %v2459 = vand.u32 %v1340, 4294901760
    %v2460 = vsub.f32 %v1340, %v2459
    %2461 = vmatpush1.msra.mxu0 %v2460
    %2462 = vmatprep.subr.mxu0 0.0
    %v2463 = vand.u32 %v1339, 4294901760
    %v2464 = vsub.f32 %v1339, %v2463
    %2465 = vmatpush1.msra.mxu0 %v2464
    %2466 = vmatprep.subr.mxu0 0.0
    %v2467 = vand.u32 %v1338, 4294901760
    %v2468 = vsub.f32 %v1338, %v2467
    %2469 = vmatpush1.msra.mxu0 %v2468
    %2470 = vmatprep.subr.mxu0 0.0
    %v2471 = vand.u32 %v1337, 4294901760
    %v2472 = vsub.f32 %v1337, %v2471
    %2473 = vmatpush1.msra.mxu0 %v2472
    %2474 = vmatprep.subr.mxu0 0.0
    %v2475 = vand.u32 %v1336, 4294901760
    %v2476 = vsub.f32 %v1336, %v2475
    %2477 = vmatpush1.msra.mxu0 %v2476
    %2478 = vmatprep.subr.mxu0 0.0
    %v2479 = vand.u32 %v1335, 4294901760
    %v2480 = vsub.f32 %v1335, %v2479
    %2481 = vmatpush1.msra.mxu0 %v2480
    %2482 = vmatprep.subr.mxu0 0.0
    %v2483 = vand.u32 %v1334, 4294901760
    %v2484 = vsub.f32 %v1334, %v2483
    %2485 = vmatpush1.msra.mxu0 %v2484
    %2486 = vmatprep.subr.mxu0 0.0
    %v2487 = vand.u32 %v1333, 4294901760
    %v2488 = vsub.f32 %v1333, %v2487
    %2489 = vmatpush1.msra.mxu0 %v2488
    %2490 = vmatprep.subr.mxu0 0.0
    %2491 = vmatpush2.msra.mxu0 0.0
    %2492 = vmatprep.subr.mxu0 0.0
    %2493 = vmatpush2.msra.mxu0 0.0
    %2494 = vmatprep.subr.mxu0 0.0
    %2495 = vmatpush2.msra.mxu0 0.0
    %2496 = vmatprep.subr.mxu0 0.0
    %2497 = vmatpush2.msra.mxu0 0.0
    %2498 = vmatprep.subr.mxu0 0.0
    %2499 = vmatpush2.msra.mxu0 0.0
    %2500 = vmatprep.subr.mxu0 0.0
    %2501 = vmatpush2.msra.mxu0 0.0
    %2502 = vmatprep.subr.mxu0 0.0
    %2503 = vmatpush2.msra.mxu0 0.0
    %2504 = vmatprep.subr.mxu0 0.0
    %2505 = vmatpush2.msra.mxu0 0.0
    %2506 = vmatprep.subr.mxu0 0.0
    %2507 = vmatpush2.msra.mxu0 0.0
    %2508 = vmatprep.subr.mxu0 0.0
    %2509 = vmatpush2.msra.mxu0 0.0
    %2510 = vmatprep.subr.mxu0 0.0
    %2511 = vmatpush2.msra.mxu0 0.0
    %2512 = vmatprep.subr.mxu0 0.0
    %2513 = vmatpush2.msra.mxu0 0.0
    %2514 = vmatprep.subr.mxu0 0.0
    %2515 = vmatpush2.msra.mxu0 0.0
    %2516 = vmatprep.subr.mxu0 0.0
    %2517 = vmatpush2.msra.mxu0 0.0
    %2518 = vmatprep.subr.mxu0 0.0
    %2519 = vmatpush2.msra.mxu0 0.0
    %2520 = vmatprep.subr.mxu0 0.0
    %2521 = vmatpush2.msra.mxu0 0.0
    %2522 = vmatprep.mubr.f32.mxu0 0.0
    %v2523 = vand.u32 %v1304, 4294901760
    %v2524 = vsub.f32 %v1304, %v2523
    %2525 = vmatmul.mubr.f32.gmra.mxu0 %v2524
    %v2526 = vpop.f32.mrf.mxu0
    %v2527 = vadd.f32 %v2405, %v2526
    %v2528 = vpop.f32.mrf.mxu0
    %2529 = vmatprep.mubr.f32.mxu0 0.0
    %v2530 = vand.u32 %v1305, 4294901760
    %v2531 = vsub.f32 %v1305, %v2530
    %2532 = vmatmul.mubr.f32.gmra.mxu0 %v2531
    %v2533 = vpop.f32.mrf.mxu0
    %v2534 = vadd.f32 %v2411, %v2533
    %v2535 = vpop.f32.mrf.mxu0
    %2536 = vmatprep.mubr.f32.mxu0 0.0
    %v2537 = vand.u32 %v1306, 4294901760
    %v2538 = vsub.f32 %v1306, %v2537
    %2539 = vmatmul.mubr.f32.gmra.mxu0 %v2538
    %v2540 = vpop.f32.mrf.mxu0
    %v2541 = vadd.f32 %v2417, %v2540
    %v2542 = vpop.f32.mrf.mxu0
    %2543 = vmatprep.mubr.f32.mxu0 0.0
    %v2544 = vand.u32 %v1307, 4294901760
    %v2545 = vsub.f32 %v1307, %v2544
    %2546 = vmatmul.mubr.f32.gmra.mxu0 %v2545
    %v2547 = vpop.f32.mrf.mxu0
    %v2548 = vadd.f32 %v2423, %v2547
    %v2549 = vpop.f32.mrf.mxu0
    %2550 = vdwg.mxu0
    %2551 = vmatprep.subr.mxu0 0.0
    %v2552 = vand.u32 %v1348, 4294901760
    %2553 = vmatpush1.msra.mxu0 %v2552
    %2554 = vmatprep.subr.mxu0 0.0
    %v2555 = vand.u32 %v1347, 4294901760
    %2556 = vmatpush1.msra.mxu0 %v2555
    %2557 = vmatprep.subr.mxu0 0.0
    %v2558 = vand.u32 %v1346, 4294901760
    %2559 = vmatpush1.msra.mxu0 %v2558
    %2560 = vmatprep.subr.mxu0 0.0
    %v2561 = vand.u32 %v1345, 4294901760
    %2562 = vmatpush1.msra.mxu0 %v2561
    %2563 = vmatprep.subr.mxu0 0.0
    %v2564 = vand.u32 %v1344, 4294901760
    %2565 = vmatpush1.msra.mxu0 %v2564
    %2566 = vmatprep.subr.mxu0 0.0
    %v2567 = vand.u32 %v1343, 4294901760
    %2568 = vmatpush1.msra.mxu0 %v2567
    %2569 = vmatprep.subr.mxu0 0.0
    %v2570 = vand.u32 %v1342, 4294901760
    %2571 = vmatpush1.msra.mxu0 %v2570
    %2572 = vmatprep.subr.mxu0 0.0
    %v2573 = vand.u32 %v1341, 4294901760
    %2574 = vmatpush1.msra.mxu0 %v2573
    %2575 = vmatprep.subr.mxu0 0.0
    %v2576 = vand.u32 %v1340, 4294901760
    %2577 = vmatpush1.msra.mxu0 %v2576
    %2578 = vmatprep.subr.mxu0 0.0
    %v2579 = vand.u32 %v1339, 4294901760
    %2580 = vmatpush1.msra.mxu0 %v2579
    %2581 = vmatprep.subr.mxu0 0.0
    %v2582 = vand.u32 %v1338, 4294901760
    %2583 = vmatpush1.msra.mxu0 %v2582
    %2584 = vmatprep.subr.mxu0 0.0
    %v2585 = vand.u32 %v1337, 4294901760
    %2586 = vmatpush1.msra.mxu0 %v2585
    %2587 = vmatprep.subr.mxu0 0.0
    %v2588 = vand.u32 %v1336, 4294901760
    %2589 = vmatpush1.msra.mxu0 %v2588
    %2590 = vmatprep.subr.mxu0 0.0
    %v2591 = vand.u32 %v1335, 4294901760
    %2592 = vmatpush1.msra.mxu0 %v2591
    %2593 = vmatprep.subr.mxu0 0.0
    %v2594 = vand.u32 %v1334, 4294901760
    %2595 = vmatpush1.msra.mxu0 %v2594
    %2596 = vmatprep.subr.mxu0 0.0
    %v2597 = vand.u32 %v1333, 4294901760
    %2598 = vmatpush1.msra.mxu0 %v2597
    %2599 = vmatprep.subr.mxu0 0.0
    %2600 = vmatpush2.msra.mxu0 0.0
    %2601 = vmatprep.subr.mxu0 0.0
    %2602 = vmatpush2.msra.mxu0 0.0
    %2603 = vmatprep.subr.mxu0 0.0
    %2604 = vmatpush2.msra.mxu0 0.0
    %2605 = vmatprep.subr.mxu0 0.0
    %2606 = vmatpush2.msra.mxu0 0.0
    %2607 = vmatprep.subr.mxu0 0.0
    %2608 = vmatpush2.msra.mxu0 0.0
    %2609 = vmatprep.subr.mxu0 0.0
    %2610 = vmatpush2.msra.mxu0 0.0
    %2611 = vmatprep.subr.mxu0 0.0
    %2612 = vmatpush2.msra.mxu0 0.0
    %2613 = vmatprep.subr.mxu0 0.0
    %2614 = vmatpush2.msra.mxu0 0.0
    %2615 = vmatprep.subr.mxu0 0.0
    %2616 = vmatpush2.msra.mxu0 0.0
    %2617 = vmatprep.subr.mxu0 0.0
    %2618 = vmatpush2.msra.mxu0 0.0
    %2619 = vmatprep.subr.mxu0 0.0
    %2620 = vmatpush2.msra.mxu0 0.0
    %2621 = vmatprep.subr.mxu0 0.0
    %2622 = vmatpush2.msra.mxu0 0.0
    %2623 = vmatprep.subr.mxu0 0.0
    %2624 = vmatpush2.msra.mxu0 0.0
    %2625 = vmatprep.subr.mxu0 0.0
    %2626 = vmatpush2.msra.mxu0 0.0
    %2627 = vmatprep.subr.mxu0 0.0
    %2628 = vmatpush2.msra.mxu0 0.0
    %2629 = vmatprep.subr.mxu0 0.0
    %2630 = vmatpush2.msra.mxu0 0.0
    %2631 = vmatprep.mubr.f32.mxu0 0.0
    %v2632 = vand.u32 %v1304, 4294901760
    %v2633 = vsub.f32 %v1304, %v2632
    %v2634 = vand.u32 %v2633, 4294901760
    %2635 = vmatmul.mubr.f32.gmra.mxu0 %v2634
    %v2636 = vpop.f32.mrf.mxu0
    %v2637 = vadd.f32 %v2527, %v2636
    %v2638 = vpop.f32.mrf.mxu0
    %2639 = vmatprep.mubr.f32.mxu0 0.0
    %v2640 = vand.u32 %v1305, 4294901760
    %v2641 = vsub.f32 %v1305, %v2640
    %v2642 = vand.u32 %v2641, 4294901760
    %2643 = vmatmul.mubr.f32.gmra.mxu0 %v2642
    %v2644 = vpop.f32.mrf.mxu0
    %v2645 = vadd.f32 %v2534, %v2644
    %v2646 = vpop.f32.mrf.mxu0
    %2647 = vmatprep.mubr.f32.mxu0 0.0
    %v2648 = vand.u32 %v1306, 4294901760
    %v2649 = vsub.f32 %v1306, %v2648
    %v2650 = vand.u32 %v2649, 4294901760
    %2651 = vmatmul.mubr.f32.gmra.mxu0 %v2650
    %v2652 = vpop.f32.mrf.mxu0
    %v2653 = vadd.f32 %v2541, %v2652
    %v2654 = vpop.f32.mrf.mxu0
    %2655 = vmatprep.mubr.f32.mxu0 0.0
    %v2656 = vand.u32 %v1307, 4294901760
    %v2657 = vsub.f32 %v1307, %v2656
    %v2658 = vand.u32 %v2657, 4294901760
    %2659 = vmatmul.mubr.f32.gmra.mxu0 %v2658
    %v2660 = vpop.f32.mrf.mxu0
    %v2661 = vadd.f32 %v2548, %v2660
    %v2662 = vpop.f32.mrf.mxu0
    %2663 = vdwg.mxu0
    %2664 = vmatprep.subr.mxu0 0.0
    %v2665 = vand.u32 %v1348, 4294901760
    %v2666 = vsub.f32 %v1348, %v2665
    %v2667 = vand.u32 %v2666, 4294901760
    %2668 = vmatpush1.msra.mxu0 %v2667
    %2669 = vmatprep.subr.mxu0 0.0
    %v2670 = vand.u32 %v1347, 4294901760
    %v2671 = vsub.f32 %v1347, %v2670
    %v2672 = vand.u32 %v2671, 4294901760
    %2673 = vmatpush1.msra.mxu0 %v2672
    %2674 = vmatprep.subr.mxu0 0.0
    %v2675 = vand.u32 %v1346, 4294901760
    %v2676 = vsub.f32 %v1346, %v2675
    %v2677 = vand.u32 %v2676, 4294901760
    %2678 = vmatpush1.msra.mxu0 %v2677
    %2679 = vmatprep.subr.mxu0 0.0
    %v2680 = vand.u32 %v1345, 4294901760
    %v2681 = vsub.f32 %v1345, %v2680
    %v2682 = vand.u32 %v2681, 4294901760
    %2683 = vmatpush1.msra.mxu0 %v2682
    %2684 = vmatprep.subr.mxu0 0.0
    %v2685 = vand.u32 %v1344, 4294901760
    %v2686 = vsub.f32 %v1344, %v2685
    %v2687 = vand.u32 %v2686, 4294901760
    %2688 = vmatpush1.msra.mxu0 %v2687
    %2689 = vmatprep.subr.mxu0 0.0
    %v2690 = vand.u32 %v1343, 4294901760
    %v2691 = vsub.f32 %v1343, %v2690
    %v2692 = vand.u32 %v2691, 4294901760
    %2693 = vmatpush1.msra.mxu0 %v2692
    %2694 = vmatprep.subr.mxu0 0.0
    %v2695 = vand.u32 %v1342, 4294901760
    %v2696 = vsub.f32 %v1342, %v2695
    %v2697 = vand.u32 %v2696, 4294901760
    %2698 = vmatpush1.msra.mxu0 %v2697
    %2699 = vmatprep.subr.mxu0 0.0
    %v2700 = vand.u32 %v1341, 4294901760
    %v2701 = vsub.f32 %v1341, %v2700
    %v2702 = vand.u32 %v2701, 4294901760
    %2703 = vmatpush1.msra.mxu0 %v2702
    %2704 = vmatprep.subr.mxu0 0.0
    %v2705 = vand.u32 %v1340, 4294901760
    %v2706 = vsub.f32 %v1340, %v2705
    %v2707 = vand.u32 %v2706, 4294901760
    %2708 = vmatpush1.msra.mxu0 %v2707
    %2709 = vmatprep.subr.mxu0 0.0
    %v2710 = vand.u32 %v1339, 4294901760
    %v2711 = vsub.f32 %v1339, %v2710
    %v2712 = vand.u32 %v2711, 4294901760
    %2713 = vmatpush1.msra.mxu0 %v2712
    %2714 = vmatprep.subr.mxu0 0.0
    %v2715 = vand.u32 %v1338, 4294901760
    %v2716 = vsub.f32 %v1338, %v2715
    %v2717 = vand.u32 %v2716, 4294901760
    %2718 = vmatpush1.msra.mxu0 %v2717
    %2719 = vmatprep.subr.mxu0 0.0
    %v2720 = vand.u32 %v1337, 4294901760
    %v2721 = vsub.f32 %v1337, %v2720
    %v2722 = vand.u32 %v2721, 4294901760
    %2723 = vmatpush1.msra.mxu0 %v2722
    %2724 = vmatprep.subr.mxu0 0.0
    %v2725 = vand.u32 %v1336, 4294901760
    %v2726 = vsub.f32 %v1336, %v2725
    %v2727 = vand.u32 %v2726, 4294901760
    %2728 = vmatpush1.msra.mxu0 %v2727
    %2729 = vmatprep.subr.mxu0 0.0
    %v2730 = vand.u32 %v1335, 4294901760
    %v2731 = vsub.f32 %v1335, %v2730
    %v2732 = vand.u32 %v2731, 4294901760
    %2733 = vmatpush1.msra.mxu0 %v2732
    %2734 = vmatprep.subr.mxu0 0.0
    %v2735 = vand.u32 %v1334, 4294901760
    %v2736 = vsub.f32 %v1334, %v2735
    %v2737 = vand.u32 %v2736, 4294901760
    %2738 = vmatpush1.msra.mxu0 %v2737
    %2739 = vmatprep.subr.mxu0 0.0
    %v2740 = vand.u32 %v1333, 4294901760
    %v2741 = vsub.f32 %v1333, %v2740
    %v2742 = vand.u32 %v2741, 4294901760
    %2743 = vmatpush1.msra.mxu0 %v2742
    %2744 = vmatprep.subr.mxu0 0.0
    %2745 = vmatpush2.msra.mxu0 0.0
    %2746 = vmatprep.subr.mxu0 0.0
    %2747 = vmatpush2.msra.mxu0 0.0
    %2748 = vmatprep.subr.mxu0 0.0
    %2749 = vmatpush2.msra.mxu0 0.0
    %2750 = vmatprep.subr.mxu0 0.0
    %2751 = vmatpush2.msra.mxu0 0.0
    %2752 = vmatprep.subr.mxu0 0.0
    %2753 = vmatpush2.msra.mxu0 0.0
    %2754 = vmatprep.subr.mxu0 0.0
    %2755 = vmatpush2.msra.mxu0 0.0
    %2756 = vmatprep.subr.mxu0 0.0
    %2757 = vmatpush2.msra.mxu0 0.0
    %2758 = vmatprep.subr.mxu0 0.0
    %2759 = vmatpush2.msra.mxu0 0.0
    %2760 = vmatprep.subr.mxu0 0.0
    %2761 = vmatpush2.msra.mxu0 0.0
    %2762 = vmatprep.subr.mxu0 0.0
    %2763 = vmatpush2.msra.mxu0 0.0
    %2764 = vmatprep.subr.mxu0 0.0
    %2765 = vmatpush2.msra.mxu0 0.0
    %2766 = vmatprep.subr.mxu0 0.0
    %2767 = vmatpush2.msra.mxu0 0.0
    %2768 = vmatprep.subr.mxu0 0.0
    %2769 = vmatpush2.msra.mxu0 0.0
    %2770 = vmatprep.subr.mxu0 0.0
    %2771 = vmatpush2.msra.mxu0 0.0
    %2772 = vmatprep.subr.mxu0 0.0
    %2773 = vmatpush2.msra.mxu0 0.0
    %2774 = vmatprep.subr.mxu0 0.0
    %2775 = vmatpush2.msra.mxu0 0.0
    %2776 = vmatprep.mubr.f32.mxu0 0.0
    %v2777 = vand.u32 %v1304, 4294901760
    %2778 = vmatmul.mubr.f32.gmra.mxu0 %v2777
    %v2779 = vpop.f32.mrf.mxu0
    %v2780 = vadd.f32 %v2637, %v2779
    %v2781 = vpop.f32.mrf.mxu0
    %2782 = vmatprep.mubr.f32.mxu0 0.0
    %v2783 = vand.u32 %v1305, 4294901760
    %2784 = vmatmul.mubr.f32.gmra.mxu0 %v2783
    %v2785 = vpop.f32.mrf.mxu0
    %v2786 = vadd.f32 %v2645, %v2785
    %v2787 = vpop.f32.mrf.mxu0
    %2788 = vmatprep.mubr.f32.mxu0 0.0
    %v2789 = vand.u32 %v1306, 4294901760
    %2790 = vmatmul.mubr.f32.gmra.mxu0 %v2789
    %v2791 = vpop.f32.mrf.mxu0
    %v2792 = vadd.f32 %v2653, %v2791
    %v2793 = vpop.f32.mrf.mxu0
    %2794 = vmatprep.mubr.f32.mxu0 0.0
    %v2795 = vand.u32 %v1307, 4294901760
    %2796 = vmatmul.mubr.f32.gmra.mxu0 %v2795
    %v2797 = vpop.f32.mrf.mxu0
    %v2798 = vadd.f32 %v2661, %v2797
    %v2799 = vpop.f32.mrf.mxu0
    %2800 = vdwg.mxu0
    %2801 = vmatprep.subr.mxu0 0.0
    %v2802 = vand.u32 %v1348, 4294901760
    %2803 = vmatpush1.msra.mxu0 %v2802
    %2804 = vmatprep.subr.mxu0 0.0
    %v2805 = vand.u32 %v1347, 4294901760
    %2806 = vmatpush1.msra.mxu0 %v2805
    %2807 = vmatprep.subr.mxu0 0.0
    %v2808 = vand.u32 %v1346, 4294901760
    %2809 = vmatpush1.msra.mxu0 %v2808
    %2810 = vmatprep.subr.mxu0 0.0
    %v2811 = vand.u32 %v1345, 4294901760
    %2812 = vmatpush1.msra.mxu0 %v2811
    %2813 = vmatprep.subr.mxu0 0.0
    %v2814 = vand.u32 %v1344, 4294901760
    %2815 = vmatpush1.msra.mxu0 %v2814
    %2816 = vmatprep.subr.mxu0 0.0
    %v2817 = vand.u32 %v1343, 4294901760
    %2818 = vmatpush1.msra.mxu0 %v2817
    %2819 = vmatprep.subr.mxu0 0.0
    %v2820 = vand.u32 %v1342, 4294901760
    %2821 = vmatpush1.msra.mxu0 %v2820
    %2822 = vmatprep.subr.mxu0 0.0
    %v2823 = vand.u32 %v1341, 4294901760
    %2824 = vmatpush1.msra.mxu0 %v2823
    %2825 = vmatprep.subr.mxu0 0.0
    %v2826 = vand.u32 %v1340, 4294901760
    %2827 = vmatpush1.msra.mxu0 %v2826
    %2828 = vmatprep.subr.mxu0 0.0
    %v2829 = vand.u32 %v1339, 4294901760
    %2830 = vmatpush1.msra.mxu0 %v2829
    %2831 = vmatprep.subr.mxu0 0.0
    %v2832 = vand.u32 %v1338, 4294901760
    %2833 = vmatpush1.msra.mxu0 %v2832
    %2834 = vmatprep.subr.mxu0 0.0
    %v2835 = vand.u32 %v1337, 4294901760
    %2836 = vmatpush1.msra.mxu0 %v2835
    %2837 = vmatprep.subr.mxu0 0.0
    %v2838 = vand.u32 %v1336, 4294901760
    %2839 = vmatpush1.msra.mxu0 %v2838
    %2840 = vmatprep.subr.mxu0 0.0
    %v2841 = vand.u32 %v1335, 4294901760
    %2842 = vmatpush1.msra.mxu0 %v2841
    %2843 = vmatprep.subr.mxu0 0.0
    %v2844 = vand.u32 %v1334, 4294901760
    %2845 = vmatpush1.msra.mxu0 %v2844
    %2846 = vmatprep.subr.mxu0 0.0
    %v2847 = vand.u32 %v1333, 4294901760
    %2848 = vmatpush1.msra.mxu0 %v2847
    %2849 = vmatprep.subr.mxu0 0.0
    %2850 = vmatpush2.msra.mxu0 0.0
    %2851 = vmatprep.subr.mxu0 0.0
    %2852 = vmatpush2.msra.mxu0 0.0
    %2853 = vmatprep.subr.mxu0 0.0
    %2854 = vmatpush2.msra.mxu0 0.0
    %2855 = vmatprep.subr.mxu0 0.0
    %2856 = vmatpush2.msra.mxu0 0.0
    %2857 = vmatprep.subr.mxu0 0.0
    %2858 = vmatpush2.msra.mxu0 0.0
    %2859 = vmatprep.subr.mxu0 0.0
    %2860 = vmatpush2.msra.mxu0 0.0
    %2861 = vmatprep.subr.mxu0 0.0
    %2862 = vmatpush2.msra.mxu0 0.0
    %2863 = vmatprep.subr.mxu0 0.0
    %2864 = vmatpush2.msra.mxu0 0.0
    %2865 = vmatprep.subr.mxu0 0.0
    %2866 = vmatpush2.msra.mxu0 0.0
    %2867 = vmatprep.subr.mxu0 0.0
    %2868 = vmatpush2.msra.mxu0 0.0
    %2869 = vmatprep.subr.mxu0 0.0
    %2870 = vmatpush2.msra.mxu0 0.0
    %2871 = vmatprep.subr.mxu0 0.0
    %2872 = vmatpush2.msra.mxu0 0.0
    %2873 = vmatprep.subr.mxu0 0.0
    %2874 = vmatpush2.msra.mxu0 0.0
    %2875 = vmatprep.subr.mxu0 0.0
    %2876 = vmatpush2.msra.mxu0 0.0
    %2877 = vmatprep.subr.mxu0 0.0
    %2878 = vmatpush2.msra.mxu0 0.0
    %2879 = vmatprep.subr.mxu0 0.0
    %2880 = vmatpush2.msra.mxu0 0.0
    %2881 = vmatprep.mubr.f32.mxu0 0.0
    %v2882 = vand.u32 %v1304, 4294901760
    %2883 = vmatmul.mubr.f32.gmra.mxu0 %v2882
    %v2884 = vpop.f32.mrf.mxu0
    %v2885 = vadd.f32 %v2780, %v2884
    %v2886 = vpop.f32.mrf.mxu0
    %2887 = vmatprep.mubr.f32.mxu0 0.0
    %v2888 = vand.u32 %v1305, 4294901760
    %2889 = vmatmul.mubr.f32.gmra.mxu0 %v2888
    %v2890 = vpop.f32.mrf.mxu0
    %v2891 = vadd.f32 %v2786, %v2890
    %v2892 = vpop.f32.mrf.mxu0
    %2893 = vmatprep.mubr.f32.mxu0 0.0
    %v2894 = vand.u32 %v1306, 4294901760
    %2895 = vmatmul.mubr.f32.gmra.mxu0 %v2894
    %v2896 = vpop.f32.mrf.mxu0
    %v2897 = vadd.f32 %v2792, %v2896
    %v2898 = vpop.f32.mrf.mxu0
    %2899 = vmatprep.mubr.f32.mxu0 0.0
    %v2900 = vand.u32 %v1307, 4294901760
    %2901 = vmatmul.mubr.f32.gmra.mxu0 %v2900
    %v2902 = vpop.f32.mrf.mxu0
    %v2903 = vadd.f32 %v2798, %v2902
    %v2904 = vpop.f32.mrf.mxu0
    %2905 = vdwg.mxu0
    %s2906 = scalar_lea.vmem [#allocation7], 256
    %v2907 = vld [vmem:[%s2906] sm:$0xff]
    %v2908 = vld [vmem:[%s2906 + $0x8] sm:$0xff]
    %v2909 = vld [vmem:[%s2906 + $0x10] sm:$0xff]
    %v2910 = vld [vmem:[%s2906 + $0x18] sm:$0xff]
    %v2911 = vld [vmem:[%s2906 + $0x20] sm:$0xff]
    %v2912 = vld [vmem:[%s2906 + $0x28] sm:$0xff]
    %v2913 = vld [vmem:[%s2906 + $0x30] sm:$0xff]
    %v2914 = vld [vmem:[%s2906 + $0x38] sm:$0xff]
    %v2915 = vld [vmem:[%s2906 + $0x40] sm:$0xff]
    %v2916 = vld [vmem:[%s2906 + $0x48] sm:$0xff]
    %v2917 = vld [vmem:[%s2906 + $0x50] sm:$0xff]
    %v2918 = vld [vmem:[%s2906 + $0x58] sm:$0xff]
    %v2919 = vld [vmem:[%s2906 + $0x60] sm:$0xff]
    %v2920 = vld [vmem:[%s2906 + $0x68] sm:$0xff]
    %v2921 = vld [vmem:[%s2906 + $0x70] sm:$0xff]
    %v2922 = vld [vmem:[%s2906 + $0x78] sm:$0xff]
    %2923 = vmatprep.subr.mxu0 0.0
    %v2924 = vand.u32 %v2922, 4294901760
    %2925 = vmatpush1.msra.mxu0 %v2924
    %2926 = vmatprep.subr.mxu0 0.0
    %v2927 = vand.u32 %v2921, 4294901760
    %2928 = vmatpush1.msra.mxu0 %v2927
    %2929 = vmatprep.subr.mxu0 0.0
    %v2930 = vand.u32 %v2920, 4294901760
    %2931 = vmatpush1.msra.mxu0 %v2930
    %2932 = vmatprep.subr.mxu0 0.0
    %v2933 = vand.u32 %v2919, 4294901760
    %2934 = vmatpush1.msra.mxu0 %v2933
    %2935 = vmatprep.subr.mxu0 0.0
    %v2936 = vand.u32 %v2918, 4294901760
    %2937 = vmatpush1.msra.mxu0 %v2936
    %2938 = vmatprep.subr.mxu0 0.0
    %v2939 = vand.u32 %v2917, 4294901760
    %2940 = vmatpush1.msra.mxu0 %v2939
    %2941 = vmatprep.subr.mxu0 0.0
    %v2942 = vand.u32 %v2916, 4294901760
    %2943 = vmatpush1.msra.mxu0 %v2942
    %2944 = vmatprep.subr.mxu0 0.0
    %v2945 = vand.u32 %v2915, 4294901760
    %2946 = vmatpush1.msra.mxu0 %v2945
    %2947 = vmatprep.subr.mxu0 0.0
    %v2948 = vand.u32 %v2914, 4294901760
    %2949 = vmatpush1.msra.mxu0 %v2948
    %2950 = vmatprep.subr.mxu0 0.0
    %v2951 = vand.u32 %v2913, 4294901760
    %2952 = vmatpush1.msra.mxu0 %v2951
    %2953 = vmatprep.subr.mxu0 0.0
    %v2954 = vand.u32 %v2912, 4294901760
    %2955 = vmatpush1.msra.mxu0 %v2954
    %2956 = vmatprep.subr.mxu0 0.0
    %v2957 = vand.u32 %v2911, 4294901760
    %2958 = vmatpush1.msra.mxu0 %v2957
    %2959 = vmatprep.subr.mxu0 0.0
    %v2960 = vand.u32 %v2910, 4294901760
    %2961 = vmatpush1.msra.mxu0 %v2960
    %2962 = vmatprep.subr.mxu0 0.0
    %v2963 = vand.u32 %v2909, 4294901760
    %2964 = vmatpush1.msra.mxu0 %v2963
    %2965 = vmatprep.subr.mxu0 0.0
    %v2966 = vand.u32 %v2908, 4294901760
    %2967 = vmatpush1.msra.mxu0 %v2966
    %2968 = vmatprep.subr.mxu0 0.0
    %v2969 = vand.u32 %v2907, 4294901760
    %2970 = vmatpush1.msra.mxu0 %v2969
    %2971 = vmatprep.subr.mxu0 0.0
    %2972 = vmatpush2.msra.mxu0 0.0
    %2973 = vmatprep.subr.mxu0 0.0
    %2974 = vmatpush2.msra.mxu0 0.0
    %2975 = vmatprep.subr.mxu0 0.0
    %2976 = vmatpush2.msra.mxu0 0.0
    %2977 = vmatprep.subr.mxu0 0.0
    %2978 = vmatpush2.msra.mxu0 0.0
    %2979 = vmatprep.subr.mxu0 0.0
    %2980 = vmatpush2.msra.mxu0 0.0
    %2981 = vmatprep.subr.mxu0 0.0
    %2982 = vmatpush2.msra.mxu0 0.0
    %2983 = vmatprep.subr.mxu0 0.0
    %2984 = vmatpush2.msra.mxu0 0.0
    %2985 = vmatprep.subr.mxu0 0.0
    %2986 = vmatpush2.msra.mxu0 0.0
    %2987 = vmatprep.subr.mxu0 0.0
    %2988 = vmatpush2.msra.mxu0 0.0
    %2989 = vmatprep.subr.mxu0 0.0
    %2990 = vmatpush2.msra.mxu0 0.0
    %2991 = vmatprep.subr.mxu0 0.0
    %2992 = vmatpush2.msra.mxu0 0.0
    %2993 = vmatprep.subr.mxu0 0.0
    %2994 = vmatpush2.msra.mxu0 0.0
    %2995 = vmatprep.subr.mxu0 0.0
    %2996 = vmatpush2.msra.mxu0 0.0
    %2997 = vmatprep.subr.mxu0 0.0
    %2998 = vmatpush2.msra.mxu0 0.0
    %2999 = vmatprep.subr.mxu0 0.0
    %3000 = vmatpush2.msra.mxu0 0.0
    %3001 = vmatprep.subr.mxu0 0.0
    %3002 = vmatpush2.msra.mxu0 0.0
    %3003 = vmatprep.mubr.f32.mxu0 0.0
    %v3004 = vand.u32 %v1329, 4294901760
    %v3005 = vsub.f32 %v1329, %v3004
    %v3006 = vand.u32 %v3005, 4294901760
    %v3007 = vsub.f32 %v3005, %v3006
    %v3008 = vand.u32 %v3007, 4294901760
    %3009 = vmatmul.mubr.f32.gmra.mxu0 %v3008
    %v3010 = vpop.f32.mrf.mxu0
    %v3011 = vadd.f32 0.0, %v3010
    %v3012 = vpop.f32.mrf.mxu0
    %3013 = vmatprep.mubr.f32.mxu0 0.0
    %v3014 = vand.u32 %v1330, 4294901760
    %v3015 = vsub.f32 %v1330, %v3014
    %v3016 = vand.u32 %v3015, 4294901760
    %v3017 = vsub.f32 %v3015, %v3016
    %v3018 = vand.u32 %v3017, 4294901760
    %3019 = vmatmul.mubr.f32.gmra.mxu0 %v3018
    %v3020 = vpop.f32.mrf.mxu0
    %v3021 = vadd.f32 0.0, %v3020
    %v3022 = vpop.f32.mrf.mxu0
    %3023 = vmatprep.mubr.f32.mxu0 0.0
    %v3024 = vand.u32 %v1331, 4294901760
    %v3025 = vsub.f32 %v1331, %v3024
    %v3026 = vand.u32 %v3025, 4294901760
    %v3027 = vsub.f32 %v3025, %v3026
    %v3028 = vand.u32 %v3027, 4294901760
    %3029 = vmatmul.mubr.f32.gmra.mxu0 %v3028
    %v3030 = vpop.f32.mrf.mxu0
    %v3031 = vadd.f32 0.0, %v3030
    %v3032 = vpop.f32.mrf.mxu0
    %3033 = vmatprep.mubr.f32.mxu0 0.0
    %v3034 = vand.u32 %v1332, 4294901760
    %v3035 = vsub.f32 %v1332, %v3034
    %v3036 = vand.u32 %v3035, 4294901760
    %v3037 = vsub.f32 %v3035, %v3036
    %v3038 = vand.u32 %v3037, 4294901760
    %3039 = vmatmul.mubr.f32.gmra.mxu0 %v3038
    %v3040 = vpop.f32.mrf.mxu0
    %v3041 = vadd.f32 0.0, %v3040
    %v3042 = vpop.f32.mrf.mxu0
    %3043 = vdwg.mxu0
    %3044 = vmatprep.subr.mxu0 0.0
    %v3045 = vand.u32 %v2922, 4294901760
    %v3046 = vsub.f32 %v2922, %v3045
    %v3047 = vand.u32 %v3046, 4294901760
    %v3048 = vsub.f32 %v3046, %v3047
    %v3049 = vand.u32 %v3048, 4294901760
    %3050 = vmatpush1.msra.mxu0 %v3049
    %3051 = vmatprep.subr.mxu0 0.0
    %v3052 = vand.u32 %v2921, 4294901760
    %v3053 = vsub.f32 %v2921, %v3052
    %v3054 = vand.u32 %v3053, 4294901760
    %v3055 = vsub.f32 %v3053, %v3054
    %v3056 = vand.u32 %v3055, 4294901760
    %3057 = vmatpush1.msra.mxu0 %v3056
    %3058 = vmatprep.subr.mxu0 0.0
    %v3059 = vand.u32 %v2920, 4294901760
    %v3060 = vsub.f32 %v2920, %v3059
    %v3061 = vand.u32 %v3060, 4294901760
    %v3062 = vsub.f32 %v3060, %v3061
    %v3063 = vand.u32 %v3062, 4294901760
    %3064 = vmatpush1.msra.mxu0 %v3063
    %3065 = vmatprep.subr.mxu0 0.0
    %v3066 = vand.u32 %v2919, 4294901760
    %v3067 = vsub.f32 %v2919, %v3066
    %v3068 = vand.u32 %v3067, 4294901760
    %v3069 = vsub.f32 %v3067, %v3068
    %v3070 = vand.u32 %v3069, 4294901760
    %3071 = vmatpush1.msra.mxu0 %v3070
    %3072 = vmatprep.subr.mxu0 0.0
    %v3073 = vand.u32 %v2918, 4294901760
    %v3074 = vsub.f32 %v2918, %v3073
    %v3075 = vand.u32 %v3074, 4294901760
    %v3076 = vsub.f32 %v3074, %v3075
    %v3077 = vand.u32 %v3076, 4294901760
    %3078 = vmatpush1.msra.mxu0 %v3077
    %3079 = vmatprep.subr.mxu0 0.0
    %v3080 = vand.u32 %v2917, 4294901760
    %v3081 = vsub.f32 %v2917, %v3080
    %v3082 = vand.u32 %v3081, 4294901760
    %v3083 = vsub.f32 %v3081, %v3082
    %v3084 = vand.u32 %v3083, 4294901760
    %3085 = vmatpush1.msra.mxu0 %v3084
    %3086 = vmatprep.subr.mxu0 0.0
    %v3087 = vand.u32 %v2916, 4294901760
    %v3088 = vsub.f32 %v2916, %v3087
    %v3089 = vand.u32 %v3088, 4294901760
    %v3090 = vsub.f32 %v3088, %v3089
    %v3091 = vand.u32 %v3090, 4294901760
    %3092 = vmatpush1.msra.mxu0 %v3091
    %3093 = vmatprep.subr.mxu0 0.0
    %v3094 = vand.u32 %v2915, 4294901760
    %v3095 = vsub.f32 %v2915, %v3094
    %v3096 = vand.u32 %v3095, 4294901760
    %v3097 = vsub.f32 %v3095, %v3096
    %v3098 = vand.u32 %v3097, 4294901760
    %3099 = vmatpush1.msra.mxu0 %v3098
    %3100 = vmatprep.subr.mxu0 0.0
    %v3101 = vand.u32 %v2914, 4294901760
    %v3102 = vsub.f32 %v2914, %v3101
    %v3103 = vand.u32 %v3102, 4294901760
    %v3104 = vsub.f32 %v3102, %v3103
    %v3105 = vand.u32 %v3104, 4294901760
    %3106 = vmatpush1.msra.mxu0 %v3105
    %3107 = vmatprep.subr.mxu0 0.0
    %v3108 = vand.u32 %v2913, 4294901760
    %v3109 = vsub.f32 %v2913, %v3108
    %v3110 = vand.u32 %v3109, 4294901760
    %v3111 = vsub.f32 %v3109, %v3110
    %v3112 = vand.u32 %v3111, 4294901760
    %3113 = vmatpush1.msra.mxu0 %v3112
    %3114 = vmatprep.subr.mxu0 0.0
    %v3115 = vand.u32 %v2912, 4294901760
    %v3116 = vsub.f32 %v2912, %v3115
    %v3117 = vand.u32 %v3116, 4294901760
    %v3118 = vsub.f32 %v3116, %v3117
    %v3119 = vand.u32 %v3118, 4294901760
    %3120 = vmatpush1.msra.mxu0 %v3119
    %3121 = vmatprep.subr.mxu0 0.0
    %v3122 = vand.u32 %v2911, 4294901760
    %v3123 = vsub.f32 %v2911, %v3122
    %v3124 = vand.u32 %v3123, 4294901760
    %v3125 = vsub.f32 %v3123, %v3124
    %v3126 = vand.u32 %v3125, 4294901760
    %3127 = vmatpush1.msra.mxu0 %v3126
    %3128 = vmatprep.subr.mxu0 0.0
    %v3129 = vand.u32 %v2910, 4294901760
    %v3130 = vsub.f32 %v2910, %v3129
    %v3131 = vand.u32 %v3130, 4294901760
    %v3132 = vsub.f32 %v3130, %v3131
    %v3133 = vand.u32 %v3132, 4294901760
    %3134 = vmatpush1.msra.mxu0 %v3133
    %3135 = vmatprep.subr.mxu0 0.0
    %v3136 = vand.u32 %v2909, 4294901760
    %v3137 = vsub.f32 %v2909, %v3136
    %v3138 = vand.u32 %v3137, 4294901760
    %v3139 = vsub.f32 %v3137, %v3138
    %v3140 = vand.u32 %v3139, 4294901760
    %3141 = vmatpush1.msra.mxu0 %v3140
    %3142 = vmatprep.subr.mxu0 0.0
    %v3143 = vand.u32 %v2908, 4294901760
    %v3144 = vsub.f32 %v2908, %v3143
    %v3145 = vand.u32 %v3144, 4294901760
    %v3146 = vsub.f32 %v3144, %v3145
    %v3147 = vand.u32 %v3146, 4294901760
    %3148 = vmatpush1.msra.mxu0 %v3147
    %3149 = vmatprep.subr.mxu0 0.0
    %v3150 = vand.u32 %v2907, 4294901760
    %v3151 = vsub.f32 %v2907, %v3150
    %v3152 = vand.u32 %v3151, 4294901760
    %v3153 = vsub.f32 %v3151, %v3152
    %v3154 = vand.u32 %v3153, 4294901760
    %3155 = vmatpush1.msra.mxu0 %v3154
    %3156 = vmatprep.subr.mxu0 0.0
    %3157 = vmatpush2.msra.mxu0 0.0
    %3158 = vmatprep.subr.mxu0 0.0
    %3159 = vmatpush2.msra.mxu0 0.0
    %3160 = vmatprep.subr.mxu0 0.0
    %3161 = vmatpush2.msra.mxu0 0.0
    %3162 = vmatprep.subr.mxu0 0.0
    %3163 = vmatpush2.msra.mxu0 0.0
    %3164 = vmatprep.subr.mxu0 0.0
    %3165 = vmatpush2.msra.mxu0 0.0
    %3166 = vmatprep.subr.mxu0 0.0
    %3167 = vmatpush2.msra.mxu0 0.0
    %3168 = vmatprep.subr.mxu0 0.0
    %3169 = vmatpush2.msra.mxu0 0.0
    %3170 = vmatprep.subr.mxu0 0.0
    %3171 = vmatpush2.msra.mxu0 0.0
    %3172 = vmatprep.subr.mxu0 0.0
    %3173 = vmatpush2.msra.mxu0 0.0
    %3174 = vmatprep.subr.mxu0 0.0
    %3175 = vmatpush2.msra.mxu0 0.0
    %3176 = vmatprep.subr.mxu0 0.0
    %3177 = vmatpush2.msra.mxu0 0.0
    %3178 = vmatprep.subr.mxu0 0.0
    %3179 = vmatpush2.msra.mxu0 0.0
    %3180 = vmatprep.subr.mxu0 0.0
    %3181 = vmatpush2.msra.mxu0 0.0
    %3182 = vmatprep.subr.mxu0 0.0
    %3183 = vmatpush2.msra.mxu0 0.0
    %3184 = vmatprep.subr.mxu0 0.0
    %3185 = vmatpush2.msra.mxu0 0.0
    %3186 = vmatprep.subr.mxu0 0.0
    %3187 = vmatpush2.msra.mxu0 0.0
    %3188 = vmatprep.mubr.f32.mxu0 0.0
    %v3189 = vand.u32 %v1329, 4294901760
    %3190 = vmatmul.mubr.f32.gmra.mxu0 %v3189
    %v3191 = vpop.f32.mrf.mxu0
    %v3192 = vadd.f32 %v3011, %v3191
    %v3193 = vpop.f32.mrf.mxu0
    %3194 = vmatprep.mubr.f32.mxu0 0.0
    %v3195 = vand.u32 %v1330, 4294901760
    %3196 = vmatmul.mubr.f32.gmra.mxu0 %v3195
    %v3197 = vpop.f32.mrf.mxu0
    %v3198 = vadd.f32 %v3021, %v3197
    %v3199 = vpop.f32.mrf.mxu0
    %3200 = vmatprep.mubr.f32.mxu0 0.0
    %v3201 = vand.u32 %v1331, 4294901760
    %3202 = vmatmul.mubr.f32.gmra.mxu0 %v3201
    %v3203 = vpop.f32.mrf.mxu0
    %v3204 = vadd.f32 %v3031, %v3203
    %v3205 = vpop.f32.mrf.mxu0
    %3206 = vmatprep.mubr.f32.mxu0 0.0
    %v3207 = vand.u32 %v1332, 4294901760
    %3208 = vmatmul.mubr.f32.gmra.mxu0 %v3207
    %v3209 = vpop.f32.mrf.mxu0
    %v3210 = vadd.f32 %v3041, %v3209
    %v3211 = vpop.f32.mrf.mxu0
    %3212 = vdwg.mxu0
    %3213 = vmatprep.subr.mxu0 0.0
    %v3214 = vand.u32 %v2922, 4294901760
    %v3215 = vsub.f32 %v2922, %v3214
    %3216 = vmatpush1.msra.mxu0 %v3215
    %3217 = vmatprep.subr.mxu0 0.0
    %v3218 = vand.u32 %v2921, 4294901760
    %v3219 = vsub.f32 %v2921, %v3218
    %3220 = vmatpush1.msra.mxu0 %v3219
    %3221 = vmatprep.subr.mxu0 0.0
    %v3222 = vand.u32 %v2920, 4294901760
    %v3223 = vsub.f32 %v2920, %v3222
    %3224 = vmatpush1.msra.mxu0 %v3223
    %3225 = vmatprep.subr.mxu0 0.0
    %v3226 = vand.u32 %v2919, 4294901760
    %v3227 = vsub.f32 %v2919, %v3226
    %3228 = vmatpush1.msra.mxu0 %v3227
    %3229 = vmatprep.subr.mxu0 0.0
    %v3230 = vand.u32 %v2918, 4294901760
    %v3231 = vsub.f32 %v2918, %v3230
    %3232 = vmatpush1.msra.mxu0 %v3231
    %3233 = vmatprep.subr.mxu0 0.0
    %v3234 = vand.u32 %v2917, 4294901760
    %v3235 = vsub.f32 %v2917, %v3234
    %3236 = vmatpush1.msra.mxu0 %v3235
    %3237 = vmatprep.subr.mxu0 0.0
    %v3238 = vand.u32 %v2916, 4294901760
    %v3239 = vsub.f32 %v2916, %v3238
    %3240 = vmatpush1.msra.mxu0 %v3239
    %3241 = vmatprep.subr.mxu0 0.0
    %v3242 = vand.u32 %v2915, 4294901760
    %v3243 = vsub.f32 %v2915, %v3242
    %3244 = vmatpush1.msra.mxu0 %v3243
    %3245 = vmatprep.subr.mxu0 0.0
    %v3246 = vand.u32 %v2914, 4294901760
    %v3247 = vsub.f32 %v2914, %v3246
    %3248 = vmatpush1.msra.mxu0 %v3247
    %3249 = vmatprep.subr.mxu0 0.0
    %v3250 = vand.u32 %v2913, 4294901760
    %v3251 = vsub.f32 %v2913, %v3250
    %3252 = vmatpush1.msra.mxu0 %v3251
    %3253 = vmatprep.subr.mxu0 0.0
    %v3254 = vand.u32 %v2912, 4294901760
    %v3255 = vsub.f32 %v2912, %v3254
    %3256 = vmatpush1.msra.mxu0 %v3255
    %3257 = vmatprep.subr.mxu0 0.0
    %v3258 = vand.u32 %v2911, 4294901760
    %v3259 = vsub.f32 %v2911, %v3258
    %3260 = vmatpush1.msra.mxu0 %v3259
    %3261 = vmatprep.subr.mxu0 0.0
    %v3262 = vand.u32 %v2910, 4294901760
    %v3263 = vsub.f32 %v2910, %v3262
    %3264 = vmatpush1.msra.mxu0 %v3263
    %3265 = vmatprep.subr.mxu0 0.0
    %v3266 = vand.u32 %v2909, 4294901760
    %v3267 = vsub.f32 %v2909, %v3266
    %3268 = vmatpush1.msra.mxu0 %v3267
    %3269 = vmatprep.subr.mxu0 0.0
    %v3270 = vand.u32 %v2908, 4294901760
    %v3271 = vsub.f32 %v2908, %v3270
    %3272 = vmatpush1.msra.mxu0 %v3271
    %3273 = vmatprep.subr.mxu0 0.0
    %v3274 = vand.u32 %v2907, 4294901760
    %v3275 = vsub.f32 %v2907, %v3274
    %3276 = vmatpush1.msra.mxu0 %v3275
    %3277 = vmatprep.subr.mxu0 0.0
    %3278 = vmatpush2.msra.mxu0 0.0
    %3279 = vmatprep.subr.mxu0 0.0
    %3280 = vmatpush2.msra.mxu0 0.0
    %3281 = vmatprep.subr.mxu0 0.0
    %3282 = vmatpush2.msra.mxu0 0.0
    %3283 = vmatprep.subr.mxu0 0.0
    %3284 = vmatpush2.msra.mxu0 0.0
    %3285 = vmatprep.subr.mxu0 0.0
    %3286 = vmatpush2.msra.mxu0 0.0
    %3287 = vmatprep.subr.mxu0 0.0
    %3288 = vmatpush2.msra.mxu0 0.0
    %3289 = vmatprep.subr.mxu0 0.0
    %3290 = vmatpush2.msra.mxu0 0.0
    %3291 = vmatprep.subr.mxu0 0.0
    %3292 = vmatpush2.msra.mxu0 0.0
    %3293 = vmatprep.subr.mxu0 0.0
    %3294 = vmatpush2.msra.mxu0 0.0
    %3295 = vmatprep.subr.mxu0 0.0
    %3296 = vmatpush2.msra.mxu0 0.0
    %3297 = vmatprep.subr.mxu0 0.0
    %3298 = vmatpush2.msra.mxu0 0.0
    %3299 = vmatprep.subr.mxu0 0.0
    %3300 = vmatpush2.msra.mxu0 0.0
    %3301 = vmatprep.subr.mxu0 0.0
    %3302 = vmatpush2.msra.mxu0 0.0
    %3303 = vmatprep.subr.mxu0 0.0
    %3304 = vmatpush2.msra.mxu0 0.0
    %3305 = vmatprep.subr.mxu0 0.0
    %3306 = vmatpush2.msra.mxu0 0.0
    %3307 = vmatprep.subr.mxu0 0.0
    %3308 = vmatpush2.msra.mxu0 0.0
    %3309 = vmatprep.mubr.f32.mxu0 0.0
    %v3310 = vand.u32 %v1329, 4294901760
    %v3311 = vsub.f32 %v1329, %v3310
    %3312 = vmatmul.mubr.f32.gmra.mxu0 %v3311
    %v3313 = vpop.f32.mrf.mxu0
    %v3314 = vadd.f32 %v3192, %v3313
    %v3315 = vpop.f32.mrf.mxu0
    %3316 = vmatprep.mubr.f32.mxu0 0.0
    %v3317 = vand.u32 %v1330, 4294901760
    %v3318 = vsub.f32 %v1330, %v3317
    %3319 = vmatmul.mubr.f32.gmra.mxu0 %v3318
    %v3320 = vpop.f32.mrf.mxu0
    %v3321 = vadd.f32 %v3198, %v3320
    %v3322 = vpop.f32.mrf.mxu0
    %3323 = vmatprep.mubr.f32.mxu0 0.0
    %v3324 = vand.u32 %v1331, 4294901760
    %v3325 = vsub.f32 %v1331, %v3324
    %3326 = vmatmul.mubr.f32.gmra.mxu0 %v3325
    %v3327 = vpop.f32.mrf.mxu0
    %v3328 = vadd.f32 %v3204, %v3327
    %v3329 = vpop.f32.mrf.mxu0
    %3330 = vmatprep.mubr.f32.mxu0 0.0
    %v3331 = vand.u32 %v1332, 4294901760
    %v3332 = vsub.f32 %v1332, %v3331
    %3333 = vmatmul.mubr.f32.gmra.mxu0 %v3332
    %v3334 = vpop.f32.mrf.mxu0
    %v3335 = vadd.f32 %v3210, %v3334
    %v3336 = vpop.f32.mrf.mxu0
    %3337 = vdwg.mxu0
    %3338 = vmatprep.subr.mxu0 0.0
    %v3339 = vand.u32 %v2922, 4294901760
    %3340 = vmatpush1.msra.mxu0 %v3339
    %3341 = vmatprep.subr.mxu0 0.0
    %v3342 = vand.u32 %v2921, 4294901760
    %3343 = vmatpush1.msra.mxu0 %v3342
    %3344 = vmatprep.subr.mxu0 0.0
    %v3345 = vand.u32 %v2920, 4294901760
    %3346 = vmatpush1.msra.mxu0 %v3345
    %3347 = vmatprep.subr.mxu0 0.0
    %v3348 = vand.u32 %v2919, 4294901760
    %3349 = vmatpush1.msra.mxu0 %v3348
    %3350 = vmatprep.subr.mxu0 0.0
    %v3351 = vand.u32 %v2918, 4294901760
    %3352 = vmatpush1.msra.mxu0 %v3351
    %3353 = vmatprep.subr.mxu0 0.0
    %v3354 = vand.u32 %v2917, 4294901760
    %3355 = vmatpush1.msra.mxu0 %v3354
    %3356 = vmatprep.subr.mxu0 0.0
    %v3357 = vand.u32 %v2916, 4294901760
    %3358 = vmatpush1.msra.mxu0 %v3357
    %3359 = vmatprep.subr.mxu0 0.0
    %v3360 = vand.u32 %v2915, 4294901760
    %3361 = vmatpush1.msra.mxu0 %v3360
    %3362 = vmatprep.subr.mxu0 0.0
    %v3363 = vand.u32 %v2914, 4294901760
    %3364 = vmatpush1.msra.mxu0 %v3363
    %3365 = vmatprep.subr.mxu0 0.0
    %v3366 = vand.u32 %v2913, 4294901760
    %3367 = vmatpush1.msra.mxu0 %v3366
    %3368 = vmatprep.subr.mxu0 0.0
    %v3369 = vand.u32 %v2912, 4294901760
    %3370 = vmatpush1.msra.mxu0 %v3369
    %3371 = vmatprep.subr.mxu0 0.0
    %v3372 = vand.u32 %v2911, 4294901760
    %3373 = vmatpush1.msra.mxu0 %v3372
    %3374 = vmatprep.subr.mxu0 0.0
    %v3375 = vand.u32 %v2910, 4294901760
    %3376 = vmatpush1.msra.mxu0 %v3375
    %3377 = vmatprep.subr.mxu0 0.0
    %v3378 = vand.u32 %v2909, 4294901760
    %3379 = vmatpush1.msra.mxu0 %v3378
    %3380 = vmatprep.subr.mxu0 0.0
    %v3381 = vand.u32 %v2908, 4294901760
    %3382 = vmatpush1.msra.mxu0 %v3381
    %3383 = vmatprep.subr.mxu0 0.0
    %v3384 = vand.u32 %v2907, 4294901760
    %3385 = vmatpush1.msra.mxu0 %v3384
    %3386 = vmatprep.subr.mxu0 0.0
    %3387 = vmatpush2.msra.mxu0 0.0
    %3388 = vmatprep.subr.mxu0 0.0
    %3389 = vmatpush2.msra.mxu0 0.0
    %3390 = vmatprep.subr.mxu0 0.0
    %3391 = vmatpush2.msra.mxu0 0.0
    %3392 = vmatprep.subr.mxu0 0.0
    %3393 = vmatpush2.msra.mxu0 0.0
    %3394 = vmatprep.subr.mxu0 0.0
    %3395 = vmatpush2.msra.mxu0 0.0
    %3396 = vmatprep.subr.mxu0 0.0
    %3397 = vmatpush2.msra.mxu0 0.0
    %3398 = vmatprep.subr.mxu0 0.0
    %3399 = vmatpush2.msra.mxu0 0.0
    %3400 = vmatprep.subr.mxu0 0.0
    %3401 = vmatpush2.msra.mxu0 0.0
    %3402 = vmatprep.subr.mxu0 0.0
    %3403 = vmatpush2.msra.mxu0 0.0
    %3404 = vmatprep.subr.mxu0 0.0
    %3405 = vmatpush2.msra.mxu0 0.0
    %3406 = vmatprep.subr.mxu0 0.0
    %3407 = vmatpush2.msra.mxu0 0.0
    %3408 = vmatprep.subr.mxu0 0.0
    %3409 = vmatpush2.msra.mxu0 0.0
    %3410 = vmatprep.subr.mxu0 0.0
    %3411 = vmatpush2.msra.mxu0 0.0
    %3412 = vmatprep.subr.mxu0 0.0
    %3413 = vmatpush2.msra.mxu0 0.0
    %3414 = vmatprep.subr.mxu0 0.0
    %3415 = vmatpush2.msra.mxu0 0.0
    %3416 = vmatprep.subr.mxu0 0.0
    %3417 = vmatpush2.msra.mxu0 0.0
    %3418 = vmatprep.mubr.f32.mxu0 0.0
    %v3419 = vand.u32 %v1329, 4294901760
    %v3420 = vsub.f32 %v1329, %v3419
    %v3421 = vand.u32 %v3420, 4294901760
    %3422 = vmatmul.mubr.f32.gmra.mxu0 %v3421
    %v3423 = vpop.f32.mrf.mxu0
    %v3424 = vadd.f32 %v3314, %v3423
    %v3425 = vpop.f32.mrf.mxu0
    %3426 = vmatprep.mubr.f32.mxu0 0.0
    %v3427 = vand.u32 %v1330, 4294901760
    %v3428 = vsub.f32 %v1330, %v3427
    %v3429 = vand.u32 %v3428, 4294901760
    %3430 = vmatmul.mubr.f32.gmra.mxu0 %v3429
    %v3431 = vpop.f32.mrf.mxu0
    %v3432 = vadd.f32 %v3321, %v3431
    %v3433 = vpop.f32.mrf.mxu0
    %3434 = vmatprep.mubr.f32.mxu0 0.0
    %v3435 = vand.u32 %v1331, 4294901760
    %v3436 = vsub.f32 %v1331, %v3435
    %v3437 = vand.u32 %v3436, 4294901760
    %3438 = vmatmul.mubr.f32.gmra.mxu0 %v3437
    %v3439 = vpop.f32.mrf.mxu0
    %v3440 = vadd.f32 %v3328, %v3439
    %v3441 = vpop.f32.mrf.mxu0
    %3442 = vmatprep.mubr.f32.mxu0 0.0
    %v3443 = vand.u32 %v1332, 4294901760
    %v3444 = vsub.f32 %v1332, %v3443
    %v3445 = vand.u32 %v3444, 4294901760
    %3446 = vmatmul.mubr.f32.gmra.mxu0 %v3445
    %v3447 = vpop.f32.mrf.mxu0
    %v3448 = vadd.f32 %v3335, %v3447
    %v3449 = vpop.f32.mrf.mxu0
    %3450 = vdwg.mxu0
    %3451 = vmatprep.subr.mxu0 0.0
    %v3452 = vand.u32 %v2922, 4294901760
    %v3453 = vsub.f32 %v2922, %v3452
    %v3454 = vand.u32 %v3453, 4294901760
    %3455 = vmatpush1.msra.mxu0 %v3454
    %3456 = vmatprep.subr.mxu0 0.0
    %v3457 = vand.u32 %v2921, 4294901760
    %v3458 = vsub.f32 %v2921, %v3457
    %v3459 = vand.u32 %v3458, 4294901760
    %3460 = vmatpush1.msra.mxu0 %v3459
    %3461 = vmatprep.subr.mxu0 0.0
    %v3462 = vand.u32 %v2920, 4294901760
    %v3463 = vsub.f32 %v2920, %v3462
    %v3464 = vand.u32 %v3463, 4294901760
    %3465 = vmatpush1.msra.mxu0 %v3464
    %3466 = vmatprep.subr.mxu0 0.0
    %v3467 = vand.u32 %v2919, 4294901760
    %v3468 = vsub.f32 %v2919, %v3467
    %v3469 = vand.u32 %v3468, 4294901760
    %3470 = vmatpush1.msra.mxu0 %v3469
    %3471 = vmatprep.subr.mxu0 0.0
    %v3472 = vand.u32 %v2918, 4294901760
    %v3473 = vsub.f32 %v2918, %v3472
    %v3474 = vand.u32 %v3473, 4294901760
    %3475 = vmatpush1.msra.mxu0 %v3474
    %3476 = vmatprep.subr.mxu0 0.0
    %v3477 = vand.u32 %v2917, 4294901760
    %v3478 = vsub.f32 %v2917, %v3477
    %v3479 = vand.u32 %v3478, 4294901760
    %3480 = vmatpush1.msra.mxu0 %v3479
    %3481 = vmatprep.subr.mxu0 0.0
    %v3482 = vand.u32 %v2916, 4294901760
    %v3483 = vsub.f32 %v2916, %v3482
    %v3484 = vand.u32 %v3483, 4294901760
    %3485 = vmatpush1.msra.mxu0 %v3484
    %3486 = vmatprep.subr.mxu0 0.0
    %v3487 = vand.u32 %v2915, 4294901760
    %v3488 = vsub.f32 %v2915, %v3487
    %v3489 = vand.u32 %v3488, 4294901760
    %3490 = vmatpush1.msra.mxu0 %v3489
    %3491 = vmatprep.subr.mxu0 0.0
    %v3492 = vand.u32 %v2914, 4294901760
    %v3493 = vsub.f32 %v2914, %v3492
    %v3494 = vand.u32 %v3493, 4294901760
    %3495 = vmatpush1.msra.mxu0 %v3494
    %3496 = vmatprep.subr.mxu0 0.0
    %v3497 = vand.u32 %v2913, 4294901760
    %v3498 = vsub.f32 %v2913, %v3497
    %v3499 = vand.u32 %v3498, 4294901760
    %3500 = vmatpush1.msra.mxu0 %v3499
    %3501 = vmatprep.subr.mxu0 0.0
    %v3502 = vand.u32 %v2912, 4294901760
    %v3503 = vsub.f32 %v2912, %v3502
    %v3504 = vand.u32 %v3503, 4294901760
    %3505 = vmatpush1.msra.mxu0 %v3504
    %3506 = vmatprep.subr.mxu0 0.0
    %v3507 = vand.u32 %v2911, 4294901760
    %v3508 = vsub.f32 %v2911, %v3507
    %v3509 = vand.u32 %v3508, 4294901760
    %3510 = vmatpush1.msra.mxu0 %v3509
    %3511 = vmatprep.subr.mxu0 0.0
    %v3512 = vand.u32 %v2910, 4294901760
    %v3513 = vsub.f32 %v2910, %v3512
    %v3514 = vand.u32 %v3513, 4294901760
    %3515 = vmatpush1.msra.mxu0 %v3514
    %3516 = vmatprep.subr.mxu0 0.0
    %v3517 = vand.u32 %v2909, 4294901760
    %v3518 = vsub.f32 %v2909, %v3517
    %v3519 = vand.u32 %v3518, 4294901760
    %3520 = vmatpush1.msra.mxu0 %v3519
    %3521 = vmatprep.subr.mxu0 0.0
    %v3522 = vand.u32 %v2908, 4294901760
    %v3523 = vsub.f32 %v2908, %v3522
    %v3524 = vand.u32 %v3523, 4294901760
    %3525 = vmatpush1.msra.mxu0 %v3524
    %3526 = vmatprep.subr.mxu0 0.0
    %v3527 = vand.u32 %v2907, 4294901760
    %v3528 = vsub.f32 %v2907, %v3527
    %v3529 = vand.u32 %v3528, 4294901760
    %3530 = vmatpush1.msra.mxu0 %v3529
    %3531 = vmatprep.subr.mxu0 0.0
    %3532 = vmatpush2.msra.mxu0 0.0
    %3533 = vmatprep.subr.mxu0 0.0
    %3534 = vmatpush2.msra.mxu0 0.0
    %3535 = vmatprep.subr.mxu0 0.0
    %3536 = vmatpush2.msra.mxu0 0.0
    %3537 = vmatprep.subr.mxu0 0.0
    %3538 = vmatpush2.msra.mxu0 0.0
    %3539 = vmatprep.subr.mxu0 0.0
    %3540 = vmatpush2.msra.mxu0 0.0
    %3541 = vmatprep.subr.mxu0 0.0
    %3542 = vmatpush2.msra.mxu0 0.0
    %3543 = vmatprep.subr.mxu0 0.0
    %3544 = vmatpush2.msra.mxu0 0.0
    %3545 = vmatprep.subr.mxu0 0.0
    %3546 = vmatpush2.msra.mxu0 0.0
    %3547 = vmatprep.subr.mxu0 0.0
    %3548 = vmatpush2.msra.mxu0 0.0
    %3549 = vmatprep.subr.mxu0 0.0
    %3550 = vmatpush2.msra.mxu0 0.0
    %3551 = vmatprep.subr.mxu0 0.0
    %3552 = vmatpush2.msra.mxu0 0.0
    %3553 = vmatprep.subr.mxu0 0.0
    %3554 = vmatpush2.msra.mxu0 0.0
    %3555 = vmatprep.subr.mxu0 0.0
    %3556 = vmatpush2.msra.mxu0 0.0
    %3557 = vmatprep.subr.mxu0 0.0
    %3558 = vmatpush2.msra.mxu0 0.0
    %3559 = vmatprep.subr.mxu0 0.0
    %3560 = vmatpush2.msra.mxu0 0.0
    %3561 = vmatprep.subr.mxu0 0.0
    %3562 = vmatpush2.msra.mxu0 0.0
    %3563 = vmatprep.mubr.f32.mxu0 0.0
    %v3564 = vand.u32 %v1329, 4294901760
    %3565 = vmatmul.mubr.f32.gmra.mxu0 %v3564
    %v3566 = vpop.f32.mrf.mxu0
    %v3567 = vadd.f32 %v3424, %v3566
    %v3568 = vpop.f32.mrf.mxu0
    %3569 = vmatprep.mubr.f32.mxu0 0.0
    %v3570 = vand.u32 %v1330, 4294901760
    %3571 = vmatmul.mubr.f32.gmra.mxu0 %v3570
    %v3572 = vpop.f32.mrf.mxu0
    %v3573 = vadd.f32 %v3432, %v3572
    %v3574 = vpop.f32.mrf.mxu0
    %3575 = vmatprep.mubr.f32.mxu0 0.0
    %v3576 = vand.u32 %v1331, 4294901760
    %3577 = vmatmul.mubr.f32.gmra.mxu0 %v3576
    %v3578 = vpop.f32.mrf.mxu0
    %v3579 = vadd.f32 %v3440, %v3578
    %v3580 = vpop.f32.mrf.mxu0
    %3581 = vmatprep.mubr.f32.mxu0 0.0
    %v3582 = vand.u32 %v1332, 4294901760
    %3583 = vmatmul.mubr.f32.gmra.mxu0 %v3582
    %v3584 = vpop.f32.mrf.mxu0
    %v3585 = vadd.f32 %v3448, %v3584
    %v3586 = vpop.f32.mrf.mxu0
    %3587 = vdwg.mxu0
    %3588 = vmatprep.subr.mxu0 0.0
    %v3589 = vand.u32 %v2922, 4294901760
    %3590 = vmatpush1.msra.mxu0 %v3589
    %3591 = vmatprep.subr.mxu0 0.0
    %v3592 = vand.u32 %v2921, 4294901760
    %3593 = vmatpush1.msra.mxu0 %v3592
    %3594 = vmatprep.subr.mxu0 0.0
    %v3595 = vand.u32 %v2920, 4294901760
    %3596 = vmatpush1.msra.mxu0 %v3595
    %3597 = vmatprep.subr.mxu0 0.0
    %v3598 = vand.u32 %v2919, 4294901760
    %3599 = vmatpush1.msra.mxu0 %v3598
    %3600 = vmatprep.subr.mxu0 0.0
    %v3601 = vand.u32 %v2918, 4294901760
    %3602 = vmatpush1.msra.mxu0 %v3601
    %3603 = vmatprep.subr.mxu0 0.0
    %v3604 = vand.u32 %v2917, 4294901760
    %3605 = vmatpush1.msra.mxu0 %v3604
    %3606 = vmatprep.subr.mxu0 0.0
    %v3607 = vand.u32 %v2916, 4294901760
    %3608 = vmatpush1.msra.mxu0 %v3607
    %3609 = vmatprep.subr.mxu0 0.0
    %v3610 = vand.u32 %v2915, 4294901760
    %3611 = vmatpush1.msra.mxu0 %v3610
    %3612 = vmatprep.subr.mxu0 0.0
    %v3613 = vand.u32 %v2914, 4294901760
    %3614 = vmatpush1.msra.mxu0 %v3613
    %3615 = vmatprep.subr.mxu0 0.0
    %v3616 = vand.u32 %v2913, 4294901760
    %3617 = vmatpush1.msra.mxu0 %v3616
    %3618 = vmatprep.subr.mxu0 0.0
    %v3619 = vand.u32 %v2912, 4294901760
    %3620 = vmatpush1.msra.mxu0 %v3619
    %3621 = vmatprep.subr.mxu0 0.0
    %v3622 = vand.u32 %v2911, 4294901760
    %3623 = vmatpush1.msra.mxu0 %v3622
    %3624 = vmatprep.subr.mxu0 0.0
    %v3625 = vand.u32 %v2910, 4294901760
    %3626 = vmatpush1.msra.mxu0 %v3625
    %3627 = vmatprep.subr.mxu0 0.0
    %v3628 = vand.u32 %v2909, 4294901760
    %3629 = vmatpush1.msra.mxu0 %v3628
    %3630 = vmatprep.subr.mxu0 0.0
    %v3631 = vand.u32 %v2908, 4294901760
    %3632 = vmatpush1.msra.mxu0 %v3631
    %3633 = vmatprep.subr.mxu0 0.0
    %v3634 = vand.u32 %v2907, 4294901760
    %3635 = vmatpush1.msra.mxu0 %v3634
    %3636 = vmatprep.subr.mxu0 0.0
    %3637 = vmatpush2.msra.mxu0 0.0
    %3638 = vmatprep.subr.mxu0 0.0
    %3639 = vmatpush2.msra.mxu0 0.0
    %3640 = vmatprep.subr.mxu0 0.0
    %3641 = vmatpush2.msra.mxu0 0.0
    %3642 = vmatprep.subr.mxu0 0.0
    %3643 = vmatpush2.msra.mxu0 0.0
    %3644 = vmatprep.subr.mxu0 0.0
    %3645 = vmatpush2.msra.mxu0 0.0
    %3646 = vmatprep.subr.mxu0 0.0
    %3647 = vmatpush2.msra.mxu0 0.0
    %3648 = vmatprep.subr.mxu0 0.0
    %3649 = vmatpush2.msra.mxu0 0.0
    %3650 = vmatprep.subr.mxu0 0.0
    %3651 = vmatpush2.msra.mxu0 0.0
    %3652 = vmatprep.subr.mxu0 0.0
    %3653 = vmatpush2.msra.mxu0 0.0
    %3654 = vmatprep.subr.mxu0 0.0
    %3655 = vmatpush2.msra.mxu0 0.0
    %3656 = vmatprep.subr.mxu0 0.0
    %3657 = vmatpush2.msra.mxu0 0.0
    %3658 = vmatprep.subr.mxu0 0.0
    %3659 = vmatpush2.msra.mxu0 0.0
    %3660 = vmatprep.subr.mxu0 0.0
    %3661 = vmatpush2.msra.mxu0 0.0
    %3662 = vmatprep.subr.mxu0 0.0
    %3663 = vmatpush2.msra.mxu0 0.0
    %3664 = vmatprep.subr.mxu0 0.0
    %3665 = vmatpush2.msra.mxu0 0.0
    %3666 = vmatprep.subr.mxu0 0.0
    %3667 = vmatpush2.msra.mxu0 0.0
    %3668 = vmatprep.mubr.f32.mxu0 0.0
    %v3669 = vand.u32 %v1329, 4294901760
    %3670 = vmatmul.mubr.f32.gmra.mxu0 %v3669
    %v3671 = vpop.f32.mrf.mxu0
    %v3672 = vadd.f32 %v3567, %v3671
    %v3673 = vpop.f32.mrf.mxu0
    %3674 = vmatprep.mubr.f32.mxu0 0.0
    %v3675 = vand.u32 %v1330, 4294901760
    %3676 = vmatmul.mubr.f32.gmra.mxu0 %v3675
    %v3677 = vpop.f32.mrf.mxu0
    %v3678 = vadd.f32 %v3573, %v3677
    %v3679 = vpop.f32.mrf.mxu0
    %3680 = vmatprep.mubr.f32.mxu0 0.0
    %v3681 = vand.u32 %v1331, 4294901760
    %3682 = vmatmul.mubr.f32.gmra.mxu0 %v3681
    %v3683 = vpop.f32.mrf.mxu0
    %v3684 = vadd.f32 %v3579, %v3683
    %v3685 = vpop.f32.mrf.mxu0
    %3686 = vmatprep.mubr.f32.mxu0 0.0
    %v3687 = vand.u32 %v1332, 4294901760
    %3688 = vmatmul.mubr.f32.gmra.mxu0 %v3687
    %v3689 = vpop.f32.mrf.mxu0
    %v3690 = vadd.f32 %v3585, %v3689
    %v3691 = vpop.f32.mrf.mxu0
    %3692 = vdwg.mxu0
    %v3693 = vadd.f32 %v2885, %v3672
    %v3694 = vadd.f32 %v2891, %v3678
    %v3695 = vadd.f32 %v2897, %v3684
    %v3696 = vadd.f32 %v2903, %v3690
    %v3697 = vld [vmem:[#allocation10 + $0x2] ss:$0 sm:$0xff]
    %v3698 = vld [vmem:[#allocation10 + $0x3] ss:$0 sm:$0xff]
    %v3699 = vadd.f32 %v3693, %v3694
    %v3700 = vadd.f32 %v3699, %v3695
    %v3701 = vadd.f32 %v3700, %v3696
    %v3702 = vrot.slane %v3701, 4
    %v3703 = vadd.f32 %v3701, %v3702
    %v3704 = vrot.slane %v3703, 2
    %v3705 = vadd.f32 %v3703, %v3704
    %v3706 = vrot.slane %v3705, 1
    %v3707 = vadd.f32 %v3705, %v3706
    %v3708 = vmul.f32 %v3693, %v3693
    %v3709 = vmul.f32 %v3694, %v3694
    %v3710 = vmul.f32 %v3695, %v3695
    %v3711 = vmul.f32 %v3696, %v3696
    %v3712 = vadd.f32 %v3708, %v3709
    %v3713 = vadd.f32 %v3712, %v3710
    %v3714 = vadd.f32 %v3713, %v3711
    %v3715 = vrot.slane %v3714, 4
    %v3716 = vadd.f32 %v3714, %v3715
    %v3717 = vrot.slane %v3716, 2
    %v3718 = vadd.f32 %v3716, %v3717
    %v3719 = vrot.slane %v3718, 1
    %v3720 = vadd.f32 %v3718, %v3719
    %v3721 = vsel %vm1181, %v3707, %v3720
    %3722 = vrot.lane.b32.xlu0 %v3721, 8
    %v3723 = vpop.permute.xlu0 %3722
    %v3724 = vadd.f32 %v3721, %v3723
    %3725 = vrot.lane.b32.xlu0 %v3724, 16
    %v3726 = vpop.permute.xlu0 %3725
    %v3727 = vadd.f32 %v3724, %v3726
    %3728 = vrot.lane.b32.xlu0 %v3727, 32
    %v3729 = vpop.permute.xlu0 %3728
    %v3730 = vadd.f32 %v3727, %v3729
    %3731 = vrot.lane.b32.xlu0 %v3730, 64
    %v3732 = vpop.permute.xlu0 %3731
    %v3733 = vadd.f32 %v3730, %v3732
    %v3734 = vmul.f32 %v3733, 0.001953125
    %v3735 = vmul.f32 %v3734, %v3734
    %v3737 = vrot.slane %v3735, 7
    %v3739 = vsub.f32 %v3734, %v3737
    %v3740 = vmax.f32 %v3739, 0.0
    %v3741 = vadd.f32 %v3740, 1e-05
    %v3742 = vrsqrt.pop %v3741
    %v3743 = vmul.f32 %v3697, %v3742
    %v3745 = vrot.slane %v3743, 1
    %v3747 = vmul.f32 %v3734, %v3745
    %v3748 = vsub.f32 %v3698, %v3747
    %v3749 = vlaneseq
    %v3750 = vshrl.u32 %v3749, 7
    %v3751 = vsub.s32 1, %v3750
    %v3752 = vrot.slane %v3743, %v3751
    %v3753 = vmul.f32 %v3693, %v3752
    %v3754 = vmul.f32 %v3694, %v3752
    %v3755 = vmul.f32 %v3695, %v3752
    %v3756 = vmul.f32 %v3696, %v3752
    %v3757 = vlaneseq
    %v3758 = vshrl.u32 %v3757, 7
    %v3759 = vsub.s32 0, %v3758
    %v3760 = vrot.slane %v3748, %v3759
    %v3761 = vadd.f32 %v3753, %v3760
    %v3762 = vadd.f32 %v3754, %v3760
    %v3763 = vadd.f32 %v3755, %v3760
    %v3764 = vadd.f32 %v3756, %v3760
    %v3765 = vmax.f32 %v3761, 0.0
    %v3766 = vmax.f32 %v3762, 0.0
    %v3767 = vmax.f32 %v3763, 0.0
    %v3768 = vmax.f32 %v3764, 0.0
    %v3769 = vld [vmem:[#allocation8] sm:$0xff]
    %v3770 = vld [vmem:[#allocation8 + $0x8] sm:$0xff]
    %v3771 = vld [vmem:[#allocation8 + $0x10] sm:$0xff]
    %v3772 = vld [vmem:[#allocation8 + $0x18] sm:$0xff]
    %v3773 = vld [vmem:[#allocation8 + $0x20] sm:$0xff]
    %v3774 = vld [vmem:[#allocation8 + $0x28] sm:$0xff]
    %v3775 = vld [vmem:[#allocation8 + $0x30] sm:$0xff]
    %v3776 = vld [vmem:[#allocation8 + $0x38] sm:$0xff]
    %v3777 = vld [vmem:[#allocation8 + $0x40] sm:$0xff]
    %v3778 = vld [vmem:[#allocation8 + $0x48] sm:$0xff]
    %v3779 = vld [vmem:[#allocation8 + $0x50] sm:$0xff]
    %v3780 = vld [vmem:[#allocation8 + $0x58] sm:$0xff]
    %v3781 = vld [vmem:[#allocation8 + $0x60] sm:$0xff]
    %v3782 = vld [vmem:[#allocation8 + $0x68] sm:$0xff]
    %v3783 = vld [vmem:[#allocation8 + $0x70] sm:$0xff]
    %v3784 = vld [vmem:[#allocation8 + $0x78] sm:$0xff]
    %v3785 = vld [vmem:[#allocation8 + $0x80] sm:$0xff]
    %v3786 = vld [vmem:[#allocation8 + $0x88] sm:$0xff]
    %v3787 = vld [vmem:[#allocation8 + $0x90] sm:$0xff]
    %v3788 = vld [vmem:[#allocation8 + $0x98] sm:$0xff]
    %v3789 = vld [vmem:[#allocation8 + $0xa0] sm:$0xff]
    %v3790 = vld [vmem:[#allocation8 + $0xa8] sm:$0xff]
    %v3791 = vld [vmem:[#allocation8 + $0xb0] sm:$0xff]
    %v3792 = vld [vmem:[#allocation8 + $0xb8] sm:$0xff]
    %v3793 = vld [vmem:[#allocation8 + $0xc0] sm:$0xff]
    %v3794 = vld [vmem:[#allocation8 + $0xc8] sm:$0xff]
    %v3795 = vld [vmem:[#allocation8 + $0xd0] sm:$0xff]
    %v3796 = vld [vmem:[#allocation8 + $0xd8] sm:$0xff]
    %v3797 = vld [vmem:[#allocation8 + $0xe0] sm:$0xff]
    %v3798 = vld [vmem:[#allocation8 + $0xe8] sm:$0xff]
    %v3799 = vld [vmem:[#allocation8 + $0xf0] sm:$0xff]
    %v3800 = vld [vmem:[#allocation8 + $0xf8] sm:$0xff]
    %v3801 = vand.u32 %v3800, 4294901760
    %3802 = vmatprep.subr.mxu0 %v3801
    %v3803 = vand.u32 %v3799, 4294901760
    %3804 = vmatpush1.msra.mxu0 %v3803
    %v3805 = vand.u32 %v3798, 4294901760
    %3806 = vmatprep.subr.mxu0 %v3805
    %v3807 = vand.u32 %v3797, 4294901760
    %3808 = vmatpush1.msra.mxu0 %v3807
    %v3809 = vand.u32 %v3796, 4294901760
    %3810 = vmatprep.subr.mxu0 %v3809
    %v3811 = vand.u32 %v3795, 4294901760
    %3812 = vmatpush1.msra.mxu0 %v3811
    %v3813 = vand.u32 %v3794, 4294901760
    %3814 = vmatprep.subr.mxu0 %v3813
    %v3815 = vand.u32 %v3793, 4294901760
    %3816 = vmatpush1.msra.mxu0 %v3815
    %v3817 = vand.u32 %v3792, 4294901760
    %3818 = vmatprep.subr.mxu0 %v3817
    %v3819 = vand.u32 %v3791, 4294901760
    %3820 = vmatpush1.msra.mxu0 %v3819
    %v3821 = vand.u32 %v3790, 4294901760
    %3822 = vmatprep.subr.mxu0 %v3821
    %v3823 = vand.u32 %v3789, 4294901760
    %3824 = vmatpush1.msra.mxu0 %v3823
    %v3825 = vand.u32 %v3788, 4294901760
    %3826 = vmatprep.subr.mxu0 %v3825
    %v3827 = vand.u32 %v3787, 4294901760
    %3828 = vmatpush1.msra.mxu0 %v3827
    %v3829 = vand.u32 %v3786, 4294901760
    %3830 = vmatprep.subr.mxu0 %v3829
    %v3831 = vand.u32 %v3785, 4294901760
    %3832 = vmatpush1.msra.mxu0 %v3831
    %v3833 = vand.u32 %v3784, 4294901760
    %3834 = vmatprep.subr.mxu0 %v3833
    %v3835 = vand.u32 %v3783, 4294901760
    %3836 = vmatpush1.msra.mxu0 %v3835
    %v3837 = vand.u32 %v3782, 4294901760
    %3838 = vmatprep.subr.mxu0 %v3837
    %v3839 = vand.u32 %v3781, 4294901760
    %3840 = vmatpush1.msra.mxu0 %v3839
    %v3841 = vand.u32 %v3780, 4294901760
    %3842 = vmatprep.subr.mxu0 %v3841
    %v3843 = vand.u32 %v3779, 4294901760
    %3844 = vmatpush1.msra.mxu0 %v3843
    %v3845 = vand.u32 %v3778, 4294901760
    %3846 = vmatprep.subr.mxu0 %v3845
    %v3847 = vand.u32 %v3777, 4294901760
    %3848 = vmatpush1.msra.mxu0 %v3847
    %v3849 = vand.u32 %v3776, 4294901760
    %3850 = vmatprep.subr.mxu0 %v3849
    %v3851 = vand.u32 %v3775, 4294901760
    %3852 = vmatpush1.msra.mxu0 %v3851
    %v3853 = vand.u32 %v3774, 4294901760
    %3854 = vmatprep.subr.mxu0 %v3853
    %v3855 = vand.u32 %v3773, 4294901760
    %3856 = vmatpush1.msra.mxu0 %v3855
    %v3857 = vand.u32 %v3772, 4294901760
    %3858 = vmatprep.subr.mxu0 %v3857
    %v3859 = vand.u32 %v3771, 4294901760
    %3860 = vmatpush1.msra.mxu0 %v3859
    %v3861 = vand.u32 %v3770, 4294901760
    %3862 = vmatprep.subr.mxu0 %v3861
    %v3863 = vand.u32 %v3769, 4294901760
    %3864 = vmatpush1.msra.mxu0 %v3863
    %3865 = vmatprep.subr.mxu0 0.0
    %3866 = vmatpush2.msra.mxu0 0.0
    %3867 = vmatprep.subr.mxu0 0.0
    %3868 = vmatpush2.msra.mxu0 0.0
    %3869 = vmatprep.subr.mxu0 0.0
    %3870 = vmatpush2.msra.mxu0 0.0
    %3871 = vmatprep.subr.mxu0 0.0
    %3872 = vmatpush2.msra.mxu0 0.0
    %3873 = vmatprep.subr.mxu0 0.0
    %3874 = vmatpush2.msra.mxu0 0.0
    %3875 = vmatprep.subr.mxu0 0.0
    %3876 = vmatpush2.msra.mxu0 0.0
    %3877 = vmatprep.subr.mxu0 0.0
    %3878 = vmatpush2.msra.mxu0 0.0
    %3879 = vmatprep.subr.mxu0 0.0
    %3880 = vmatpush2.msra.mxu0 0.0
    %3881 = vmatprep.subr.mxu0 0.0
    %3882 = vmatpush2.msra.mxu0 0.0
    %3883 = vmatprep.subr.mxu0 0.0
    %3884 = vmatpush2.msra.mxu0 0.0
    %3885 = vmatprep.subr.mxu0 0.0
    %3886 = vmatpush2.msra.mxu0 0.0
    %3887 = vmatprep.subr.mxu0 0.0
    %3888 = vmatpush2.msra.mxu0 0.0
    %3889 = vmatprep.subr.mxu0 0.0
    %3890 = vmatpush2.msra.mxu0 0.0
    %3891 = vmatprep.subr.mxu0 0.0
    %3892 = vmatpush2.msra.mxu0 0.0
    %3893 = vmatprep.subr.mxu0 0.0
    %3894 = vmatpush2.msra.mxu0 0.0
    %3895 = vmatprep.subr.mxu0 0.0
    %3896 = vmatpush2.msra.mxu0 0.0
    %3897 = vmatprep.mubr.f32.mxu0 0.0
    %v3898 = vand.u32 %v3765, 4294901760
    %v3899 = vsub.f32 %v3765, %v3898
    %v3900 = vand.u32 %v3899, 4294901760
    %v3901 = vsub.f32 %v3899, %v3900
    %v3902 = vand.u32 %v3901, 4294901760
    %3903 = vmatmul.mubr.f32.gmra.mxu0 %v3902
    %v3904 = vpop.f32.mrf.mxu0
    %v3905 = vadd.f32 0.0, %v3904
    %v3906 = vpop.f32.mrf.mxu0
    %v3907 = vadd.f32 0.0, %v3906
    %3908 = vmatprep.mubr.f32.mxu0 0.0
    %v3909 = vand.u32 %v3766, 4294901760
    %v3910 = vsub.f32 %v3766, %v3909
    %v3911 = vand.u32 %v3910, 4294901760
    %v3912 = vsub.f32 %v3910, %v3911
    %v3913 = vand.u32 %v3912, 4294901760
    %3914 = vmatmul.mubr.f32.gmra.mxu0 %v3913
    %v3915 = vpop.f32.mrf.mxu0
    %v3916 = vadd.f32 0.0, %v3915
    %v3917 = vpop.f32.mrf.mxu0
    %v3918 = vadd.f32 0.0, %v3917
    %3919 = vmatprep.mubr.f32.mxu0 0.0
    %v3920 = vand.u32 %v3767, 4294901760
    %v3921 = vsub.f32 %v3767, %v3920
    %v3922 = vand.u32 %v3921, 4294901760
    %v3923 = vsub.f32 %v3921, %v3922
    %v3924 = vand.u32 %v3923, 4294901760
    %3925 = vmatmul.mubr.f32.gmra.mxu0 %v3924
    %v3926 = vpop.f32.mrf.mxu0
    %v3927 = vadd.f32 0.0, %v3926
    %v3928 = vpop.f32.mrf.mxu0
    %v3929 = vadd.f32 0.0, %v3928
    %3930 = vmatprep.mubr.f32.mxu0 0.0
    %v3931 = vand.u32 %v3768, 4294901760
    %v3932 = vsub.f32 %v3768, %v3931
    %v3933 = vand.u32 %v3932, 4294901760
    %v3934 = vsub.f32 %v3932, %v3933
    %v3935 = vand.u32 %v3934, 4294901760
    %3936 = vmatmul.mubr.f32.gmra.mxu0 %v3935
    %v3937 = vpop.f32.mrf.mxu0
    %v3938 = vadd.f32 0.0, %v3937
    %v3939 = vpop.f32.mrf.mxu0
    %v3940 = vadd.f32 0.0, %v3939
    %3941 = vdwg.mxu0
    %v3942 = vand.u32 %v3800, 4294901760
    %v3943 = vsub.f32 %v3800, %v3942
    %v3944 = vand.u32 %v3943, 4294901760
    %v3945 = vsub.f32 %v3943, %v3944
    %v3946 = vand.u32 %v3945, 4294901760
    %3947 = vmatprep.subr.mxu0 %v3946
    %v3948 = vand.u32 %v3799, 4294901760
    %v3949 = vsub.f32 %v3799, %v3948
    %v3950 = vand.u32 %v3949, 4294901760
    %v3951 = vsub.f32 %v3949, %v3950
    %v3952 = vand.u32 %v3951, 4294901760
    %3953 = vmatpush1.msra.mxu0 %v3952
    %v3954 = vand.u32 %v3798, 4294901760
    %v3955 = vsub.f32 %v3798, %v3954
    %v3956 = vand.u32 %v3955, 4294901760
    %v3957 = vsub.f32 %v3955, %v3956
    %v3958 = vand.u32 %v3957, 4294901760
    %3959 = vmatprep.subr.mxu0 %v3958
    %v3960 = vand.u32 %v3797, 4294901760
    %v3961 = vsub.f32 %v3797, %v3960
    %v3962 = vand.u32 %v3961, 4294901760
    %v3963 = vsub.f32 %v3961, %v3962
    %v3964 = vand.u32 %v3963, 4294901760
    %3965 = vmatpush1.msra.mxu0 %v3964
    %v3966 = vand.u32 %v3796, 4294901760
    %v3967 = vsub.f32 %v3796, %v3966
    %v3968 = vand.u32 %v3967, 4294901760
    %v3969 = vsub.f32 %v3967, %v3968
    %v3970 = vand.u32 %v3969, 4294901760
    %3971 = vmatprep.subr.mxu0 %v3970
    %v3972 = vand.u32 %v3795, 4294901760
    %v3973 = vsub.f32 %v3795, %v3972
    %v3974 = vand.u32 %v3973, 4294901760
    %v3975 = vsub.f32 %v3973, %v3974
    %v3976 = vand.u32 %v3975, 4294901760
    %3977 = vmatpush1.msra.mxu0 %v3976
    %v3978 = vand.u32 %v3794, 4294901760
    %v3979 = vsub.f32 %v3794, %v3978
    %v3980 = vand.u32 %v3979, 4294901760
    %v3981 = vsub.f32 %v3979, %v3980
    %v3982 = vand.u32 %v3981, 4294901760
    %3983 = vmatprep.subr.mxu0 %v3982
    %v3984 = vand.u32 %v3793, 4294901760
    %v3985 = vsub.f32 %v3793, %v3984
    %v3986 = vand.u32 %v3985, 4294901760
    %v3987 = vsub.f32 %v3985, %v3986
    %v3988 = vand.u32 %v3987, 4294901760
    %3989 = vmatpush1.msra.mxu0 %v3988
    %v3990 = vand.u32 %v3792, 4294901760
    %v3991 = vsub.f32 %v3792, %v3990
    %v3992 = vand.u32 %v3991, 4294901760
    %v3993 = vsub.f32 %v3991, %v3992
    %v3994 = vand.u32 %v3993, 4294901760
    %3995 = vmatprep.subr.mxu0 %v3994
    %v3996 = vand.u32 %v3791, 4294901760
    %v3997 = vsub.f32 %v3791, %v3996
    %v3998 = vand.u32 %v3997, 4294901760
    %v3999 = vsub.f32 %v3997, %v3998
    %v4000 = vand.u32 %v3999, 4294901760
    %4001 = vmatpush1.msra.mxu0 %v4000
    %v4002 = vand.u32 %v3790, 4294901760
    %v4003 = vsub.f32 %v3790, %v4002
    %v4004 = vand.u32 %v4003, 4294901760
    %v4005 = vsub.f32 %v4003, %v4004
    %v4006 = vand.u32 %v4005, 4294901760
    %4007 = vmatprep.subr.mxu0 %v4006
    %v4008 = vand.u32 %v3789, 4294901760
    %v4009 = vsub.f32 %v3789, %v4008
    %v4010 = vand.u32 %v4009, 4294901760
    %v4011 = vsub.f32 %v4009, %v4010
    %v4012 = vand.u32 %v4011, 4294901760
    %4013 = vmatpush1.msra.mxu0 %v4012
    %v4014 = vand.u32 %v3788, 4294901760
    %v4015 = vsub.f32 %v3788, %v4014
    %v4016 = vand.u32 %v4015, 4294901760
    %v4017 = vsub.f32 %v4015, %v4016
    %v4018 = vand.u32 %v4017, 4294901760
    %4019 = vmatprep.subr.mxu0 %v4018
    %v4020 = vand.u32 %v3787, 4294901760
    %v4021 = vsub.f32 %v3787, %v4020
    %v4022 = vand.u32 %v4021, 4294901760
    %v4023 = vsub.f32 %v4021, %v4022
    %v4024 = vand.u32 %v4023, 4294901760
    %4025 = vmatpush1.msra.mxu0 %v4024
    %v4026 = vand.u32 %v3786, 4294901760
    %v4027 = vsub.f32 %v3786, %v4026
    %v4028 = vand.u32 %v4027, 4294901760
    %v4029 = vsub.f32 %v4027, %v4028
    %v4030 = vand.u32 %v4029, 4294901760
    %4031 = vmatprep.subr.mxu0 %v4030
    %v4032 = vand.u32 %v3785, 4294901760
    %v4033 = vsub.f32 %v3785, %v4032
    %v4034 = vand.u32 %v4033, 4294901760
    %v4035 = vsub.f32 %v4033, %v4034
    %v4036 = vand.u32 %v4035, 4294901760
    %4037 = vmatpush1.msra.mxu0 %v4036
    %v4038 = vand.u32 %v3784, 4294901760
    %v4039 = vsub.f32 %v3784, %v4038
    %v4040 = vand.u32 %v4039, 4294901760
    %v4041 = vsub.f32 %v4039, %v4040
    %v4042 = vand.u32 %v4041, 4294901760
    %4043 = vmatprep.subr.mxu0 %v4042
    %v4044 = vand.u32 %v3783, 4294901760
    %v4045 = vsub.f32 %v3783, %v4044
    %v4046 = vand.u32 %v4045, 4294901760
    %v4047 = vsub.f32 %v4045, %v4046
    %v4048 = vand.u32 %v4047, 4294901760
    %4049 = vmatpush1.msra.mxu0 %v4048
    %v4050 = vand.u32 %v3782, 4294901760
    %v4051 = vsub.f32 %v3782, %v4050
    %v4052 = vand.u32 %v4051, 4294901760
    %v4053 = vsub.f32 %v4051, %v4052
    %v4054 = vand.u32 %v4053, 4294901760
    %4055 = vmatprep.subr.mxu0 %v4054
    %v4056 = vand.u32 %v3781, 4294901760
    %v4057 = vsub.f32 %v3781, %v4056
    %v4058 = vand.u32 %v4057, 4294901760
    %v4059 = vsub.f32 %v4057, %v4058
    %v4060 = vand.u32 %v4059, 4294901760
    %4061 = vmatpush1.msra.mxu0 %v4060
    %v4062 = vand.u32 %v3780, 4294901760
    %v4063 = vsub.f32 %v3780, %v4062
    %v4064 = vand.u32 %v4063, 4294901760
    %v4065 = vsub.f32 %v4063, %v4064
    %v4066 = vand.u32 %v4065, 4294901760
    %4067 = vmatprep.subr.mxu0 %v4066
    %v4068 = vand.u32 %v3779, 4294901760
    %v4069 = vsub.f32 %v3779, %v4068
    %v4070 = vand.u32 %v4069, 4294901760
    %v4071 = vsub.f32 %v4069, %v4070
    %v4072 = vand.u32 %v4071, 4294901760
    %4073 = vmatpush1.msra.mxu0 %v4072
    %v4074 = vand.u32 %v3778, 4294901760
    %v4075 = vsub.f32 %v3778, %v4074
    %v4076 = vand.u32 %v4075, 4294901760
    %v4077 = vsub.f32 %v4075, %v4076
    %v4078 = vand.u32 %v4077, 4294901760
    %4079 = vmatprep.subr.mxu0 %v4078
    %v4080 = vand.u32 %v3777, 4294901760
    %v4081 = vsub.f32 %v3777, %v4080
    %v4082 = vand.u32 %v4081, 4294901760
    %v4083 = vsub.f32 %v4081, %v4082
    %v4084 = vand.u32 %v4083, 4294901760
    %4085 = vmatpush1.msra.mxu0 %v4084
    %v4086 = vand.u32 %v3776, 4294901760
    %v4087 = vsub.f32 %v3776, %v4086
    %v4088 = vand.u32 %v4087, 4294901760
    %v4089 = vsub.f32 %v4087, %v4088
    %v4090 = vand.u32 %v4089, 4294901760
    %4091 = vmatprep.subr.mxu0 %v4090
    %v4092 = vand.u32 %v3775, 4294901760
    %v4093 = vsub.f32 %v3775, %v4092
    %v4094 = vand.u32 %v4093, 4294901760
    %v4095 = vsub.f32 %v4093, %v4094
    %v4096 = vand.u32 %v4095, 4294901760
    %4097 = vmatpush1.msra.mxu0 %v4096
    %v4098 = vand.u32 %v3774, 4294901760
    %v4099 = vsub.f32 %v3774, %v4098
    %v4100 = vand.u32 %v4099, 4294901760
    %v4101 = vsub.f32 %v4099, %v4100
    %v4102 = vand.u32 %v4101, 4294901760
    %4103 = vmatprep.subr.mxu0 %v4102
    %v4104 = vand.u32 %v3773, 4294901760
    %v4105 = vsub.f32 %v3773, %v4104
    %v4106 = vand.u32 %v4105, 4294901760
    %v4107 = vsub.f32 %v4105, %v4106
    %v4108 = vand.u32 %v4107, 4294901760
    %4109 = vmatpush1.msra.mxu0 %v4108
    %v4110 = vand.u32 %v3772, 4294901760
    %v4111 = vsub.f32 %v3772, %v4110
    %v4112 = vand.u32 %v4111, 4294901760
    %v4113 = vsub.f32 %v4111, %v4112
    %v4114 = vand.u32 %v4113, 4294901760
    %4115 = vmatprep.subr.mxu0 %v4114
    %v4116 = vand.u32 %v3771, 4294901760
    %v4117 = vsub.f32 %v3771, %v4116
    %v4118 = vand.u32 %v4117, 4294901760
    %v4119 = vsub.f32 %v4117, %v4118
    %v4120 = vand.u32 %v4119, 4294901760
    %4121 = vmatpush1.msra.mxu0 %v4120
    %v4122 = vand.u32 %v3770, 4294901760
    %v4123 = vsub.f32 %v3770, %v4122
    %v4124 = vand.u32 %v4123, 4294901760
    %v4125 = vsub.f32 %v4123, %v4124
    %v4126 = vand.u32 %v4125, 4294901760
    %4127 = vmatprep.subr.mxu0 %v4126
    %v4128 = vand.u32 %v3769, 4294901760
    %v4129 = vsub.f32 %v3769, %v4128
    %v4130 = vand.u32 %v4129, 4294901760
    %v4131 = vsub.f32 %v4129, %v4130
    %v4132 = vand.u32 %v4131, 4294901760
    %4133 = vmatpush1.msra.mxu0 %v4132
    %4134 = vmatprep.subr.mxu0 0.0
    %4135 = vmatpush2.msra.mxu0 0.0
    %4136 = vmatprep.subr.mxu0 0.0
    %4137 = vmatpush2.msra.mxu0 0.0
    %4138 = vmatprep.subr.mxu0 0.0
    %4139 = vmatpush2.msra.mxu0 0.0
    %4140 = vmatprep.subr.mxu0 0.0
    %4141 = vmatpush2.msra.mxu0 0.0
    %4142 = vmatprep.subr.mxu0 0.0
    %4143 = vmatpush2.msra.mxu0 0.0
    %4144 = vmatprep.subr.mxu0 0.0
    %4145 = vmatpush2.msra.mxu0 0.0
    %4146 = vmatprep.subr.mxu0 0.0
    %4147 = vmatpush2.msra.mxu0 0.0
    %4148 = vmatprep.subr.mxu0 0.0
    %4149 = vmatpush2.msra.mxu0 0.0
    %4150 = vmatprep.subr.mxu0 0.0
    %4151 = vmatpush2.msra.mxu0 0.0
    %4152 = vmatprep.subr.mxu0 0.0
    %4153 = vmatpush2.msra.mxu0 0.0
    %4154 = vmatprep.subr.mxu0 0.0
    %4155 = vmatpush2.msra.mxu0 0.0
    %4156 = vmatprep.subr.mxu0 0.0
    %4157 = vmatpush2.msra.mxu0 0.0
    %4158 = vmatprep.subr.mxu0 0.0
    %4159 = vmatpush2.msra.mxu0 0.0
    %4160 = vmatprep.subr.mxu0 0.0
    %4161 = vmatpush2.msra.mxu0 0.0
    %4162 = vmatprep.subr.mxu0 0.0
    %4163 = vmatpush2.msra.mxu0 0.0
    %4164 = vmatprep.subr.mxu0 0.0
    %4165 = vmatpush2.msra.mxu0 0.0
    %4166 = vmatprep.mubr.f32.mxu0 0.0
    %v4167 = vand.u32 %v3765, 4294901760
    %4168 = vmatmul.mubr.f32.gmra.mxu0 %v4167
    %v4169 = vpop.f32.mrf.mxu0
    %v4170 = vadd.f32 %v3905, %v4169
    %v4171 = vpop.f32.mrf.mxu0
    %v4172 = vadd.f32 %v3907, %v4171
    %4173 = vmatprep.mubr.f32.mxu0 0.0
    %v4174 = vand.u32 %v3766, 4294901760
    %4175 = vmatmul.mubr.f32.gmra.mxu0 %v4174
    %v4176 = vpop.f32.mrf.mxu0
    %v4177 = vadd.f32 %v3916, %v4176
    %v4178 = vpop.f32.mrf.mxu0
    %v4179 = vadd.f32 %v3918, %v4178
    %4180 = vmatprep.mubr.f32.mxu0 0.0
    %v4181 = vand.u32 %v3767, 4294901760
    %4182 = vmatmul.mubr.f32.gmra.mxu0 %v4181
    %v4183 = vpop.f32.mrf.mxu0
    %v4184 = vadd.f32 %v3927, %v4183
    %v4185 = vpop.f32.mrf.mxu0
    %v4186 = vadd.f32 %v3929, %v4185
    %4187 = vmatprep.mubr.f32.mxu0 0.0
    %v4188 = vand.u32 %v3768, 4294901760
    %4189 = vmatmul.mubr.f32.gmra.mxu0 %v4188
    %v4190 = vpop.f32.mrf.mxu0
    %v4191 = vadd.f32 %v3938, %v4190
    %v4192 = vpop.f32.mrf.mxu0
    %v4193 = vadd.f32 %v3940, %v4192
    %4194 = vdwg.mxu0
    %v4195 = vand.u32 %v3800, 4294901760
    %v4196 = vsub.f32 %v3800, %v4195
    %4197 = vmatprep.subr.mxu0 %v4196
    %v4198 = vand.u32 %v3799, 4294901760
    %v4199 = vsub.f32 %v3799, %v4198
    %4200 = vmatpush1.msra.mxu0 %v4199
    %v4201 = vand.u32 %v3798, 4294901760
    %v4202 = vsub.f32 %v3798, %v4201
    %4203 = vmatprep.subr.mxu0 %v4202
    %v4204 = vand.u32 %v3797, 4294901760
    %v4205 = vsub.f32 %v3797, %v4204
    %4206 = vmatpush1.msra.mxu0 %v4205
    %v4207 = vand.u32 %v3796, 4294901760
    %v4208 = vsub.f32 %v3796, %v4207
    %4209 = vmatprep.subr.mxu0 %v4208
    %v4210 = vand.u32 %v3795, 4294901760
    %v4211 = vsub.f32 %v3795, %v4210
    %4212 = vmatpush1.msra.mxu0 %v4211
    %v4213 = vand.u32 %v3794, 4294901760
    %v4214 = vsub.f32 %v3794, %v4213
    %4215 = vmatprep.subr.mxu0 %v4214
    %v4216 = vand.u32 %v3793, 4294901760
    %v4217 = vsub.f32 %v3793, %v4216
    %4218 = vmatpush1.msra.mxu0 %v4217
    %v4219 = vand.u32 %v3792, 4294901760
    %v4220 = vsub.f32 %v3792, %v4219
    %4221 = vmatprep.subr.mxu0 %v4220
    %v4222 = vand.u32 %v3791, 4294901760
    %v4223 = vsub.f32 %v3791, %v4222
    %4224 = vmatpush1.msra.mxu0 %v4223
    %v4225 = vand.u32 %v3790, 4294901760
    %v4226 = vsub.f32 %v3790, %v4225
    %4227 = vmatprep.subr.mxu0 %v4226
    %v4228 = vand.u32 %v3789, 4294901760
    %v4229 = vsub.f32 %v3789, %v4228
    %4230 = vmatpush1.msra.mxu0 %v4229
    %v4231 = vand.u32 %v3788, 4294901760
    %v4232 = vsub.f32 %v3788, %v4231
    %4233 = vmatprep.subr.mxu0 %v4232
    %v4234 = vand.u32 %v3787, 4294901760
    %v4235 = vsub.f32 %v3787, %v4234
    %4236 = vmatpush1.msra.mxu0 %v4235
    %v4237 = vand.u32 %v3786, 4294901760
    %v4238 = vsub.f32 %v3786, %v4237
    %4239 = vmatprep.subr.mxu0 %v4238
    %v4240 = vand.u32 %v3785, 4294901760
    %v4241 = vsub.f32 %v3785, %v4240
    %4242 = vmatpush1.msra.mxu0 %v4241
    %v4243 = vand.u32 %v3784, 4294901760
    %v4244 = vsub.f32 %v3784, %v4243
    %4245 = vmatprep.subr.mxu0 %v4244
    %v4246 = vand.u32 %v3783, 4294901760
    %v4247 = vsub.f32 %v3783, %v4246
    %4248 = vmatpush1.msra.mxu0 %v4247
    %v4249 = vand.u32 %v3782, 4294901760
    %v4250 = vsub.f32 %v3782, %v4249
    %4251 = vmatprep.subr.mxu0 %v4250
    %v4252 = vand.u32 %v3781, 4294901760
    %v4253 = vsub.f32 %v3781, %v4252
    %4254 = vmatpush1.msra.mxu0 %v4253
    %v4255 = vand.u32 %v3780, 4294901760
    %v4256 = vsub.f32 %v3780, %v4255
    %4257 = vmatprep.subr.mxu0 %v4256
    %v4258 = vand.u32 %v3779, 4294901760
    %v4259 = vsub.f32 %v3779, %v4258
    %4260 = vmatpush1.msra.mxu0 %v4259
    %v4261 = vand.u32 %v3778, 4294901760
    %v4262 = vsub.f32 %v3778, %v4261
    %4263 = vmatprep.subr.mxu0 %v4262
    %v4264 = vand.u32 %v3777, 4294901760
    %v4265 = vsub.f32 %v3777, %v4264
    %4266 = vmatpush1.msra.mxu0 %v4265
    %v4267 = vand.u32 %v3776, 4294901760
    %v4268 = vsub.f32 %v3776, %v4267
    %4269 = vmatprep.subr.mxu0 %v4268
    %v4270 = vand.u32 %v3775, 4294901760
    %v4271 = vsub.f32 %v3775, %v4270
    %4272 = vmatpush1.msra.mxu0 %v4271
    %v4273 = vand.u32 %v3774, 4294901760
    %v4274 = vsub.f32 %v3774, %v4273
    %4275 = vmatprep.subr.mxu0 %v4274
    %v4276 = vand.u32 %v3773, 4294901760
    %v4277 = vsub.f32 %v3773, %v4276
    %4278 = vmatpush1.msra.mxu0 %v4277
    %v4279 = vand.u32 %v3772, 4294901760
    %v4280 = vsub.f32 %v3772, %v4279
    %4281 = vmatprep.subr.mxu0 %v4280
    %v4282 = vand.u32 %v3771, 4294901760
    %v4283 = vsub.f32 %v3771, %v4282
    %4284 = vmatpush1.msra.mxu0 %v4283
    %v4285 = vand.u32 %v3770, 4294901760
    %v4286 = vsub.f32 %v3770, %v4285
    %4287 = vmatprep.subr.mxu0 %v4286
    %v4288 = vand.u32 %v3769, 4294901760
    %v4289 = vsub.f32 %v3769, %v4288
    %4290 = vmatpush1.msra.mxu0 %v4289
    %4291 = vmatprep.subr.mxu0 0.0
    %4292 = vmatpush2.msra.mxu0 0.0
    %4293 = vmatprep.subr.mxu0 0.0
    %4294 = vmatpush2.msra.mxu0 0.0
    %4295 = vmatprep.subr.mxu0 0.0
    %4296 = vmatpush2.msra.mxu0 0.0
    %4297 = vmatprep.subr.mxu0 0.0
    %4298 = vmatpush2.msra.mxu0 0.0
    %4299 = vmatprep.subr.mxu0 0.0
    %4300 = vmatpush2.msra.mxu0 0.0
    %4301 = vmatprep.subr.mxu0 0.0
    %4302 = vmatpush2.msra.mxu0 0.0
    %4303 = vmatprep.subr.mxu0 0.0
    %4304 = vmatpush2.msra.mxu0 0.0
    %4305 = vmatprep.subr.mxu0 0.0
    %4306 = vmatpush2.msra.mxu0 0.0
    %4307 = vmatprep.subr.mxu0 0.0
    %4308 = vmatpush2.msra.mxu0 0.0
    %4309 = vmatprep.subr.mxu0 0.0
    %4310 = vmatpush2.msra.mxu0 0.0
    %4311 = vmatprep.subr.mxu0 0.0
    %4312 = vmatpush2.msra.mxu0 0.0
    %4313 = vmatprep.subr.mxu0 0.0
    %4314 = vmatpush2.msra.mxu0 0.0
    %4315 = vmatprep.subr.mxu0 0.0
    %4316 = vmatpush2.msra.mxu0 0.0
    %4317 = vmatprep.subr.mxu0 0.0
    %4318 = vmatpush2.msra.mxu0 0.0
    %4319 = vmatprep.subr.mxu0 0.0
    %4320 = vmatpush2.msra.mxu0 0.0
    %4321 = vmatprep.subr.mxu0 0.0
    %4322 = vmatpush2.msra.mxu0 0.0
    %4323 = vmatprep.mubr.f32.mxu0 0.0
    %v4324 = vand.u32 %v3765, 4294901760
    %v4325 = vsub.f32 %v3765, %v4324
    %4326 = vmatmul.mubr.f32.gmra.mxu0 %v4325
    %v4327 = vpop.f32.mrf.mxu0
    %v4328 = vadd.f32 %v4170, %v4327
    %v4329 = vpop.f32.mrf.mxu0
    %v4330 = vadd.f32 %v4172, %v4329
    %4331 = vmatprep.mubr.f32.mxu0 0.0
    %v4332 = vand.u32 %v3766, 4294901760
    %v4333 = vsub.f32 %v3766, %v4332
    %4334 = vmatmul.mubr.f32.gmra.mxu0 %v4333
    %v4335 = vpop.f32.mrf.mxu0
    %v4336 = vadd.f32 %v4177, %v4335
    %v4337 = vpop.f32.mrf.mxu0
    %v4338 = vadd.f32 %v4179, %v4337
    %4339 = vmatprep.mubr.f32.mxu0 0.0
    %v4340 = vand.u32 %v3767, 4294901760
    %v4341 = vsub.f32 %v3767, %v4340
    %4342 = vmatmul.mubr.f32.gmra.mxu0 %v4341
    %v4343 = vpop.f32.mrf.mxu0
    %v4344 = vadd.f32 %v4184, %v4343
    %v4345 = vpop.f32.mrf.mxu0
    %v4346 = vadd.f32 %v4186, %v4345
    %4347 = vmatprep.mubr.f32.mxu0 0.0
    %v4348 = vand.u32 %v3768, 4294901760
    %v4349 = vsub.f32 %v3768, %v4348
    %4350 = vmatmul.mubr.f32.gmra.mxu0 %v4349
    %v4351 = vpop.f32.mrf.mxu0
    %v4352 = vadd.f32 %v4191, %v4351
    %v4353 = vpop.f32.mrf.mxu0
    %v4354 = vadd.f32 %v4193, %v4353
    %4355 = vdwg.mxu0
    %v4356 = vand.u32 %v3800, 4294901760
    %4357 = vmatprep.subr.mxu0 %v4356
    %v4358 = vand.u32 %v3799, 4294901760
    %4359 = vmatpush1.msra.mxu0 %v4358
    %v4360 = vand.u32 %v3798, 4294901760
    %4361 = vmatprep.subr.mxu0 %v4360
    %v4362 = vand.u32 %v3797, 4294901760
    %4363 = vmatpush1.msra.mxu0 %v4362
    %v4364 = vand.u32 %v3796, 4294901760
    %4365 = vmatprep.subr.mxu0 %v4364
    %v4366 = vand.u32 %v3795, 4294901760
    %4367 = vmatpush1.msra.mxu0 %v4366
    %v4368 = vand.u32 %v3794, 4294901760
    %4369 = vmatprep.subr.mxu0 %v4368
    %v4370 = vand.u32 %v3793, 4294901760
    %4371 = vmatpush1.msra.mxu0 %v4370
    %v4372 = vand.u32 %v3792, 4294901760
    %4373 = vmatprep.subr.mxu0 %v4372
    %v4374 = vand.u32 %v3791, 4294901760
    %4375 = vmatpush1.msra.mxu0 %v4374
    %v4376 = vand.u32 %v3790, 4294901760
    %4377 = vmatprep.subr.mxu0 %v4376
    %v4378 = vand.u32 %v3789, 4294901760
    %4379 = vmatpush1.msra.mxu0 %v4378
    %v4380 = vand.u32 %v3788, 4294901760
    %4381 = vmatprep.subr.mxu0 %v4380
    %v4382 = vand.u32 %v3787, 4294901760
    %4383 = vmatpush1.msra.mxu0 %v4382
    %v4384 = vand.u32 %v3786, 4294901760
    %4385 = vmatprep.subr.mxu0 %v4384
    %v4386 = vand.u32 %v3785, 4294901760
    %4387 = vmatpush1.msra.mxu0 %v4386
    %v4388 = vand.u32 %v3784, 4294901760
    %4389 = vmatprep.subr.mxu0 %v4388
    %v4390 = vand.u32 %v3783, 4294901760
    %4391 = vmatpush1.msra.mxu0 %v4390
    %v4392 = vand.u32 %v3782, 4294901760
    %4393 = vmatprep.subr.mxu0 %v4392
    %v4394 = vand.u32 %v3781, 4294901760
    %4395 = vmatpush1.msra.mxu0 %v4394
    %v4396 = vand.u32 %v3780, 4294901760
    %4397 = vmatprep.subr.mxu0 %v4396
    %v4398 = vand.u32 %v3779, 4294901760
    %4399 = vmatpush1.msra.mxu0 %v4398
    %v4400 = vand.u32 %v3778, 4294901760
    %4401 = vmatprep.subr.mxu0 %v4400
    %v4402 = vand.u32 %v3777, 4294901760
    %4403 = vmatpush1.msra.mxu0 %v4402
    %v4404 = vand.u32 %v3776, 4294901760
    %4405 = vmatprep.subr.mxu0 %v4404
    %v4406 = vand.u32 %v3775, 4294901760
    %4407 = vmatpush1.msra.mxu0 %v4406
    %v4408 = vand.u32 %v3774, 4294901760
    %4409 = vmatprep.subr.mxu0 %v4408
    %v4410 = vand.u32 %v3773, 4294901760
    %4411 = vmatpush1.msra.mxu0 %v4410
    %v4412 = vand.u32 %v3772, 4294901760
    %4413 = vmatprep.subr.mxu0 %v4412
    %v4414 = vand.u32 %v3771, 4294901760
    %4415 = vmatpush1.msra.mxu0 %v4414
    %v4416 = vand.u32 %v3770, 4294901760
    %4417 = vmatprep.subr.mxu0 %v4416
    %v4418 = vand.u32 %v3769, 4294901760
    %4419 = vmatpush1.msra.mxu0 %v4418
    %4420 = vmatprep.subr.mxu0 0.0
    %4421 = vmatpush2.msra.mxu0 0.0
    %4422 = vmatprep.subr.mxu0 0.0
    %4423 = vmatpush2.msra.mxu0 0.0
    %4424 = vmatprep.subr.mxu0 0.0
    %4425 = vmatpush2.msra.mxu0 0.0
    %4426 = vmatprep.subr.mxu0 0.0
    %4427 = vmatpush2.msra.mxu0 0.0
    %4428 = vmatprep.subr.mxu0 0.0
    %4429 = vmatpush2.msra.mxu0 0.0
    %4430 = vmatprep.subr.mxu0 0.0
    %4431 = vmatpush2.msra.mxu0 0.0
    %4432 = vmatprep.subr.mxu0 0.0
    %4433 = vmatpush2.msra.mxu0 0.0
    %4434 = vmatprep.subr.mxu0 0.0
    %4435 = vmatpush2.msra.mxu0 0.0
    %4436 = vmatprep.subr.mxu0 0.0
    %4437 = vmatpush2.msra.mxu0 0.0
    %4438 = vmatprep.subr.mxu0 0.0
    %4439 = vmatpush2.msra.mxu0 0.0
    %4440 = vmatprep.subr.mxu0 0.0
    %4441 = vmatpush2.msra.mxu0 0.0
    %4442 = vmatprep.subr.mxu0 0.0
    %4443 = vmatpush2.msra.mxu0 0.0
    %4444 = vmatprep.subr.mxu0 0.0
    %4445 = vmatpush2.msra.mxu0 0.0
    %4446 = vmatprep.subr.mxu0 0.0
    %4447 = vmatpush2.msra.mxu0 0.0
    %4448 = vmatprep.subr.mxu0 0.0
    %4449 = vmatpush2.msra.mxu0 0.0
    %4450 = vmatprep.subr.mxu0 0.0
    %4451 = vmatpush2.msra.mxu0 0.0
    %4452 = vmatprep.mubr.f32.mxu0 0.0
    %v4453 = vand.u32 %v3765, 4294901760
    %v4454 = vsub.f32 %v3765, %v4453
    %v4455 = vand.u32 %v4454, 4294901760
    %4456 = vmatmul.mubr.f32.gmra.mxu0 %v4455
    %v4457 = vpop.f32.mrf.mxu0
    %v4458 = vadd.f32 %v4328, %v4457
    %v4459 = vpop.f32.mrf.mxu0
    %v4460 = vadd.f32 %v4330, %v4459
    %4461 = vmatprep.mubr.f32.mxu0 0.0
    %v4462 = vand.u32 %v3766, 4294901760
    %v4463 = vsub.f32 %v3766, %v4462
    %v4464 = vand.u32 %v4463, 4294901760
    %4465 = vmatmul.mubr.f32.gmra.mxu0 %v4464
    %v4466 = vpop.f32.mrf.mxu0
    %v4467 = vadd.f32 %v4336, %v4466
    %v4468 = vpop.f32.mrf.mxu0
    %v4469 = vadd.f32 %v4338, %v4468
    %4470 = vmatprep.mubr.f32.mxu0 0.0
    %v4471 = vand.u32 %v3767, 4294901760
    %v4472 = vsub.f32 %v3767, %v4471
    %v4473 = vand.u32 %v4472, 4294901760
    %4474 = vmatmul.mubr.f32.gmra.mxu0 %v4473
    %v4475 = vpop.f32.mrf.mxu0
    %v4476 = vadd.f32 %v4344, %v4475
    %v4477 = vpop.f32.mrf.mxu0
    %v4478 = vadd.f32 %v4346, %v4477
    %4479 = vmatprep.mubr.f32.mxu0 0.0
    %v4480 = vand.u32 %v3768, 4294901760
    %v4481 = vsub.f32 %v3768, %v4480
    %v4482 = vand.u32 %v4481, 4294901760
    %4483 = vmatmul.mubr.f32.gmra.mxu0 %v4482
    %v4484 = vpop.f32.mrf.mxu0
    %v4485 = vadd.f32 %v4352, %v4484
    %v4486 = vpop.f32.mrf.mxu0
    %v4487 = vadd.f32 %v4354, %v4486
    %4488 = vdwg.mxu0
    %v4489 = vand.u32 %v3800, 4294901760
    %v4490 = vsub.f32 %v3800, %v4489
    %v4491 = vand.u32 %v4490, 4294901760
    %4492 = vmatprep.subr.mxu0 %v4491
    %v4493 = vand.u32 %v3799, 4294901760
    %v4494 = vsub.f32 %v3799, %v4493
    %v4495 = vand.u32 %v4494, 4294901760
    %4496 = vmatpush1.msra.mxu0 %v4495
    %v4497 = vand.u32 %v3798, 4294901760
    %v4498 = vsub.f32 %v3798, %v4497
    %v4499 = vand.u32 %v4498, 4294901760
    %4500 = vmatprep.subr.mxu0 %v4499
    %v4501 = vand.u32 %v3797, 4294901760
    %v4502 = vsub.f32 %v3797, %v4501
    %v4503 = vand.u32 %v4502, 4294901760
    %4504 = vmatpush1.msra.mxu0 %v4503
    %v4505 = vand.u32 %v3796, 4294901760
    %v4506 = vsub.f32 %v3796, %v4505
    %v4507 = vand.u32 %v4506, 4294901760
    %4508 = vmatprep.subr.mxu0 %v4507
    %v4509 = vand.u32 %v3795, 4294901760
    %v4510 = vsub.f32 %v3795, %v4509
    %v4511 = vand.u32 %v4510, 4294901760
    %4512 = vmatpush1.msra.mxu0 %v4511
    %v4513 = vand.u32 %v3794, 4294901760
    %v4514 = vsub.f32 %v3794, %v4513
    %v4515 = vand.u32 %v4514, 4294901760
    %4516 = vmatprep.subr.mxu0 %v4515
    %v4517 = vand.u32 %v3793, 4294901760
    %v4518 = vsub.f32 %v3793, %v4517
    %v4519 = vand.u32 %v4518, 4294901760
    %4520 = vmatpush1.msra.mxu0 %v4519
    %v4521 = vand.u32 %v3792, 4294901760
    %v4522 = vsub.f32 %v3792, %v4521
    %v4523 = vand.u32 %v4522, 4294901760
    %4524 = vmatprep.subr.mxu0 %v4523
    %v4525 = vand.u32 %v3791, 4294901760
    %v4526 = vsub.f32 %v3791, %v4525
    %v4527 = vand.u32 %v4526, 4294901760
    %4528 = vmatpush1.msra.mxu0 %v4527
    %v4529 = vand.u32 %v3790, 4294901760
    %v4530 = vsub.f32 %v3790, %v4529
    %v4531 = vand.u32 %v4530, 4294901760
    %4532 = vmatprep.subr.mxu0 %v4531
    %v4533 = vand.u32 %v3789, 4294901760
    %v4534 = vsub.f32 %v3789, %v4533
    %v4535 = vand.u32 %v4534, 4294901760
    %4536 = vmatpush1.msra.mxu0 %v4535
    %v4537 = vand.u32 %v3788, 4294901760
    %v4538 = vsub.f32 %v3788, %v4537
    %v4539 = vand.u32 %v4538, 4294901760
    %4540 = vmatprep.subr.mxu0 %v4539
    %v4541 = vand.u32 %v3787, 4294901760
    %v4542 = vsub.f32 %v3787, %v4541
    %v4543 = vand.u32 %v4542, 4294901760
    %4544 = vmatpush1.msra.mxu0 %v4543
    %v4545 = vand.u32 %v3786, 4294901760
    %v4546 = vsub.f32 %v3786, %v4545
    %v4547 = vand.u32 %v4546, 4294901760
    %4548 = vmatprep.subr.mxu0 %v4547
    %v4549 = vand.u32 %v3785, 4294901760
    %v4550 = vsub.f32 %v3785, %v4549
    %v4551 = vand.u32 %v4550, 4294901760
    %4552 = vmatpush1.msra.mxu0 %v4551
    %v4553 = vand.u32 %v3784, 4294901760
    %v4554 = vsub.f32 %v3784, %v4553
    %v4555 = vand.u32 %v4554, 4294901760
    %4556 = vmatprep.subr.mxu0 %v4555
    %v4557 = vand.u32 %v3783, 4294901760
    %v4558 = vsub.f32 %v3783, %v4557
    %v4559 = vand.u32 %v4558, 4294901760
    %4560 = vmatpush1.msra.mxu0 %v4559
    %v4561 = vand.u32 %v3782, 4294901760
    %v4562 = vsub.f32 %v3782, %v4561
    %v4563 = vand.u32 %v4562, 4294901760
    %4564 = vmatprep.subr.mxu0 %v4563
    %v4565 = vand.u32 %v3781, 4294901760
    %v4566 = vsub.f32 %v3781, %v4565
    %v4567 = vand.u32 %v4566, 4294901760
    %4568 = vmatpush1.msra.mxu0 %v4567
    %v4569 = vand.u32 %v3780, 4294901760
    %v4570 = vsub.f32 %v3780, %v4569
    %v4571 = vand.u32 %v4570, 4294901760
    %4572 = vmatprep.subr.mxu0 %v4571
    %v4573 = vand.u32 %v3779, 4294901760
    %v4574 = vsub.f32 %v3779, %v4573
    %v4575 = vand.u32 %v4574, 4294901760
    %4576 = vmatpush1.msra.mxu0 %v4575
    %v4577 = vand.u32 %v3778, 4294901760
    %v4578 = vsub.f32 %v3778, %v4577
    %v4579 = vand.u32 %v4578, 4294901760
    %4580 = vmatprep.subr.mxu0 %v4579
    %v4581 = vand.u32 %v3777, 4294901760
    %v4582 = vsub.f32 %v3777, %v4581
    %v4583 = vand.u32 %v4582, 4294901760
    %4584 = vmatpush1.msra.mxu0 %v4583
    %v4585 = vand.u32 %v3776, 4294901760
    %v4586 = vsub.f32 %v3776, %v4585
    %v4587 = vand.u32 %v4586, 4294901760
    %4588 = vmatprep.subr.mxu0 %v4587
    %v4589 = vand.u32 %v3775, 4294901760
    %v4590 = vsub.f32 %v3775, %v4589
    %v4591 = vand.u32 %v4590, 4294901760
    %4592 = vmatpush1.msra.mxu0 %v4591
    %v4593 = vand.u32 %v3774, 4294901760
    %v4594 = vsub.f32 %v3774, %v4593
    %v4595 = vand.u32 %v4594, 4294901760
    %4596 = vmatprep.subr.mxu0 %v4595
    %v4597 = vand.u32 %v3773, 4294901760
    %v4598 = vsub.f32 %v3773, %v4597
    %v4599 = vand.u32 %v4598, 4294901760
    %4600 = vmatpush1.msra.mxu0 %v4599
    %v4601 = vand.u32 %v3772, 4294901760
    %v4602 = vsub.f32 %v3772, %v4601
    %v4603 = vand.u32 %v4602, 4294901760
    %4604 = vmatprep.subr.mxu0 %v4603
    %v4605 = vand.u32 %v3771, 4294901760
    %v4606 = vsub.f32 %v3771, %v4605
    %v4607 = vand.u32 %v4606, 4294901760
    %4608 = vmatpush1.msra.mxu0 %v4607
    %v4609 = vand.u32 %v3770, 4294901760
    %v4610 = vsub.f32 %v3770, %v4609
    %v4611 = vand.u32 %v4610, 4294901760
    %4612 = vmatprep.subr.mxu0 %v4611
    %v4613 = vand.u32 %v3769, 4294901760
    %v4614 = vsub.f32 %v3769, %v4613
    %v4615 = vand.u32 %v4614, 4294901760
    %4616 = vmatpush1.msra.mxu0 %v4615
    %4617 = vmatprep.subr.mxu0 0.0
    %4618 = vmatpush2.msra.mxu0 0.0
    %4619 = vmatprep.subr.mxu0 0.0
    %4620 = vmatpush2.msra.mxu0 0.0
    %4621 = vmatprep.subr.mxu0 0.0
    %4622 = vmatpush2.msra.mxu0 0.0
    %4623 = vmatprep.subr.mxu0 0.0
    %4624 = vmatpush2.msra.mxu0 0.0
    %4625 = vmatprep.subr.mxu0 0.0
    %4626 = vmatpush2.msra.mxu0 0.0
    %4627 = vmatprep.subr.mxu0 0.0
    %4628 = vmatpush2.msra.mxu0 0.0
    %4629 = vmatprep.subr.mxu0 0.0
    %4630 = vmatpush2.msra.mxu0 0.0
    %4631 = vmatprep.subr.mxu0 0.0
    %4632 = vmatpush2.msra.mxu0 0.0
    %4633 = vmatprep.subr.mxu0 0.0
    %4634 = vmatpush2.msra.mxu0 0.0
    %4635 = vmatprep.subr.mxu0 0.0
    %4636 = vmatpush2.msra.mxu0 0.0
    %4637 = vmatprep.subr.mxu0 0.0
    %4638 = vmatpush2.msra.mxu0 0.0
    %4639 = vmatprep.subr.mxu0 0.0
    %4640 = vmatpush2.msra.mxu0 0.0
    %4641 = vmatprep.subr.mxu0 0.0
    %4642 = vmatpush2.msra.mxu0 0.0
    %4643 = vmatprep.subr.mxu0 0.0
    %4644 = vmatpush2.msra.mxu0 0.0
    %4645 = vmatprep.subr.mxu0 0.0
    %4646 = vmatpush2.msra.mxu0 0.0
    %4647 = vmatprep.subr.mxu0 0.0
    %4648 = vmatpush2.msra.mxu0 0.0
    %4649 = vmatprep.mubr.f32.mxu0 0.0
    %v4650 = vand.u32 %v3765, 4294901760
    %4651 = vmatmul.mubr.f32.gmra.mxu0 %v4650
    %v4652 = vpop.f32.mrf.mxu0
    %v4653 = vadd.f32 %v4458, %v4652
    %v4654 = vpop.f32.mrf.mxu0
    %v4655 = vadd.f32 %v4460, %v4654
    %4656 = vmatprep.mubr.f32.mxu0 0.0
    %v4657 = vand.u32 %v3766, 4294901760
    %4658 = vmatmul.mubr.f32.gmra.mxu0 %v4657
    %v4659 = vpop.f32.mrf.mxu0
    %v4660 = vadd.f32 %v4467, %v4659
    %v4661 = vpop.f32.mrf.mxu0
    %v4662 = vadd.f32 %v4469, %v4661
    %4663 = vmatprep.mubr.f32.mxu0 0.0
    %v4664 = vand.u32 %v3767, 4294901760
    %4665 = vmatmul.mubr.f32.gmra.mxu0 %v4664
    %v4666 = vpop.f32.mrf.mxu0
    %v4667 = vadd.f32 %v4476, %v4666
    %v4668 = vpop.f32.mrf.mxu0
    %v4669 = vadd.f32 %v4478, %v4668
    %4670 = vmatprep.mubr.f32.mxu0 0.0
    %v4671 = vand.u32 %v3768, 4294901760
    %4672 = vmatmul.mubr.f32.gmra.mxu0 %v4671
    %v4673 = vpop.f32.mrf.mxu0
    %v4674 = vadd.f32 %v4485, %v4673
    %v4675 = vpop.f32.mrf.mxu0
    %v4676 = vadd.f32 %v4487, %v4675
    %4677 = vdwg.mxu0
    %v4678 = vand.u32 %v3800, 4294901760
    %4679 = vmatprep.subr.mxu0 %v4678
    %v4680 = vand.u32 %v3799, 4294901760
    %4681 = vmatpush1.msra.mxu0 %v4680
    %v4682 = vand.u32 %v3798, 4294901760
    %4683 = vmatprep.subr.mxu0 %v4682
    %v4684 = vand.u32 %v3797, 4294901760
    %4685 = vmatpush1.msra.mxu0 %v4684
    %v4686 = vand.u32 %v3796, 4294901760
    %4687 = vmatprep.subr.mxu0 %v4686
    %v4688 = vand.u32 %v3795, 4294901760
    %4689 = vmatpush1.msra.mxu0 %v4688
    %v4690 = vand.u32 %v3794, 4294901760
    %4691 = vmatprep.subr.mxu0 %v4690
    %v4692 = vand.u32 %v3793, 4294901760
    %4693 = vmatpush1.msra.mxu0 %v4692
    %v4694 = vand.u32 %v3792, 4294901760
    %4695 = vmatprep.subr.mxu0 %v4694
    %v4696 = vand.u32 %v3791, 4294901760
    %4697 = vmatpush1.msra.mxu0 %v4696
    %v4698 = vand.u32 %v3790, 4294901760
    %4699 = vmatprep.subr.mxu0 %v4698
    %v4700 = vand.u32 %v3789, 4294901760
    %4701 = vmatpush1.msra.mxu0 %v4700
    %v4702 = vand.u32 %v3788, 4294901760
    %4703 = vmatprep.subr.mxu0 %v4702
    %v4704 = vand.u32 %v3787, 4294901760
    %4705 = vmatpush1.msra.mxu0 %v4704
    %v4706 = vand.u32 %v3786, 4294901760
    %4707 = vmatprep.subr.mxu0 %v4706
    %v4708 = vand.u32 %v3785, 4294901760
    %4709 = vmatpush1.msra.mxu0 %v4708
    %v4710 = vand.u32 %v3784, 4294901760
    %4711 = vmatprep.subr.mxu0 %v4710
    %v4712 = vand.u32 %v3783, 4294901760
    %4713 = vmatpush1.msra.mxu0 %v4712
    %v4714 = vand.u32 %v3782, 4294901760
    %4715 = vmatprep.subr.mxu0 %v4714
    %v4716 = vand.u32 %v3781, 4294901760
    %4717 = vmatpush1.msra.mxu0 %v4716
    %v4718 = vand.u32 %v3780, 4294901760
    %4719 = vmatprep.subr.mxu0 %v4718
    %v4720 = vand.u32 %v3779, 4294901760
    %4721 = vmatpush1.msra.mxu0 %v4720
    %v4722 = vand.u32 %v3778, 4294901760
    %4723 = vmatprep.subr.mxu0 %v4722
    %v4724 = vand.u32 %v3777, 4294901760
    %4725 = vmatpush1.msra.mxu0 %v4724
    %v4726 = vand.u32 %v3776, 4294901760
    %4727 = vmatprep.subr.mxu0 %v4726
    %v4728 = vand.u32 %v3775, 4294901760
    %4729 = vmatpush1.msra.mxu0 %v4728
    %v4730 = vand.u32 %v3774, 4294901760
    %4731 = vmatprep.subr.mxu0 %v4730
    %v4732 = vand.u32 %v3773, 4294901760
    %4733 = vmatpush1.msra.mxu0 %v4732
    %v4734 = vand.u32 %v3772, 4294901760
    %4735 = vmatprep.subr.mxu0 %v4734
    %v4736 = vand.u32 %v3771, 4294901760
    %4737 = vmatpush1.msra.mxu0 %v4736
    %v4738 = vand.u32 %v3770, 4294901760
    %4739 = vmatprep.subr.mxu0 %v4738
    %v4740 = vand.u32 %v3769, 4294901760
    %4741 = vmatpush1.msra.mxu0 %v4740
    %4742 = vmatprep.subr.mxu0 0.0
    %4743 = vmatpush2.msra.mxu0 0.0
    %4744 = vmatprep.subr.mxu0 0.0
    %4745 = vmatpush2.msra.mxu0 0.0
    %4746 = vmatprep.subr.mxu0 0.0
    %4747 = vmatpush2.msra.mxu0 0.0
    %4748 = vmatprep.subr.mxu0 0.0
    %4749 = vmatpush2.msra.mxu0 0.0
    %4750 = vmatprep.subr.mxu0 0.0
    %4751 = vmatpush2.msra.mxu0 0.0
    %4752 = vmatprep.subr.mxu0 0.0
    %4753 = vmatpush2.msra.mxu0 0.0
    %4754 = vmatprep.subr.mxu0 0.0
    %4755 = vmatpush2.msra.mxu0 0.0
    %4756 = vmatprep.subr.mxu0 0.0
    %4757 = vmatpush2.msra.mxu0 0.0
    %4758 = vmatprep.subr.mxu0 0.0
    %4759 = vmatpush2.msra.mxu0 0.0
    %4760 = vmatprep.subr.mxu0 0.0
    %4761 = vmatpush2.msra.mxu0 0.0
    %4762 = vmatprep.subr.mxu0 0.0
    %4763 = vmatpush2.msra.mxu0 0.0
    %4764 = vmatprep.subr.mxu0 0.0
    %4765 = vmatpush2.msra.mxu0 0.0
    %4766 = vmatprep.subr.mxu0 0.0
    %4767 = vmatpush2.msra.mxu0 0.0
    %4768 = vmatprep.subr.mxu0 0.0
    %4769 = vmatpush2.msra.mxu0 0.0
    %4770 = vmatprep.subr.mxu0 0.0
    %4771 = vmatpush2.msra.mxu0 0.0
    %4772 = vmatprep.subr.mxu0 0.0
    %4773 = vmatpush2.msra.mxu0 0.0
    %4774 = vmatprep.mubr.f32.mxu0 0.0
    %v4775 = vand.u32 %v3765, 4294901760
    %4776 = vmatmul.mubr.f32.gmra.mxu0 %v4775
    %v4777 = vpop.f32.mrf.mxu0
    %v4778 = vadd.f32 %v4653, %v4777
    %v4779 = vpop.f32.mrf.mxu0
    %v4780 = vadd.f32 %v4655, %v4779
    %4781 = vmatprep.mubr.f32.mxu0 0.0
    %v4782 = vand.u32 %v3766, 4294901760
    %4783 = vmatmul.mubr.f32.gmra.mxu0 %v4782
    %v4784 = vpop.f32.mrf.mxu0
    %v4785 = vadd.f32 %v4660, %v4784
    %v4786 = vpop.f32.mrf.mxu0
    %v4787 = vadd.f32 %v4662, %v4786
    %4788 = vmatprep.mubr.f32.mxu0 0.0
    %v4789 = vand.u32 %v3767, 4294901760
    %4790 = vmatmul.mubr.f32.gmra.mxu0 %v4789
    %v4791 = vpop.f32.mrf.mxu0
    %v4792 = vadd.f32 %v4667, %v4791
    %v4793 = vpop.f32.mrf.mxu0
    %v4794 = vadd.f32 %v4669, %v4793
    %4795 = vmatprep.mubr.f32.mxu0 0.0
    %v4796 = vand.u32 %v3768, 4294901760
    %4797 = vmatmul.mubr.f32.gmra.mxu0 %v4796
    %v4798 = vpop.f32.mrf.mxu0
    %v4799 = vadd.f32 %v4674, %v4798
    %v4800 = vpop.f32.mrf.mxu0
    %v4801 = vadd.f32 %v4676, %v4800
    %4802 = vdwg.mxu0
    %s4803 = scalar_lea.vmem [#allocation10], 4
    %v4804 = vld [vmem:[%s4803] ss:$8 sm:$0x3]
    %s4805 = scalar_lea.vmem [#allocation10], 5
    %v4806 = vld [vmem:[%s4805] ss:$8 sm:$0x3]
    %v4807 = vadd.f32 %v4778, %v4785
    %v4808 = vadd.f32 %v4807, %v4792
    %v4809 = vadd.f32 %v4808, %v4799
    %v4810 = vrot.slane %v4809, 4
    %v4811 = vadd.f32 %v4809, %v4810
    %v4812 = vrot.slane %v4811, 2
    %v4813 = vadd.f32 %v4811, %v4812
    %v4814 = vrot.slane %v4813, 1
    %v4815 = vadd.f32 %v4813, %v4814
    %v4816 = vadd.f32 %v4780, %v4787
    %v4817 = vadd.f32 %v4816, %v4794
    %v4818 = vadd.f32 %v4817, %v4801
    %v4819 = vrot.slane %v4818, 4
    %v4820 = vadd.f32 %v4818, %v4819
    %v4821 = vrot.slane %v4820, 2
    %v4822 = vadd.f32 %v4820, %v4821
    %v4823 = vrot.slane %v4822, 1
    %v4824 = vadd.f32 %v4822, %v4823
    %v4825 = vmul.f32 %v4778, %v4778
    %v4826 = vmul.f32 %v4780, %v4780
    %v4827 = vmul.f32 %v4785, %v4785
    %v4828 = vmul.f32 %v4787, %v4787
    %v4829 = vmul.f32 %v4792, %v4792
    %v4830 = vmul.f32 %v4794, %v4794
    %v4831 = vmul.f32 %v4799, %v4799
    %v4832 = vmul.f32 %v4801, %v4801
    %v4833 = vadd.f32 %v4825, %v4827
    %v4834 = vadd.f32 %v4833, %v4829
    %v4835 = vadd.f32 %v4834, %v4831
    %v4836 = vrot.slane %v4835, 4
    %v4837 = vadd.f32 %v4835, %v4836
    %v4838 = vrot.slane %v4837, 2
    %v4839 = vadd.f32 %v4837, %v4838
    %v4840 = vrot.slane %v4839, 1
    %v4841 = vadd.f32 %v4839, %v4840
    %v4842 = vadd.f32 %v4826, %v4828
    %v4843 = vadd.f32 %v4842, %v4830
    %v4844 = vadd.f32 %v4843, %v4832
    %v4845 = vrot.slane %v4844, 4
    %v4846 = vadd.f32 %v4844, %v4845
    %v4847 = vrot.slane %v4846, 2
    %v4848 = vadd.f32 %v4846, %v4847
    %v4849 = vrot.slane %v4848, 1
    %v4850 = vadd.f32 %v4848, %v4849
    %v4851 = vsel %vm1181, %v4815, %v4841
    %v4852 = vsel %vm1181, %v4824, %v4850
    %4853 = vrot.lane.b32.xlu0 %v4851, 16
    %v4854 = vpop.permute.xlu0 %4853
    %4855 = vrot.lane.b32.xlu0 %v4852, 16
    %v4856 = vpop.permute.xlu0 %4855
    %v4857 = vlaneseq
    %v4858 = vand.u32 %v4857, 127
    %vm4859 = vcmp.lt.s32.totalorder %v4858, 16
    %v4860 = vsel %vm4859, %v4854, %v4856
    %v4861 = vsel %vm4859, %v4856, %v4854
    %v4862 = vadd.f32 %v4851, %v4861
    %v4863 = vadd.f32 %v4852, %v4860
    %4864 = vrot.lane.b32.xlu0 %v4862, 32
    %v4865 = vpop.permute.xlu0 %4864
    %4866 = vrot.lane.b32.xlu0 %v4863, 32
    %v4867 = vpop.permute.xlu0 %4866
    %vm4868 = vcmp.lt.s32.totalorder %v4858, 32
    %v4869 = vsel %vm4868, %v4865, %v4867
    %v4870 = vsel %vm4868, %v4867, %v4865
    %v4871 = vadd.f32 %v4862, %v4870
    %v4872 = vadd.f32 %v4863, %v4869
    %4873 = vrot.lane.b32.xlu0 %v4871, 64
    %v4874 = vpop.permute.xlu0 %4873
    %4875 = vrot.lane.b32.xlu0 %v4872, 64
    %v4876 = vpop.permute.xlu0 %4875
    %vm4877 = vcmp.lt.s32.totalorder %v4858, 64
    %v4878 = vsel %vm4877, %v4874, %v4876
    %v4879 = vsel %vm4877, %v4876, %v4874
    %v4880 = vadd.f32 %v4871, %v4879
    %v4881 = vadd.f32 %v4872, %v4878
    %v4882 = vadd.f32 %v4880, %v4881
    %v4883 = vmul.f32 %v4882, 0.001953125
    %v4884 = vmul.f32 %v4883, %v4883
    %v4886 = vrot.slane %v4884, 7
    %v4888 = vsub.f32 %v4883, %v4886
    %v4889 = vmax.f32 %v4888, 0.0
    %v4890 = vadd.f32 %v4889, 1e-05
    %v4891 = vrsqrt.pop %v4890
    %v4893 = vcombine.low %v4891, %v4891
    %v4895 = vunpack.c.l.s4 1966171168
    %v4896 = vunpack.c.0.s8 %v4895
    %v4897 = vlaneseq
    %v4898 = vshrl.u32 %v4897, 7
    %v4899 = vsub.s32 %v4896, %v4898
    %v4900 = vrot.slane %v4893, %v4899
    %v4901 = vcombine.high %v4900, %v4900
    %v4903 = vunpack.c.l.s4 1966171168
    %v4904 = vunpack.c.0.s8 %v4903
    %v4905 = vlaneseq
    %v4906 = vshrl.u32 %v4905, 7
    %v4907 = vsub.s32 %v4904, %v4906
    %v4908 = vrot.slane %v4901, %v4907
    %v4910 = vmul.f32 %v4804, %v4908
    %v4912 = vlaneseq
    %v4913 = vshrl.u32 %v4912, 7
    %v4914 = vsub.s32 0, %v4913
    %v4915 = vrot.slane %v4910, %v4914
    %v4916 = vlaneseq
    %v4917 = vshrl.u32 %v4916, 7
    %v4918 = vsub.s32 1, %v4917
    %v4919 = vrot.slane %v4910, %v4918
    %v4922 = vmul.f32 %v4883, %v4915
    %v4923 = vmul.f32 %v4883, %v4919
    %v4926 = vcombine.low %v4922, %v4923
    %v4928 = vunpack.c.l.s4 1966171168
    %v4929 = vunpack.c.0.s8 %v4928
    %v4930 = vlaneseq
    %v4931 = vshrl.u32 %v4930, 7
    %v4932 = vsub.s32 %v4929, %v4931
    %v4933 = vrot.slane %v4926, %v4932
    %v4935 = vunpack.c.l.s4 1966171168
    %v4936 = vunpack.c.0.s8 %v4935
    %v4937 = vlaneseq
    %v4938 = vshrl.u32 %v4937, 7
    %v4939 = vsub.s32 %v4936, %v4938
    %v4940 = vrot.slane %v4933, %v4939
    %v4942 = vsub.f32 %v4806, %v4940
    %v4943 = vmul.f32 %v4778, %v4915
    %v4944 = vmul.f32 %v4780, %v4919
    %v4945 = vmul.f32 %v4785, %v4915
    %v4946 = vmul.f32 %v4787, %v4919
    %v4947 = vmul.f32 %v4792, %v4915
    %v4948 = vmul.f32 %v4794, %v4919
    %v4949 = vmul.f32 %v4799, %v4915
    %v4950 = vmul.f32 %v4801, %v4919
    %v4952 = vlaneseq
    %v4953 = vshrl.u32 %v4952, 7
    %v4954 = vsub.s32 0, %v4953
    %v4955 = vrot.slane %v4942, %v4954
    %v4956 = vlaneseq
    %v4957 = vshrl.u32 %v4956, 7
    %v4958 = vsub.s32 1, %v4957
    %v4959 = vrot.slane %v4942, %v4958
    %v4962 = vadd.f32 %v4943, %v4955
    %v4963 = vadd.f32 %v4944, %v4959
    %v4964 = vadd.f32 %v4945, %v4955
    %v4965 = vadd.f32 %v4946, %v4959
    %v4966 = vadd.f32 %v4947, %v4955
    %v4967 = vadd.f32 %v4948, %v4959
    %v4968 = vadd.f32 %v4949, %v4955
    %v4969 = vadd.f32 %v4950, %v4959
    %v4970 = vadd.f32 %v4962, %v87
    %v4971 = vadd.f32 %v4963, %v88
    %v4972 = vadd.f32 %v4964, %v89
    %v4973 = vadd.f32 %v4965, %v90
    %v4974 = vadd.f32 %v4966, %v91
    %v4975 = vadd.f32 %v4967, %v92
    %v4976 = vadd.f32 %v4968, %v93
    %v4977 = vadd.f32 %v4969, %v94
    %v4978 = vmax.f32 %v4970, 0.0
    %v4979 = vmax.f32 %v4971, 0.0
    %v4980 = vmax.f32 %v4972, 0.0
    %v4981 = vmax.f32 %v4973, 0.0
    %v4982 = vmax.f32 %v4974, 0.0
    %v4983 = vmax.f32 %v4975, 0.0
    %v4984 = vmax.f32 %v4976, 0.0
    %v4985 = vmax.f32 %v4977, 0.0
    %4986 = vst [vmem:[#allocation11] sm:$0xff] %v4978
    %4987 = vst [vmem:[#allocation11 + $0x8] sm:$0xff] %v4979
    %4988 = vst [vmem:[#allocation11 + $0x10] sm:$0xff] %v4980
    %4989 = vst [vmem:[#allocation11 + $0x18] sm:$0xff] %v4981
    %4990 = vst [vmem:[#allocation11 + $0x20] sm:$0xff] %v4982
    %4991 = vst [vmem:[#allocation11 + $0x28] sm:$0xff] %v4983
    %4992 = vst [vmem:[#allocation11 + $0x30] sm:$0xff] %v4984
    %4993 = vst [vmem:[#allocation11 + $0x38] sm:$0xff] %v4985
    // Predicated region
    $region42: #{tpu_custom_call.1} parent=1 // pred_check
      _
    $region43: #{tpu_custom_call.1} parent=1 // pred_check_branch
      %4995 = sbr.rel (0) target = $region45
    $region44: #{tpu_custom_call.1} parent=1 // pred_region
      %s4997 = ssub.s32 1024, 1024
      %4998 = vsyncadd [#allocation4], %s4997
      %s4999 = sshll.u32 [#allocation11], 4
      %s5000 = int_to_ptr.vmem [resolvable:$true] %s4999
      %5005 = dma.vmem_to_hbm [thread:$0]  %s5000, 1024, %s5, [#allocation4], 256, 256, 16
    $region45: #{tpu_custom_call.1} parent=1 // pred_fallthru
      _
    // Predicated region
    $region46: #{tpu_custom_call.1} parent=1 // pred_check
      _
    $region47: #{tpu_custom_call.1} parent=1 // pred_check_branch
      %5007 = sbr.rel (0) target = $region49
    $region48: #{tpu_custom_call.1} parent=1 // pred_region
      %5008 = dma.done [#allocation4], 1024
    $region49: #{tpu_custom_call.1} parent=1 // pred_fallthru
      _
    %5009 = vsyncpa [#allocation3], 1
    %5010 = vsyncpa [#allocation6], 1
    %5011 = vsyncpa [#allocation9], 1
    %5012 = vsyncpa [#allocation4], 1

</llo_original>
